<compile_context>
chip_gen: v7x
topology: tpu7x:2x2x1
jax: 0.10.0
libtpu: 0.0.40
codegen_flags: <defaults>
</compile_context>

<pallas_src>
import jax
import jax.numpy as jnp
from jax import lax
from jax.experimental import pallas as pl
from jax.experimental.pallas import tpu as pltpu

# ---------------- small synthetic config (stand-in for deberta-v3-small) ------------
VOCAB = 64
HIDDEN = 32
N_HEADS = 2
HEAD_DIM = HIDDEN // N_HEADS
N_LAYERS = 2
INTERMEDIATE = 64
BATCH = 2
SEQ = 8
LN_EPS = 1e-7                     # DeBERTa layer_norm_eps
LANE = 128                        # TPU lane width / padded per-head block width
QKV_PAD = 3 * N_HEADS * LANE      # padded fused-QKV width  [q_h0|q_h1|k_h0|k_h1|v_h0|v_h1]
CTX_PAD = N_HEADS * LANE          # padded context-slab width
ATT_SCALE = 1.0 / (HEAD_DIM ** 0.5)


def _layer_norm(x, g, b):
    mean = jnp.mean(x, axis=-1, keepdims=True)
    var = jnp.mean(jnp.square(x - mean), axis=-1, keepdims=True)
    return (x - mean) * lax.rsqrt(var + LN_EPS) * g + b


# ---------------------------------- fused Pallas kernel ------------------------------
def _deberta_fused_kernel(
    emb_ref, bias_ref, mask_ref,
    emb_ln_g_ref, emb_ln_b_ref,
    qkv_w_ref, qkv_b_ref, o_w_ref, o_b_ref, ln1_g_ref, ln1_b_ref,
    w1_ref, b1_ref, w2_ref, b2_ref, ln2_g_ref, ln2_b_ref,
    reg_w_ref, reg_b_ref,
    out_ref,
):
    """Entire forward pass for one batch element, fully resident in VMEM."""
    # ---- embedding LayerNorm (f32) ---------------------------------------------------
    h = _layer_norm(emb_ref[0], emb_ln_g_ref[...], emb_ln_b_ref[...])        # (S, H)

    # additive key mask: lane-dense (1,128) load, one slice, reused by all heads/layers
    bias = bias_ref[0][:, :SEQ]                                               # (1, S)

    for li in range(N_LAYERS):                     # static unroll over layers
        x = h
        # fused QKV projection; every head's q/k/v lives in its own 128-lane block,
        # and 1/sqrt(head_dim) is pre-folded into the q weight at init.
        qkv = jnp.dot(x.astype(jnp.bfloat16), qkv_w_ref[li],
                      preferred_element_type=jnp.float32) + qkv_b_ref[li]     # (S, QKV_PAD)

        # TODO(synk): DeBERTa's disentangled relative-position (c2p/p2c) attention bias
        # is omitted; this is standard masked scaled-dot-product attention.
        ctx_blocks = []
        for hd in range(N_HEADS):
            q_h = qkv[:, (0 * N_HEADS + hd) * LANE:(0 * N_HEADS + hd + 1) * LANE]
            k_h = qkv[:, (1 * N_HEADS + hd) * LANE:(1 * N_HEADS + hd + 1) * LANE]
            v_h = qkv[:, (2 * N_HEADS + hd) * LANE:(2 * N_HEADS + hd + 1) * LANE]
            # zero lane-padding beyond HEAD_DIM contributes nothing to the contraction
            s = lax.dot_general(q_h.astype(jnp.bfloat16), k_h.astype(jnp.bfloat16),
                                (((1,), (1,)), ((), ())),
                                preferred_element_type=jnp.float32) + bias    # (S, S) f32
            m = jnp.max(s, axis=-1, keepdims=True)
            p = jnp.exp(s - m)                                                # f32 softmax
            ctx = jnp.dot(p.astype(jnp.bfloat16), v_h.astype(jnp.bfloat16),
                          preferred_element_type=jnp.float32)                 # (S, LANE)
            ctx = ctx * pl.reciprocal(jnp.sum(p, axis=-1, keepdims=True), approx=True)
            ctx_blocks.append(ctx)
        # 128-lane-aligned head slab -> ONE output-projection matmul merges the heads
        ctx_slab = jnp.concatenate(ctx_blocks, axis=-1)                       # (S, CTX_PAD)
        attn_out = jnp.dot(ctx_slab.astype(jnp.bfloat16), o_w_ref[li],
                           preferred_element_type=jnp.float32) + o_b_ref[li]  # (S, H)

        # residual + post-LN (f32)
        h1 = _layer_norm(attn_out + x, ln1_g_ref[li], ln1_b_ref[li])

        # FFN
        f = jnp.dot(h1.astype(jnp.bfloat16), w1_ref[li],
                    preferred_element_type=jnp.float32) + b1_ref[li]
        # TODO(synk): HF DeBERTa uses exact erf-GELU; tanh approximation used here.
        f = jax.nn.gelu(f, approximate=True)
        f = jnp.dot(f.astype(jnp.bfloat16), w2_ref[li],
                    preferred_element_type=jnp.float32) + b2_ref[li]
        h = _layer_norm(f + h1, ln2_g_ref[li], ln2_b_ref[li])

    # ---- masked mean pooling + regression head ----------------------------------------
    mask = mask_ref[0]                                                        # (S, 1)
    summed = jnp.sum(h * mask, axis=0, keepdims=True)                         # (1, H)
    denom = jnp.maximum(jnp.sum(mask, axis=0, keepdims=True), 1e-9)           # clamp(min=1e-9)
    pooled = summed / denom                                                   # (1, H)
    out_ref[0] = (
        jnp.dot(pooled.astype(jnp.bfloat16), reg_w_ref[...],
                preferred_element_type=jnp.float32) + reg_b_ref[...]
    )                                                                         # (1, LANE) dense store


# ---------------------------------- Pallas wrapper -----------------------------------
def pallas_deberta_forward(p, emb, attn_bias, pool_mask):
    B, S, H = emb.shape
    I = INTERMEDIATE
    L = N_LAYERS

    def act(shape):                              # per-batch-element block
        nd = len(shape)
        return pl.BlockSpec(shape, lambda b, _nd=nd: (b,) + (0,) * (_nd - 1))

    def const(shape):                            # grid-invariant (weights)
        nd = len(shape)
        return pl.BlockSpec(shape, lambda b, _nd=nd: (0,) * _nd)

    return pl.pallas_call(
        _deberta_fused_kernel,
        out_shape=jax.ShapeDtypeStruct((B, 1, LANE), jnp.float32),
        grid=(B,),
        in_specs=[
            act((1, S, H)),                                   # embeddings
            act((1, 1, LANE)),                                # lane-dense additive key mask
            act((1, S, 1)),                                   # pooling mask
            const((1, H)), const((1, H)),                     # embedding LN
            const((L, H, QKV_PAD)), const((L, 1, QKV_PAD)),   # fused QKV (head-padded)
            const((L, CTX_PAD, H)), const((L, 1, H)),         # output projection (head-padded)
            const((L, 1, H)), const((L, 1, H)),               # ln1
            const((L, H, I)), const((L, 1, I)),               # ffn1
            const((L, I, H)), const((L, 1, H)),               # ffn2
            const((L, 1, H)), const((L, 1, H)),               # ln2
            const((H, LANE)), const((1, LANE)),               # regression head (lane-padded)
        ],
        out_specs=act((1, 1, LANE)),
        compiler_params=pltpu.CompilerParams(
            dimension_semantics=("parallel",)),               # 1 batch elem / TC on v7x
    )(
        emb, attn_bias, pool_mask,
        p["emb_ln_g"], p["emb_ln_b"],
        p["qkv_w"], p["qkv_b"], p["o_w"], p["o_b"], p["ln1_g"], p["ln1_b"],
        p["ffn_w1"], p["ffn_b1"], p["ffn_w2"], p["ffn_b2"], p["ln2_g"], p["ln2_b"],
        p["reg_w"], p["reg_b"],
    )


# ---------------------------------- model forward ------------------------------------
def deberta_for_regression(params, input_ids, attention_mask):
    B, S = input_ids.shape
    # embedding gather is glue (data-dependent row gather)
    emb = jnp.take(params["word_emb"], input_ids, axis=0)                     # (B, S, H)

    mask_f = attention_mask.astype(jnp.float32)                               # (B, S)
    pool_mask = mask_f[..., None]                                             # (B, S, 1)
    # lane-dense additive logits mask: real S entries in the first lanes of a 128-wide row
    bias_row = (1.0 - mask_f) * jnp.float32(-1e9)                             # (B, S)
    attn_bias = jnp.pad(bias_row[:, None, :], ((0, 0), (0, 0), (0, LANE - S)))  # (B, 1, 128)

    out = pallas_deberta_forward(params, emb, attn_bias, pool_mask)           # (B, 1, 128)
    return out[:, 0, :1]                                                      # (B, 1) real output


# ---------------------------------- parameter init -----------------------------------
def _pad_qkv_weight(q_w, k_w, v_w):
    """Pad fused QKV weight so every head block starts at a 128-lane boundary.
    Layout: [q_h0 | q_h1 | k_h0 | k_h1 | v_h0 | v_h1]; 1/sqrt(head_dim) folded into q."""
    w = jnp.zeros((HIDDEN, QKV_PAD), jnp.float32)
    for p, proj in enumerate((q_w * ATT_SCALE, k_w, v_w)):
        for h in range(N_HEADS):
            col = (p * N_HEADS + h) * LANE
            w = w.at[:, col:col + HEAD_DIM].set(proj[:, h * HEAD_DIM:(h + 1) * HEAD_DIM])
    return w.astype(jnp.bfloat16)


def _pad_out_weight(o_w):
    """Pad output-projection weight rows to the 128-lane-aligned head slab layout."""
    w = jnp.zeros((CTX_PAD, HIDDEN), jnp.float32)
    for h in range(N_HEADS):
        w = w.at[h * LANE:h * LANE + HEAD_DIM, :].set(o_w[h * HEAD_DIM:(h + 1) * HEAD_DIM, :])
    return w.astype(jnp.bfloat16)


def init_params(key):
    std = 0.02

    def dense(k, shape):
        return jax.random.normal(k, shape, jnp.float32) * std

    keys = jax.random.split(key, 2 + N_LAYERS)
    word_emb = dense(keys[0], (VOCAB, HIDDEN))
    reg_w = dense(keys[1], (HIDDEN, 1))

    qkv_ws, o_ws, w1s, w2s = [], [], [], []
    for li in range(N_LAYERS):
        lk = jax.random.split(keys[2 + li], 6)
        q_w = dense(lk[0], (HIDDEN, HIDDEN))
        k_w = dense(lk[1], (HIDDEN, HIDDEN))
        v_w = dense(lk[2], (HIDDEN, HIDDEN))
        o_w = dense(lk[3], (HIDDEN, HIDDEN))
        w1 = dense(lk[4], (HIDDEN, INTERMEDIATE))
        w2 = dense(lk[5], (INTERMEDIATE, HIDDEN))
        qkv_ws.append(_pad_qkv_weight(q_w, k_w, v_w))
        o_ws.append(_pad_out_weight(o_w))
        w1s.append(w1.astype(jnp.bfloat16))
        w2s.append(w2.astype(jnp.bfloat16))

    L, H, I = N_LAYERS, HIDDEN, INTERMEDIATE
    return {
        "word_emb": word_emb,
        "emb_ln_g": jnp.ones((1, H), jnp.float32),
        "emb_ln_b": jnp.zeros((1, H), jnp.float32),
        # matmul weights in bf16; biases / LayerNorm params in f32
        "qkv_w": jnp.stack(qkv_ws),                          # (L, H, QKV_PAD) bf16
        "qkv_b": jnp.zeros((L, 1, QKV_PAD), jnp.float32),
        "o_w": jnp.stack(o_ws),                              # (L, CTX_PAD, H) bf16
        "o_b": jnp.zeros((L, 1, H), jnp.float32),
        "ln1_g": jnp.ones((L, 1, H), jnp.float32),
        "ln1_b": jnp.zeros((L, 1, H), jnp.float32),
        "ffn_w1": jnp.stack(w1s),                            # (L, H, I) bf16
        "ffn_b1": jnp.zeros((L, 1, I), jnp.float32),
        "ffn_w2": jnp.stack(w2s),                            # (L, I, H) bf16
        "ffn_b2": jnp.zeros((L, 1, H), jnp.float32),
        "ln2_g": jnp.ones((L, 1, H), jnp.float32),
        "ln2_b": jnp.zeros((L, 1, H), jnp.float32),
        # lane-padded regression head: only column 0 is real
        "reg_w": jnp.pad(reg_w, ((0, 0), (0, LANE - 1))).astype(jnp.bfloat16),  # (H, 128)
        "reg_b": jnp.zeros((1, LANE), jnp.float32),
    }


if __name__ == "__main__":
    key = jax.random.PRNGKey(0)
    pkey, ikey = jax.random.split(key)
    params = init_params(pkey)

    input_ids = jax.random.randint(ikey, (BATCH, SEQ), 0, VOCAB, dtype=jnp.int32)
    attention_mask = jnp.array(
        [[1] * SEQ, [1] * (SEQ - 3) + [0] * 3], dtype=jnp.int32
    )  # second example has 3 padding tokens

    fwd = jax.jit(deberta_for_regression)
    out = jax.block_until_ready(fwd(params, input_ids, attention_mask))

    assert out.shape == (BATCH, 1) and out.dtype == jnp.float32
    assert bool(jnp.all(jnp.isfinite(out)))
    print("KERNEL_OK")
</pallas_src>

<mosaic_0001>
module attributes {stable_mosaic.version = 11 : i64} {
  func.func @_deberta_fused_kernel(%arg0: i32, %arg1: memref<1x8x32xf32, #tpu.memory_space<vmem>>, %arg2: memref<1x1x128xf32, #tpu.memory_space<vmem>>, %arg3: memref<1x8x1xf32, #tpu.memory_space<vmem>>, %arg4: memref<1x32xf32, #tpu.memory_space<vmem>>, %arg5: memref<1x32xf32, #tpu.memory_space<vmem>>, %arg6: memref<2x32x768xbf16, #tpu.memory_space<vmem>>, %arg7: memref<2x1x768xf32, #tpu.memory_space<vmem>>, %arg8: memref<2x256x32xbf16, #tpu.memory_space<vmem>>, %arg9: memref<2x1x32xf32, #tpu.memory_space<vmem>>, %arg10: memref<2x1x32xf32, #tpu.memory_space<vmem>>, %arg11: memref<2x1x32xf32, #tpu.memory_space<vmem>>, %arg12: memref<2x32x64xbf16, #tpu.memory_space<vmem>>, %arg13: memref<2x1x64xf32, #tpu.memory_space<vmem>>, %arg14: memref<2x64x32xbf16, #tpu.memory_space<vmem>>, %arg15: memref<2x1x32xf32, #tpu.memory_space<vmem>>, %arg16: memref<2x1x32xf32, #tpu.memory_space<vmem>>, %arg17: memref<2x1x32xf32, #tpu.memory_space<vmem>>, %arg18: memref<32x128xbf16, #tpu.memory_space<vmem>>, %arg19: memref<1x128xf32, #tpu.memory_space<vmem>>, %arg20: memref<1x1x128xf32, #tpu.memory_space<vmem>>) attributes {dimension_semantics = [#tpu.dimension_semantics<parallel>], iteration_bounds = array<i64: 2>, scalar_prefetch = 0 : i64, scratch_operands = 0 : i64, tpu.core_type = #tpu.core_type<tc>, window_params = [{transform_indices = @transform_0, window_bounds = array<i64: 1, 8, 32>}, {transform_indices = @transform_1, window_bounds = array<i64: 1, 1, 128>}, {transform_indices = @transform_2, window_bounds = array<i64: 1, 8, 1>}, {pipeline_mode = #tpu.pipeline_mode<synchronous>, transform_indices = @transform_3, window_bounds = array<i64: 1, 32>}, {pipeline_mode = #tpu.pipeline_mode<synchronous>, transform_indices = @transform_4, window_bounds = array<i64: 1, 32>}, {pipeline_mode = #tpu.pipeline_mode<synchronous>, transform_indices = @transform_5, window_bounds = array<i64: 2, 32, 768>}, {pipeline_mode = #tpu.pipeline_mode<synchronous>, transform_indices = @transform_6, window_bounds = array<i64: 2, 1, 768>}, {pipeline_mode = #tpu.pipeline_mode<synchronous>, transform_indices = @transform_7, window_bounds = array<i64: 2, 256, 32>}, {pipeline_mode = #tpu.pipeline_mode<synchronous>, transform_indices = @transform_8, window_bounds = array<i64: 2, 1, 32>}, {pipeline_mode = #tpu.pipeline_mode<synchronous>, transform_indices = @transform_9, window_bounds = array<i64: 2, 1, 32>}, {pipeline_mode = #tpu.pipeline_mode<synchronous>, transform_indices = @transform_10, window_bounds = array<i64: 2, 1, 32>}, {pipeline_mode = #tpu.pipeline_mode<synchronous>, transform_indices = @transform_11, window_bounds = array<i64: 2, 32, 64>}, {pipeline_mode = #tpu.pipeline_mode<synchronous>, transform_indices = @transform_12, window_bounds = array<i64: 2, 1, 64>}, {pipeline_mode = #tpu.pipeline_mode<synchronous>, transform_indices = @transform_13, window_bounds = array<i64: 2, 64, 32>}, {pipeline_mode = #tpu.pipeline_mode<synchronous>, transform_indices = @transform_14, window_bounds = array<i64: 2, 1, 32>}, {pipeline_mode = #tpu.pipeline_mode<synchronous>, transform_indices = @transform_15, window_bounds = array<i64: 2, 1, 32>}, {pipeline_mode = #tpu.pipeline_mode<synchronous>, transform_indices = @transform_16, window_bounds = array<i64: 2, 1, 32>}, {pipeline_mode = #tpu.pipeline_mode<synchronous>, transform_indices = @transform_17, window_bounds = array<i64: 32, 128>}, {pipeline_mode = #tpu.pipeline_mode<synchronous>, transform_indices = @transform_18, window_bounds = array<i64: 1, 128>}, {transform_indices = @transform_19, window_bounds = array<i64: 1, 1, 128>}]} {
    %c0 = arith.constant 0 : index
    %c0_0 = arith.constant 0 : index
    %c0_1 = arith.constant 0 : index
    %0 = vector.load %arg1[%c0, %c0_0, %c0_1] : memref<1x8x32xf32, #tpu.memory_space<vmem>>, vector<1x8x32xf32>
    %1 = vector.shape_cast %0 : vector<1x8x32xf32> to vector<8x32xf32>
    %c0_2 = arith.constant 0 : index
    %c0_3 = arith.constant 0 : index
    %2 = vector.load %arg4[%c0_2, %c0_3] : memref<1x32xf32, #tpu.memory_space<vmem>>, vector<1x32xf32>
    %c0_4 = arith.constant 0 : index
    %c0_5 = arith.constant 0 : index
    %3 = vector.load %arg5[%c0_4, %c0_5] : memref<1x32xf32, #tpu.memory_space<vmem>>, vector<1x32xf32>
    %cst = arith.constant dense<0.000000e+00> : vector<8xf32>
    %4 = vector.multi_reduction <add>, %1, %cst [1] : vector<8x32xf32> to vector<8xf32>
    %5 = vector.shape_cast %4 : vector<8xf32> to vector<8x1xf32>
    %cst_6 = arith.constant 3.200000e+01 : f32
    %6 = vector.broadcast %cst_6 : f32 to vector<8x1xf32>
    %7 = arith.divf %5, %6 : vector<8x1xf32>
    %8 = vector.broadcast %7 : vector<8x1xf32> to vector<8x32xf32>
    %9 = arith.subf %1, %8 : vector<8x32xf32>
    %10 = arith.mulf %9, %9 : vector<8x32xf32>
    %cst_7 = arith.constant dense<0.000000e+00> : vector<8xf32>
    %11 = vector.multi_reduction <add>, %10, %cst_7 [1] : vector<8x32xf32> to vector<8xf32>
    %12 = vector.shape_cast %11 : vector<8xf32> to vector<8x1xf32>
    %cst_8 = arith.constant 3.200000e+01 : f32
    %13 = vector.broadcast %cst_8 : f32 to vector<8x1xf32>
    %14 = arith.divf %12, %13 : vector<8x1xf32>
    %15 = vector.broadcast %7 : vector<8x1xf32> to vector<8x32xf32>
    %16 = arith.subf %1, %15 : vector<8x32xf32>
    %cst_9 = arith.constant 1.000000e-07 : f32
    %17 = vector.broadcast %cst_9 : f32 to vector<8x1xf32>
    %18 = arith.addf %14, %17 : vector<8x1xf32>
    %19 = math.rsqrt %18 : vector<8x1xf32>
    %20 = vector.broadcast %19 : vector<8x1xf32> to vector<8x32xf32>
    %21 = arith.mulf %16, %20 : vector<8x32xf32>
    %22 = vector.broadcast %2 : vector<1x32xf32> to vector<8x32xf32>
    %23 = arith.mulf %21, %22 : vector<8x32xf32>
    %24 = vector.broadcast %3 : vector<1x32xf32> to vector<8x32xf32>
    %25 = arith.addf %23, %24 : vector<8x32xf32>
    %c0_10 = arith.constant 0 : index
    %c0_11 = arith.constant 0 : index
    %c0_12 = arith.constant 0 : index
    %26 = vector.load %arg2[%c0_10, %c0_11, %c0_12] : memref<1x1x128xf32, #tpu.memory_space<vmem>>, vector<1x1x128xf32>
    %27 = vector.shape_cast %26 : vector<1x1x128xf32> to vector<1x128xf32>
    %28 = vector.extract_strided_slice %27 {offsets = [0, 0], sizes = [1, 8], strides = [1, 1]} : vector<1x128xf32> to vector<1x8xf32>
    %29 = arith.truncf %25 : vector<8x32xf32> to vector<8x32xbf16>
    %c0_13 = arith.constant 0 : index
    %c0_14 = arith.constant 0 : index
    %c0_15 = arith.constant 0 : index
    %30 = vector.load %arg6[%c0_13, %c0_14, %c0_15] : memref<2x32x768xbf16, #tpu.memory_space<vmem>>, vector<1x32x768xbf16>
    %31 = vector.shape_cast %30 : vector<1x32x768xbf16> to vector<32x768xbf16>
    %cst_16 = arith.constant dense<0.000000e+00> : vector<8x768xf32>
    %32 = tpu.matmul %29, %31, %cst_16 {dimension_numbers = #tpu.dot_dimension_numbers<[1], [0], [0], [1], [0, 0, 1, 1], [], []>} : vector<8x32xbf16>, vector<32x768xbf16>, vector<8x768xf32> -> vector<8x768xf32>
    %c0_17 = arith.constant 0 : index
    %c0_18 = arith.constant 0 : index
    %c0_19 = arith.constant 0 : index
    %33 = vector.load %arg7[%c0_17, %c0_18, %c0_19] : memref<2x1x768xf32, #tpu.memory_space<vmem>>, vector<1x1x768xf32>
    %34 = vector.shape_cast %33 : vector<1x1x768xf32> to vector<1x768xf32>
    %35 = vector.broadcast %34 : vector<1x768xf32> to vector<8x768xf32>
    %36 = arith.addf %32, %35 : vector<8x768xf32>
    %37 = vector.extract_strided_slice %36 {offsets = [0, 0], sizes = [8, 128], strides = [1, 1]} : vector<8x768xf32> to vector<8x128xf32>
    %38 = vector.extract_strided_slice %36 {offsets = [0, 256], sizes = [8, 128], strides = [1, 1]} : vector<8x768xf32> to vector<8x128xf32>
    %39 = vector.extract_strided_slice %36 {offsets = [0, 512], sizes = [8, 128], strides = [1, 1]} : vector<8x768xf32> to vector<8x128xf32>
    %40 = arith.truncf %37 : vector<8x128xf32> to vector<8x128xbf16>
    %41 = arith.truncf %38 : vector<8x128xf32> to vector<8x128xbf16>
    %cst_20 = arith.constant dense<0.000000e+00> : vector<8x8xf32>
    %42 = tpu.matmul %40, %41, %cst_20 {dimension_numbers = #tpu.dot_dimension_numbers<[1], [1], [0], [0], [0, 0, 1, 0], [], []>} : vector<8x128xbf16>, vector<8x128xbf16>, vector<8x8xf32> -> vector<8x8xf32>
    %43 = vector.broadcast %28 : vector<1x8xf32> to vector<8x8xf32>
    %44 = arith.addf %42, %43 : vector<8x8xf32>
    %cst_21 = arith.constant dense<0xFF800000> : vector<8xf32>
    %45 = vector.multi_reduction <maximumf>, %44, %cst_21 [1] : vector<8x8xf32> to vector<8xf32>
    %46 = vector.shape_cast %45 : vector<8xf32> to vector<8x1xf32>
    %47 = vector.broadcast %46 : vector<8x1xf32> to vector<8x8xf32>
    %48 = arith.subf %44, %47 : vector<8x8xf32>
    %49 = math.exp %48 : vector<8x8xf32>
    %50 = arith.truncf %49 : vector<8x8xf32> to vector<8x8xbf16>
    %51 = arith.truncf %39 : vector<8x128xf32> to vector<8x128xbf16>
    %cst_22 = arith.constant dense<0.000000e+00> : vector<8x128xf32>
    %52 = tpu.matmul %50, %51, %cst_22 {dimension_numbers = #tpu.dot_dimension_numbers<[1], [0], [0], [1], [0, 0, 1, 1], [], []>} : vector<8x8xbf16>, vector<8x128xbf16>, vector<8x128xf32> -> vector<8x128xf32>
    %cst_23 = arith.constant dense<0.000000e+00> : vector<8xf32>
    %53 = vector.multi_reduction <add>, %49, %cst_23 [1] : vector<8x8xf32> to vector<8xf32>
    %54 = vector.shape_cast %53 : vector<8xf32> to vector<8x1xf32>
    %55 = tpu.reciprocal %54 {approx = true} : vector<8x1xf32> -> vector<8x1xf32>
    %56 = vector.broadcast %55 : vector<8x1xf32> to vector<8x128xf32>
    %57 = arith.mulf %52, %56 : vector<8x128xf32>
    %58 = vector.extract_strided_slice %36 {offsets = [0, 128], sizes = [8, 128], strides = [1, 1]} : vector<8x768xf32> to vector<8x128xf32>
    %59 = vector.extract_strided_slice %36 {offsets = [0, 384], sizes = [8, 128], strides = [1, 1]} : vector<8x768xf32> to vector<8x128xf32>
    %60 = vector.extract_strided_slice %36 {offsets = [0, 640], sizes = [8, 128], strides = [1, 1]} : vector<8x768xf32> to vector<8x128xf32>
    %61 = arith.truncf %58 : vector<8x128xf32> to vector<8x128xbf16>
    %62 = arith.truncf %59 : vector<8x128xf32> to vector<8x128xbf16>
    %cst_24 = arith.constant dense<0.000000e+00> : vector<8x8xf32>
    %63 = tpu.matmul %61, %62, %cst_24 {dimension_numbers = #tpu.dot_dimension_numbers<[1], [1], [0], [0], [0, 0, 1, 0], [], []>} : vector<8x128xbf16>, vector<8x128xbf16>, vector<8x8xf32> -> vector<8x8xf32>
    %64 = vector.broadcast %28 : vector<1x8xf32> to vector<8x8xf32>
    %65 = arith.addf %63, %64 : vector<8x8xf32>
    %cst_25 = arith.constant dense<0xFF800000> : vector<8xf32>
    %66 = vector.multi_reduction <maximumf>, %65, %cst_25 [1] : vector<8x8xf32> to vector<8xf32>
    %67 = vector.shape_cast %66 : vector<8xf32> to vector<8x1xf32>
    %68 = vector.broadcast %67 : vector<8x1xf32> to vector<8x8xf32>
    %69 = arith.subf %65, %68 : vector<8x8xf32>
    %70 = math.exp %69 : vector<8x8xf32>
    %71 = arith.truncf %70 : vector<8x8xf32> to vector<8x8xbf16>
    %72 = arith.truncf %60 : vector<8x128xf32> to vector<8x128xbf16>
    %cst_26 = arith.constant dense<0.000000e+00> : vector<8x128xf32>
    %73 = tpu.matmul %71, %72, %cst_26 {dimension_numbers = #tpu.dot_dimension_numbers<[1], [0], [0], [1], [0, 0, 1, 1], [], []>} : vector<8x8xbf16>, vector<8x128xbf16>, vector<8x128xf32> -> vector<8x128xf32>
    %cst_27 = arith.constant dense<0.000000e+00> : vector<8xf32>
    %74 = vector.multi_reduction <add>, %70, %cst_27 [1] : vector<8x8xf32> to vector<8xf32>
    %75 = vector.shape_cast %74 : vector<8xf32> to vector<8x1xf32>
    %76 = tpu.reciprocal %75 {approx = true} : vector<8x1xf32> -> vector<8x1xf32>
    %77 = vector.broadcast %76 : vector<8x1xf32> to vector<8x128xf32>
    %78 = arith.mulf %73, %77 : vector<8x128xf32>
    %79 = tpu.concatenate %57, %78 in 1 : vector<8x128xf32>, vector<8x128xf32> -> vector<8x256xf32>
    %80 = arith.truncf %79 : vector<8x256xf32> to vector<8x256xbf16>
    %c0_28 = arith.constant 0 : index
    %c0_29 = arith.constant 0 : index
    %c0_30 = arith.constant 0 : index
    %81 = vector.load %arg8[%c0_28, %c0_29, %c0_30] : memref<2x256x32xbf16, #tpu.memory_space<vmem>>, vector<1x256x32xbf16>
    %82 = vector.shape_cast %81 : vector<1x256x32xbf16> to vector<256x32xbf16>
    %cst_31 = arith.constant dense<0.000000e+00> : vector<8x32xf32>
    %83 = tpu.matmul %80, %82, %cst_31 {dimension_numbers = #tpu.dot_dimension_numbers<[1], [0], [0], [1], [0, 0, 1, 1], [], []>} : vector<8x256xbf16>, vector<256x32xbf16>, vector<8x32xf32> -> vector<8x32xf32>
    %c0_32 = arith.constant 0 : index
    %c0_33 = arith.constant 0 : index
    %c0_34 = arith.constant 0 : index
    %84 = vector.load %arg9[%c0_32, %c0_33, %c0_34] : memref<2x1x32xf32, #tpu.memory_space<vmem>>, vector<1x1x32xf32>
    %85 = vector.shape_cast %84 : vector<1x1x32xf32> to vector<1x32xf32>
    %86 = vector.broadcast %85 : vector<1x32xf32> to vector<8x32xf32>
    %87 = arith.addf %83, %86 : vector<8x32xf32>
    %88 = arith.addf %87, %25 : vector<8x32xf32>
    %c0_35 = arith.constant 0 : index
    %c0_36 = arith.constant 0 : index
    %c0_37 = arith.constant 0 : index
    %89 = vector.load %arg10[%c0_35, %c0_36, %c0_37] : memref<2x1x32xf32, #tpu.memory_space<vmem>>, vector<1x1x32xf32>
    %90 = vector.shape_cast %89 : vector<1x1x32xf32> to vector<1x32xf32>
    %c0_38 = arith.constant 0 : index
    %c0_39 = arith.constant 0 : index
    %c0_40 = arith.constant 0 : index
    %91 = vector.load %arg11[%c0_38, %c0_39, %c0_40] : memref<2x1x32xf32, #tpu.memory_space<vmem>>, vector<1x1x32xf32>
    %92 = vector.shape_cast %91 : vector<1x1x32xf32> to vector<1x32xf32>
    %cst_41 = arith.constant dense<0.000000e+00> : vector<8xf32>
    %93 = vector.multi_reduction <add>, %88, %cst_41 [1] : vector<8x32xf32> to vector<8xf32>
    %94 = vector.shape_cast %93 : vector<8xf32> to vector<8x1xf32>
    %cst_42 = arith.constant 3.200000e+01 : f32
    %95 = vector.broadcast %cst_42 : f32 to vector<8x1xf32>
    %96 = arith.divf %94, %95 : vector<8x1xf32>
    %97 = vector.broadcast %96 : vector<8x1xf32> to vector<8x32xf32>
    %98 = arith.subf %88, %97 : vector<8x32xf32>
    %99 = arith.mulf %98, %98 : vector<8x32xf32>
    %cst_43 = arith.constant dense<0.000000e+00> : vector<8xf32>
    %100 = vector.multi_reduction <add>, %99, %cst_43 [1] : vector<8x32xf32> to vector<8xf32>
    %101 = vector.shape_cast %100 : vector<8xf32> to vector<8x1xf32>
    %cst_44 = arith.constant 3.200000e+01 : f32
    %102 = vector.broadcast %cst_44 : f32 to vector<8x1xf32>
    %103 = arith.divf %101, %102 : vector<8x1xf32>
    %104 = vector.broadcast %96 : vector<8x1xf32> to vector<8x32xf32>
    %105 = arith.subf %88, %104 : vector<8x32xf32>
    %cst_45 = arith.constant 1.000000e-07 : f32
    %106 = vector.broadcast %cst_45 : f32 to vector<8x1xf32>
    %107 = arith.addf %103, %106 : vector<8x1xf32>
    %108 = math.rsqrt %107 : vector<8x1xf32>
    %109 = vector.broadcast %108 : vector<8x1xf32> to vector<8x32xf32>
    %110 = arith.mulf %105, %109 : vector<8x32xf32>
    %111 = vector.broadcast %90 : vector<1x32xf32> to vector<8x32xf32>
    %112 = arith.mulf %110, %111 : vector<8x32xf32>
    %113 = vector.broadcast %92 : vector<1x32xf32> to vector<8x32xf32>
    %114 = arith.addf %112, %113 : vector<8x32xf32>
    %115 = arith.truncf %114 : vector<8x32xf32> to vector<8x32xbf16>
    %c0_46 = arith.constant 0 : index
    %c0_47 = arith.constant 0 : index
    %c0_48 = arith.constant 0 : index
    %116 = vector.load %arg12[%c0_46, %c0_47, %c0_48] : memref<2x32x64xbf16, #tpu.memory_space<vmem>>, vector<1x32x64xbf16>
    %117 = vector.shape_cast %116 : vector<1x32x64xbf16> to vector<32x64xbf16>
    %cst_49 = arith.constant dense<0.000000e+00> : vector<8x64xf32>
    %118 = tpu.matmul %115, %117, %cst_49 {dimension_numbers = #tpu.dot_dimension_numbers<[1], [0], [0], [1], [0, 0, 1, 1], [], []>} : vector<8x32xbf16>, vector<32x64xbf16>, vector<8x64xf32> -> vector<8x64xf32>
    %c0_50 = arith.constant 0 : index
    %c0_51 = arith.constant 0 : index
    %c0_52 = arith.constant 0 : index
    %119 = vector.load %arg13[%c0_50, %c0_51, %c0_52] : memref<2x1x64xf32, #tpu.memory_space<vmem>>, vector<1x1x64xf32>
    %120 = vector.shape_cast %119 : vector<1x1x64xf32> to vector<1x64xf32>
    %121 = vector.broadcast %120 : vector<1x64xf32> to vector<8x64xf32>
    %122 = arith.addf %118, %121 : vector<8x64xf32>
    %123 = arith.mulf %122, %122 : vector<8x64xf32>
    %124 = arith.mulf %122, %123 : vector<8x64xf32>
    %cst_53 = arith.constant 4.471500e-02 : f32
    %125 = vector.broadcast %cst_53 : f32 to vector<8x64xf32>
    %126 = arith.mulf %125, %124 : vector<8x64xf32>
    %127 = arith.addf %122, %126 : vector<8x64xf32>
    %cst_54 = arith.constant 0.797884583 : f32
    %128 = vector.broadcast %cst_54 : f32 to vector<8x64xf32>
    %129 = arith.mulf %128, %127 : vector<8x64xf32>
    %130 = math.tanh %129 : vector<8x64xf32>
    %cst_55 = arith.constant 1.000000e+00 : f32
    %131 = vector.broadcast %cst_55 : f32 to vector<8x64xf32>
    %132 = arith.addf %131, %130 : vector<8x64xf32>
    %cst_56 = arith.constant 5.000000e-01 : f32
    %133 = vector.broadcast %cst_56 : f32 to vector<8x64xf32>
    %134 = arith.mulf %133, %132 : vector<8x64xf32>
    %135 = arith.mulf %122, %134 : vector<8x64xf32>
    %136 = arith.truncf %135 : vector<8x64xf32> to vector<8x64xbf16>
    %c0_57 = arith.constant 0 : index
    %c0_58 = arith.constant 0 : index
    %c0_59 = arith.constant 0 : index
    %137 = vector.load %arg14[%c0_57, %c0_58, %c0_59] : memref<2x64x32xbf16, #tpu.memory_space<vmem>>, vector<1x64x32xbf16>
    %138 = vector.shape_cast %137 : vector<1x64x32xbf16> to vector<64x32xbf16>
    %cst_60 = arith.constant dense<0.000000e+00> : vector<8x32xf32>
    %139 = tpu.matmul %136, %138, %cst_60 {dimension_numbers = #tpu.dot_dimension_numbers<[1], [0], [0], [1], [0, 0, 1, 1], [], []>} : vector<8x64xbf16>, vector<64x32xbf16>, vector<8x32xf32> -> vector<8x32xf32>
    %c0_61 = arith.constant 0 : index
    %c0_62 = arith.constant 0 : index
    %c0_63 = arith.constant 0 : index
    %140 = vector.load %arg15[%c0_61, %c0_62, %c0_63] : memref<2x1x32xf32, #tpu.memory_space<vmem>>, vector<1x1x32xf32>
    %141 = vector.shape_cast %140 : vector<1x1x32xf32> to vector<1x32xf32>
    %142 = vector.broadcast %141 : vector<1x32xf32> to vector<8x32xf32>
    %143 = arith.addf %139, %142 : vector<8x32xf32>
    %144 = arith.addf %143, %114 : vector<8x32xf32>
    %c0_64 = arith.constant 0 : index
    %c0_65 = arith.constant 0 : index
    %c0_66 = arith.constant 0 : index
    %145 = vector.load %arg16[%c0_64, %c0_65, %c0_66] : memref<2x1x32xf32, #tpu.memory_space<vmem>>, vector<1x1x32xf32>
    %146 = vector.shape_cast %145 : vector<1x1x32xf32> to vector<1x32xf32>
    %c0_67 = arith.constant 0 : index
    %c0_68 = arith.constant 0 : index
    %c0_69 = arith.constant 0 : index
    %147 = vector.load %arg17[%c0_67, %c0_68, %c0_69] : memref<2x1x32xf32, #tpu.memory_space<vmem>>, vector<1x1x32xf32>
    %148 = vector.shape_cast %147 : vector<1x1x32xf32> to vector<1x32xf32>
    %cst_70 = arith.constant dense<0.000000e+00> : vector<8xf32>
    %149 = vector.multi_reduction <add>, %144, %cst_70 [1] : vector<8x32xf32> to vector<8xf32>
    %150 = vector.shape_cast %149 : vector<8xf32> to vector<8x1xf32>
    %cst_71 = arith.constant 3.200000e+01 : f32
    %151 = vector.broadcast %cst_71 : f32 to vector<8x1xf32>
    %152 = arith.divf %150, %151 : vector<8x1xf32>
    %153 = vector.broadcast %152 : vector<8x1xf32> to vector<8x32xf32>
    %154 = arith.subf %144, %153 : vector<8x32xf32>
    %155 = arith.mulf %154, %154 : vector<8x32xf32>
    %cst_72 = arith.constant dense<0.000000e+00> : vector<8xf32>
    %156 = vector.multi_reduction <add>, %155, %cst_72 [1] : vector<8x32xf32> to vector<8xf32>
    %157 = vector.shape_cast %156 : vector<8xf32> to vector<8x1xf32>
    %cst_73 = arith.constant 3.200000e+01 : f32
    %158 = vector.broadcast %cst_73 : f32 to vector<8x1xf32>
    %159 = arith.divf %157, %158 : vector<8x1xf32>
    %160 = vector.broadcast %152 : vector<8x1xf32> to vector<8x32xf32>
    %161 = arith.subf %144, %160 : vector<8x32xf32>
    %cst_74 = arith.constant 1.000000e-07 : f32
    %162 = vector.broadcast %cst_74 : f32 to vector<8x1xf32>
    %163 = arith.addf %159, %162 : vector<8x1xf32>
    %164 = math.rsqrt %163 : vector<8x1xf32>
    %165 = vector.broadcast %164 : vector<8x1xf32> to vector<8x32xf32>
    %166 = arith.mulf %161, %165 : vector<8x32xf32>
    %167 = vector.broadcast %146 : vector<1x32xf32> to vector<8x32xf32>
    %168 = arith.mulf %166, %167 : vector<8x32xf32>
    %169 = vector.broadcast %148 : vector<1x32xf32> to vector<8x32xf32>
    %170 = arith.addf %168, %169 : vector<8x32xf32>
    %171 = arith.truncf %170 : vector<8x32xf32> to vector<8x32xbf16>
    %c1 = arith.constant 1 : index
    %c0_75 = arith.constant 0 : index
    %c0_76 = arith.constant 0 : index
    %172 = vector.load %arg6[%c1, %c0_75, %c0_76] : memref<2x32x768xbf16, #tpu.memory_space<vmem>>, vector<1x32x768xbf16>
    %173 = vector.shape_cast %172 : vector<1x32x768xbf16> to vector<32x768xbf16>
    %cst_77 = arith.constant dense<0.000000e+00> : vector<8x768xf32>
    %174 = tpu.matmul %171, %173, %cst_77 {dimension_numbers = #tpu.dot_dimension_numbers<[1], [0], [0], [1], [0, 0, 1, 1], [], []>} : vector<8x32xbf16>, vector<32x768xbf16>, vector<8x768xf32> -> vector<8x768xf32>
    %c1_78 = arith.constant 1 : index
    %c0_79 = arith.constant 0 : index
    %c0_80 = arith.constant 0 : index
    %175 = vector.load %arg7[%c1_78, %c0_79, %c0_80] : memref<2x1x768xf32, #tpu.memory_space<vmem>>, vector<1x1x768xf32>
    %176 = vector.shape_cast %175 : vector<1x1x768xf32> to vector<1x768xf32>
    %177 = vector.broadcast %176 : vector<1x768xf32> to vector<8x768xf32>
    %178 = arith.addf %174, %177 : vector<8x768xf32>
    %179 = vector.extract_strided_slice %178 {offsets = [0, 0], sizes = [8, 128], strides = [1, 1]} : vector<8x768xf32> to vector<8x128xf32>
    %180 = vector.extract_strided_slice %178 {offsets = [0, 256], sizes = [8, 128], strides = [1, 1]} : vector<8x768xf32> to vector<8x128xf32>
    %181 = vector.extract_strided_slice %178 {offsets = [0, 512], sizes = [8, 128], strides = [1, 1]} : vector<8x768xf32> to vector<8x128xf32>
    %182 = arith.truncf %179 : vector<8x128xf32> to vector<8x128xbf16>
    %183 = arith.truncf %180 : vector<8x128xf32> to vector<8x128xbf16>
    %cst_81 = arith.constant dense<0.000000e+00> : vector<8x8xf32>
    %184 = tpu.matmul %182, %183, %cst_81 {dimension_numbers = #tpu.dot_dimension_numbers<[1], [1], [0], [0], [0, 0, 1, 0], [], []>} : vector<8x128xbf16>, vector<8x128xbf16>, vector<8x8xf32> -> vector<8x8xf32>
    %185 = vector.broadcast %28 : vector<1x8xf32> to vector<8x8xf32>
    %186 = arith.addf %184, %185 : vector<8x8xf32>
    %cst_82 = arith.constant dense<0xFF800000> : vector<8xf32>
    %187 = vector.multi_reduction <maximumf>, %186, %cst_82 [1] : vector<8x8xf32> to vector<8xf32>
    %188 = vector.shape_cast %187 : vector<8xf32> to vector<8x1xf32>
    %189 = vector.broadcast %188 : vector<8x1xf32> to vector<8x8xf32>
    %190 = arith.subf %186, %189 : vector<8x8xf32>
    %191 = math.exp %190 : vector<8x8xf32>
    %192 = arith.truncf %191 : vector<8x8xf32> to vector<8x8xbf16>
    %193 = arith.truncf %181 : vector<8x128xf32> to vector<8x128xbf16>
    %cst_83 = arith.constant dense<0.000000e+00> : vector<8x128xf32>
    %194 = tpu.matmul %192, %193, %cst_83 {dimension_numbers = #tpu.dot_dimension_numbers<[1], [0], [0], [1], [0, 0, 1, 1], [], []>} : vector<8x8xbf16>, vector<8x128xbf16>, vector<8x128xf32> -> vector<8x128xf32>
    %cst_84 = arith.constant dense<0.000000e+00> : vector<8xf32>
    %195 = vector.multi_reduction <add>, %191, %cst_84 [1] : vector<8x8xf32> to vector<8xf32>
    %196 = vector.shape_cast %195 : vector<8xf32> to vector<8x1xf32>
    %197 = tpu.reciprocal %196 {approx = true} : vector<8x1xf32> -> vector<8x1xf32>
    %198 = vector.broadcast %197 : vector<8x1xf32> to vector<8x128xf32>
    %199 = arith.mulf %194, %198 : vector<8x128xf32>
    %200 = vector.extract_strided_slice %178 {offsets = [0, 128], sizes = [8, 128], strides = [1, 1]} : vector<8x768xf32> to vector<8x128xf32>
    %201 = vector.extract_strided_slice %178 {offsets = [0, 384], sizes = [8, 128], strides = [1, 1]} : vector<8x768xf32> to vector<8x128xf32>
    %202 = vector.extract_strided_slice %178 {offsets = [0, 640], sizes = [8, 128], strides = [1, 1]} : vector<8x768xf32> to vector<8x128xf32>
    %203 = arith.truncf %200 : vector<8x128xf32> to vector<8x128xbf16>
    %204 = arith.truncf %201 : vector<8x128xf32> to vector<8x128xbf16>
    %cst_85 = arith.constant dense<0.000000e+00> : vector<8x8xf32>
    %205 = tpu.matmul %203, %204, %cst_85 {dimension_numbers = #tpu.dot_dimension_numbers<[1], [1], [0], [0], [0, 0, 1, 0], [], []>} : vector<8x128xbf16>, vector<8x128xbf16>, vector<8x8xf32> -> vector<8x8xf32>
    %206 = vector.broadcast %28 : vector<1x8xf32> to vector<8x8xf32>
    %207 = arith.addf %205, %206 : vector<8x8xf32>
    %cst_86 = arith.constant dense<0xFF800000> : vector<8xf32>
    %208 = vector.multi_reduction <maximumf>, %207, %cst_86 [1] : vector<8x8xf32> to vector<8xf32>
    %209 = vector.shape_cast %208 : vector<8xf32> to vector<8x1xf32>
    %210 = vector.broadcast %209 : vector<8x1xf32> to vector<8x8xf32>
    %211 = arith.subf %207, %210 : vector<8x8xf32>
    %212 = math.exp %211 : vector<8x8xf32>
    %213 = arith.truncf %212 : vector<8x8xf32> to vector<8x8xbf16>
    %214 = arith.truncf %202 : vector<8x128xf32> to vector<8x128xbf16>
    %cst_87 = arith.constant dense<0.000000e+00> : vector<8x128xf32>
    %215 = tpu.matmul %213, %214, %cst_87 {dimension_numbers = #tpu.dot_dimension_numbers<[1], [0], [0], [1], [0, 0, 1, 1], [], []>} : vector<8x8xbf16>, vector<8x128xbf16>, vector<8x128xf32> -> vector<8x128xf32>
    %cst_88 = arith.constant dense<0.000000e+00> : vector<8xf32>
    %216 = vector.multi_reduction <add>, %212, %cst_88 [1] : vector<8x8xf32> to vector<8xf32>
    %217 = vector.shape_cast %216 : vector<8xf32> to vector<8x1xf32>
    %218 = tpu.reciprocal %217 {approx = true} : vector<8x1xf32> -> vector<8x1xf32>
    %219 = vector.broadcast %218 : vector<8x1xf32> to vector<8x128xf32>
    %220 = arith.mulf %215, %219 : vector<8x128xf32>
    %221 = tpu.concatenate %199, %220 in 1 : vector<8x128xf32>, vector<8x128xf32> -> vector<8x256xf32>
    %222 = arith.truncf %221 : vector<8x256xf32> to vector<8x256xbf16>
    %c1_89 = arith.constant 1 : index
    %c0_90 = arith.constant 0 : index
    %c0_91 = arith.constant 0 : index
    %223 = vector.load %arg8[%c1_89, %c0_90, %c0_91] : memref<2x256x32xbf16, #tpu.memory_space<vmem>>, vector<1x256x32xbf16>
    %224 = vector.shape_cast %223 : vector<1x256x32xbf16> to vector<256x32xbf16>
    %cst_92 = arith.constant dense<0.000000e+00> : vector<8x32xf32>
    %225 = tpu.matmul %222, %224, %cst_92 {dimension_numbers = #tpu.dot_dimension_numbers<[1], [0], [0], [1], [0, 0, 1, 1], [], []>} : vector<8x256xbf16>, vector<256x32xbf16>, vector<8x32xf32> -> vector<8x32xf32>
    %c1_93 = arith.constant 1 : index
    %c0_94 = arith.constant 0 : index
    %c0_95 = arith.constant 0 : index
    %226 = vector.load %arg9[%c1_93, %c0_94, %c0_95] : memref<2x1x32xf32, #tpu.memory_space<vmem>>, vector<1x1x32xf32>
    %227 = vector.shape_cast %226 : vector<1x1x32xf32> to vector<1x32xf32>
    %228 = vector.broadcast %227 : vector<1x32xf32> to vector<8x32xf32>
    %229 = arith.addf %225, %228 : vector<8x32xf32>
    %230 = arith.addf %229, %170 : vector<8x32xf32>
    %c1_96 = arith.constant 1 : index
    %c0_97 = arith.constant 0 : index
    %c0_98 = arith.constant 0 : index
    %231 = vector.load %arg10[%c1_96, %c0_97, %c0_98] : memref<2x1x32xf32, #tpu.memory_space<vmem>>, vector<1x1x32xf32>
    %232 = vector.shape_cast %231 : vector<1x1x32xf32> to vector<1x32xf32>
    %c1_99 = arith.constant 1 : index
    %c0_100 = arith.constant 0 : index
    %c0_101 = arith.constant 0 : index
    %233 = vector.load %arg11[%c1_99, %c0_100, %c0_101] : memref<2x1x32xf32, #tpu.memory_space<vmem>>, vector<1x1x32xf32>
    %234 = vector.shape_cast %233 : vector<1x1x32xf32> to vector<1x32xf32>
    %cst_102 = arith.constant dense<0.000000e+00> : vector<8xf32>
    %235 = vector.multi_reduction <add>, %230, %cst_102 [1] : vector<8x32xf32> to vector<8xf32>
    %236 = vector.shape_cast %235 : vector<8xf32> to vector<8x1xf32>
    %cst_103 = arith.constant 3.200000e+01 : f32
    %237 = vector.broadcast %cst_103 : f32 to vector<8x1xf32>
    %238 = arith.divf %236, %237 : vector<8x1xf32>
    %239 = vector.broadcast %238 : vector<8x1xf32> to vector<8x32xf32>
    %240 = arith.subf %230, %239 : vector<8x32xf32>
    %241 = arith.mulf %240, %240 : vector<8x32xf32>
    %cst_104 = arith.constant dense<0.000000e+00> : vector<8xf32>
    %242 = vector.multi_reduction <add>, %241, %cst_104 [1] : vector<8x32xf32> to vector<8xf32>
    %243 = vector.shape_cast %242 : vector<8xf32> to vector<8x1xf32>
    %cst_105 = arith.constant 3.200000e+01 : f32
    %244 = vector.broadcast %cst_105 : f32 to vector<8x1xf32>
    %245 = arith.divf %243, %244 : vector<8x1xf32>
    %246 = vector.broadcast %238 : vector<8x1xf32> to vector<8x32xf32>
    %247 = arith.subf %230, %246 : vector<8x32xf32>
    %cst_106 = arith.constant 1.000000e-07 : f32
    %248 = vector.broadcast %cst_106 : f32 to vector<8x1xf32>
    %249 = arith.addf %245, %248 : vector<8x1xf32>
    %250 = math.rsqrt %249 : vector<8x1xf32>
    %251 = vector.broadcast %250 : vector<8x1xf32> to vector<8x32xf32>
    %252 = arith.mulf %247, %251 : vector<8x32xf32>
    %253 = vector.broadcast %232 : vector<1x32xf32> to vector<8x32xf32>
    %254 = arith.mulf %252, %253 : vector<8x32xf32>
    %255 = vector.broadcast %234 : vector<1x32xf32> to vector<8x32xf32>
    %256 = arith.addf %254, %255 : vector<8x32xf32>
    %257 = arith.truncf %256 : vector<8x32xf32> to vector<8x32xbf16>
    %c1_107 = arith.constant 1 : index
    %c0_108 = arith.constant 0 : index
    %c0_109 = arith.constant 0 : index
    %258 = vector.load %arg12[%c1_107, %c0_108, %c0_109] : memref<2x32x64xbf16, #tpu.memory_space<vmem>>, vector<1x32x64xbf16>
    %259 = vector.shape_cast %258 : vector<1x32x64xbf16> to vector<32x64xbf16>
    %cst_110 = arith.constant dense<0.000000e+00> : vector<8x64xf32>
    %260 = tpu.matmul %257, %259, %cst_110 {dimension_numbers = #tpu.dot_dimension_numbers<[1], [0], [0], [1], [0, 0, 1, 1], [], []>} : vector<8x32xbf16>, vector<32x64xbf16>, vector<8x64xf32> -> vector<8x64xf32>
    %c1_111 = arith.constant 1 : index
    %c0_112 = arith.constant 0 : index
    %c0_113 = arith.constant 0 : index
    %261 = vector.load %arg13[%c1_111, %c0_112, %c0_113] : memref<2x1x64xf32, #tpu.memory_space<vmem>>, vector<1x1x64xf32>
    %262 = vector.shape_cast %261 : vector<1x1x64xf32> to vector<1x64xf32>
    %263 = vector.broadcast %262 : vector<1x64xf32> to vector<8x64xf32>
    %264 = arith.addf %260, %263 : vector<8x64xf32>
    %265 = arith.mulf %264, %264 : vector<8x64xf32>
    %266 = arith.mulf %264, %265 : vector<8x64xf32>
    %cst_114 = arith.constant 4.471500e-02 : f32
    %267 = vector.broadcast %cst_114 : f32 to vector<8x64xf32>
    %268 = arith.mulf %267, %266 : vector<8x64xf32>
    %269 = arith.addf %264, %268 : vector<8x64xf32>
    %cst_115 = arith.constant 0.797884583 : f32
    %270 = vector.broadcast %cst_115 : f32 to vector<8x64xf32>
    %271 = arith.mulf %270, %269 : vector<8x64xf32>
    %272 = math.tanh %271 : vector<8x64xf32>
    %cst_116 = arith.constant 1.000000e+00 : f32
    %273 = vector.broadcast %cst_116 : f32 to vector<8x64xf32>
    %274 = arith.addf %273, %272 : vector<8x64xf32>
    %cst_117 = arith.constant 5.000000e-01 : f32
    %275 = vector.broadcast %cst_117 : f32 to vector<8x64xf32>
    %276 = arith.mulf %275, %274 : vector<8x64xf32>
    %277 = arith.mulf %264, %276 : vector<8x64xf32>
    %278 = arith.truncf %277 : vector<8x64xf32> to vector<8x64xbf16>
    %c1_118 = arith.constant 1 : index
    %c0_119 = arith.constant 0 : index
    %c0_120 = arith.constant 0 : index
    %279 = vector.load %arg14[%c1_118, %c0_119, %c0_120] : memref<2x64x32xbf16, #tpu.memory_space<vmem>>, vector<1x64x32xbf16>
    %280 = vector.shape_cast %279 : vector<1x64x32xbf16> to vector<64x32xbf16>
    %cst_121 = arith.constant dense<0.000000e+00> : vector<8x32xf32>
    %281 = tpu.matmul %278, %280, %cst_121 {dimension_numbers = #tpu.dot_dimension_numbers<[1], [0], [0], [1], [0, 0, 1, 1], [], []>} : vector<8x64xbf16>, vector<64x32xbf16>, vector<8x32xf32> -> vector<8x32xf32>
    %c1_122 = arith.constant 1 : index
    %c0_123 = arith.constant 0 : index
    %c0_124 = arith.constant 0 : index
    %282 = vector.load %arg15[%c1_122, %c0_123, %c0_124] : memref<2x1x32xf32, #tpu.memory_space<vmem>>, vector<1x1x32xf32>
    %283 = vector.shape_cast %282 : vector<1x1x32xf32> to vector<1x32xf32>
    %284 = vector.broadcast %283 : vector<1x32xf32> to vector<8x32xf32>
    %285 = arith.addf %281, %284 : vector<8x32xf32>
    %286 = arith.addf %285, %256 : vector<8x32xf32>
    %c1_125 = arith.constant 1 : index
    %c0_126 = arith.constant 0 : index
    %c0_127 = arith.constant 0 : index
    %287 = vector.load %arg16[%c1_125, %c0_126, %c0_127] : memref<2x1x32xf32, #tpu.memory_space<vmem>>, vector<1x1x32xf32>
    %288 = vector.shape_cast %287 : vector<1x1x32xf32> to vector<1x32xf32>
    %c1_128 = arith.constant 1 : index
    %c0_129 = arith.constant 0 : index
    %c0_130 = arith.constant 0 : index
    %289 = vector.load %arg17[%c1_128, %c0_129, %c0_130] : memref<2x1x32xf32, #tpu.memory_space<vmem>>, vector<1x1x32xf32>
    %290 = vector.shape_cast %289 : vector<1x1x32xf32> to vector<1x32xf32>
    %cst_131 = arith.constant dense<0.000000e+00> : vector<8xf32>
    %291 = vector.multi_reduction <add>, %286, %cst_131 [1] : vector<8x32xf32> to vector<8xf32>
    %292 = vector.shape_cast %291 : vector<8xf32> to vector<8x1xf32>
    %cst_132 = arith.constant 3.200000e+01 : f32
    %293 = vector.broadcast %cst_132 : f32 to vector<8x1xf32>
    %294 = arith.divf %292, %293 : vector<8x1xf32>
    %295 = vector.broadcast %294 : vector<8x1xf32> to vector<8x32xf32>
    %296 = arith.subf %286, %295 : vector<8x32xf32>
    %297 = arith.mulf %296, %296 : vector<8x32xf32>
    %cst_133 = arith.constant dense<0.000000e+00> : vector<8xf32>
    %298 = vector.multi_reduction <add>, %297, %cst_133 [1] : vector<8x32xf32> to vector<8xf32>
    %299 = vector.shape_cast %298 : vector<8xf32> to vector<8x1xf32>
    %cst_134 = arith.constant 3.200000e+01 : f32
    %300 = vector.broadcast %cst_134 : f32 to vector<8x1xf32>
    %301 = arith.divf %299, %300 : vector<8x1xf32>
    %302 = vector.broadcast %294 : vector<8x1xf32> to vector<8x32xf32>
    %303 = arith.subf %286, %302 : vector<8x32xf32>
    %cst_135 = arith.constant 1.000000e-07 : f32
    %304 = vector.broadcast %cst_135 : f32 to vector<8x1xf32>
    %305 = arith.addf %301, %304 : vector<8x1xf32>
    %306 = math.rsqrt %305 : vector<8x1xf32>
    %307 = vector.broadcast %306 : vector<8x1xf32> to vector<8x32xf32>
    %308 = arith.mulf %303, %307 : vector<8x32xf32>
    %309 = vector.broadcast %288 : vector<1x32xf32> to vector<8x32xf32>
    %310 = arith.mulf %308, %309 : vector<8x32xf32>
    %311 = vector.broadcast %290 : vector<1x32xf32> to vector<8x32xf32>
    %312 = arith.addf %310, %311 : vector<8x32xf32>
    %c0_136 = arith.constant 0 : index
    %c0_137 = arith.constant 0 : index
    %c0_138 = arith.constant 0 : index
    %313 = vector.load %arg3[%c0_136, %c0_137, %c0_138] : memref<1x8x1xf32, #tpu.memory_space<vmem>>, vector<1x8x1xf32>
    %314 = vector.shape_cast %313 : vector<1x8x1xf32> to vector<8x1xf32>
    %315 = vector.broadcast %314 : vector<8x1xf32> to vector<8x32xf32>
    %316 = arith.mulf %312, %315 : vector<8x32xf32>
    %cst_139 = arith.constant dense<0.000000e+00> : vector<32xf32>
    %317 = vector.multi_reduction <add>, %316, %cst_139 [0] : vector<8x32xf32> to vector<32xf32>
    %318 = vector.shape_cast %317 : vector<32xf32> to vector<1x32xf32>
    %cst_140 = arith.constant dense<0.000000e+00> : vector<1xf32>
    %319 = vector.multi_reduction <add>, %314, %cst_140 [0] : vector<8x1xf32> to vector<1xf32>
    %320 = vector.shape_cast %319 : vector<1xf32> to vector<1x1xf32>
    %cst_141 = arith.constant 9.99999971E-10 : f32
    %321 = vector.broadcast %cst_141 : f32 to vector<1x1xf32>
    %322 = arith.maximumf %320, %321 : vector<1x1xf32>
    %323 = vector.broadcast %322 : vector<1x1xf32> to vector<1x32xf32>
    %324 = arith.divf %318, %323 : vector<1x32xf32>
    %325 = arith.truncf %324 : vector<1x32xf32> to vector<1x32xbf16>
    %c0_142 = arith.constant 0 : index
    %c0_143 = arith.constant 0 : index
    %326 = vector.load %arg18[%c0_142, %c0_143] : memref<32x128xbf16, #tpu.memory_space<vmem>>, vector<32x128xbf16>
    %cst_144 = arith.constant dense<0.000000e+00> : vector<1x128xf32>
    %327 = tpu.matmul %325, %326, %cst_144 {dimension_numbers = #tpu.dot_dimension_numbers<[1], [0], [0], [1], [0, 0, 1, 1], [], []>} : vector<1x32xbf16>, vector<32x128xbf16>, vector<1x128xf32> -> vector<1x128xf32>
    %c0_145 = arith.constant 0 : index
    %c0_146 = arith.constant 0 : index
    %328 = vector.load %arg19[%c0_145, %c0_146] : memref<1x128xf32, #tpu.memory_space<vmem>>, vector<1x128xf32>
    %329 = arith.addf %327, %328 : vector<1x128xf32>
    %c0_147 = arith.constant 0 : index
    %c0_148 = arith.constant 0 : index
    %c0_149 = arith.constant 0 : index
    %330 = vector.load %arg20[%c0_147, %c0_148, %c0_149] : memref<1x1x128xf32, #tpu.memory_space<vmem>>, vector<1x1x128xf32>
    %331 = vector.shape_cast %330 : vector<1x1x128xf32> to vector<1x128xf32>
    %332 = vector.shape_cast %329 : vector<1x128xf32> to vector<1x1x128xf32>
    tpu.vector_store %arg20[%c0_147, %c0_148, %c0_149], %332 {strides = array<i32>} : memref<1x1x128xf32, #tpu.memory_space<vmem>>, vector<1x1x128xf32>,
    return
  }
  func.func @transform_0(%arg0: i32) -> (i32, i32, i32) {
    %c0_i32 = arith.constant 0 : i32
    %c0_i32_0 = arith.constant 0 : i32
    %c0_i32_1 = arith.constant 0 : i32
    return %arg0, %c0_i32, %c0_i32_0 : i32, i32, i32
  }
  func.func @transform_1(%arg0: i32) -> (i32, i32, i32) {
    %c0_i32 = arith.constant 0 : i32
    %c0_i32_0 = arith.constant 0 : i32
    %c0_i32_1 = arith.constant 0 : i32
    return %arg0, %c0_i32, %c0_i32_0 : i32, i32, i32
  }
  func.func @transform_2(%arg0: i32) -> (i32, i32, i32) {
    %c0_i32 = arith.constant 0 : i32
    %c0_i32_0 = arith.constant 0 : i32
    %c0_i32_1 = arith.constant 0 : i32
    return %arg0, %c0_i32, %c0_i32_0 : i32, i32, i32
  }
  func.func @transform_3(%arg0: i32) -> (i32, i32) {
    %c0_i32 = arith.constant 0 : i32
    %c0_i32_0 = arith.constant 0 : i32
    %c0_i32_1 = arith.constant 0 : i32
    return %c0_i32, %c0_i32_0 : i32, i32
  }
  func.func @transform_4(%arg0: i32) -> (i32, i32) {
    %c0_i32 = arith.constant 0 : i32
    %c0_i32_0 = arith.constant 0 : i32
    %c0_i32_1 = arith.constant 0 : i32
    return %c0_i32, %c0_i32_0 : i32, i32
  }
  func.func @transform_5(%arg0: i32) -> (i32, i32, i32) {
    %c0_i32 = arith.constant 0 : i32
    %c0_i32_0 = arith.constant 0 : i32
    %c0_i32_1 = arith.constant 0 : i32
    %c0_i32_2 = arith.constant 0 : i32
    return %c0_i32, %c0_i32_0, %c0_i32_1 : i32, i32, i32
  }
  func.func @transform_6(%arg0: i32) -> (i32, i32, i32) {
    %c0_i32 = arith.constant 0 : i32
    %c0_i32_0 = arith.constant 0 : i32
    %c0_i32_1 = arith.constant 0 : i32
    %c0_i32_2 = arith.constant 0 : i32
    return %c0_i32, %c0_i32_0, %c0_i32_1 : i32, i32, i32
  }
  func.func @transform_7(%arg0: i32) -> (i32, i32, i32) {
    %c0_i32 = arith.constant 0 : i32
    %c0_i32_0 = arith.constant 0 : i32
    %c0_i32_1 = arith.constant 0 : i32
    %c0_i32_2 = arith.constant 0 : i32
    return %c0_i32, %c0_i32_0, %c0_i32_1 : i32, i32, i32
  }
  func.func @transform_8(%arg0: i32) -> (i32, i32, i32) {
    %c0_i32 = arith.constant 0 : i32
    %c0_i32_0 = arith.constant 0 : i32
    %c0_i32_1 = arith.constant 0 : i32
    %c0_i32_2 = arith.constant 0 : i32
    return %c0_i32, %c0_i32_0, %c0_i32_1 : i32, i32, i32
  }
  func.func @transform_9(%arg0: i32) -> (i32, i32, i32) {
    %c0_i32 = arith.constant 0 : i32
    %c0_i32_0 = arith.constant 0 : i32
    %c0_i32_1 = arith.constant 0 : i32
    %c0_i32_2 = arith.constant 0 : i32
    return %c0_i32, %c0_i32_0, %c0_i32_1 : i32, i32, i32
  }
  func.func @transform_10(%arg0: i32) -> (i32, i32, i32) {
    %c0_i32 = arith.constant 0 : i32
    %c0_i32_0 = arith.constant 0 : i32
    %c0_i32_1 = arith.constant 0 : i32
    %c0_i32_2 = arith.constant 0 : i32
    return %c0_i32, %c0_i32_0, %c0_i32_1 : i32, i32, i32
  }
  func.func @transform_11(%arg0: i32) -> (i32, i32, i32) {
    %c0_i32 = arith.constant 0 : i32
    %c0_i32_0 = arith.constant 0 : i32
    %c0_i32_1 = arith.constant 0 : i32
    %c0_i32_2 = arith.constant 0 : i32
    return %c0_i32, %c0_i32_0, %c0_i32_1 : i32, i32, i32
  }
  func.func @transform_12(%arg0: i32) -> (i32, i32, i32) {
    %c0_i32 = arith.constant 0 : i32
    %c0_i32_0 = arith.constant 0 : i32
    %c0_i32_1 = arith.constant 0 : i32
    %c0_i32_2 = arith.constant 0 : i32
    return %c0_i32, %c0_i32_0, %c0_i32_1 : i32, i32, i32
  }
  func.func @transform_13(%arg0: i32) -> (i32, i32, i32) {
    %c0_i32 = arith.constant 0 : i32
    %c0_i32_0 = arith.constant 0 : i32
    %c0_i32_1 = arith.constant 0 : i32
    %c0_i32_2 = arith.constant 0 : i32
    return %c0_i32, %c0_i32_0, %c0_i32_1 : i32, i32, i32
  }
  func.func @transform_14(%arg0: i32) -> (i32, i32, i32) {
    %c0_i32 = arith.constant 0 : i32
    %c0_i32_0 = arith.constant 0 : i32
    %c0_i32_1 = arith.constant 0 : i32
    %c0_i32_2 = arith.constant 0 : i32
    return %c0_i32, %c0_i32_0, %c0_i32_1 : i32, i32, i32
  }
  func.func @transform_15(%arg0: i32) -> (i32, i32, i32) {
    %c0_i32 = arith.constant 0 : i32
    %c0_i32_0 = arith.constant 0 : i32
    %c0_i32_1 = arith.constant 0 : i32
    %c0_i32_2 = arith.constant 0 : i32
    return %c0_i32, %c0_i32_0, %c0_i32_1 : i32, i32, i32
  }
  func.func @transform_16(%arg0: i32) -> (i32, i32, i32) {
    %c0_i32 = arith.constant 0 : i32
    %c0_i32_0 = arith.constant 0 : i32
    %c0_i32_1 = arith.constant 0 : i32
    %c0_i32_2 = arith.constant 0 : i32
    return %c0_i32, %c0_i32_0, %c0_i32_1 : i32, i32, i32
  }
  func.func @transform_17(%arg0: i32) -> (i32, i32) {
    %c0_i32 = arith.constant 0 : i32
    %c0_i32_0 = arith.constant 0 : i32
    %c0_i32_1 = arith.constant 0 : i32
    return %c0_i32, %c0_i32_0 : i32, i32
  }
  func.func @transform_18(%arg0: i32) -> (i32, i32) {
    %c0_i32 = arith.constant 0 : i32
    %c0_i32_0 = arith.constant 0 : i32
    %c0_i32_1 = arith.constant 0 : i32
    return %c0_i32, %c0_i32_0 : i32, i32
  }
  func.func @transform_19(%arg0: i32) -> (i32, i32, i32) {
    %c0_i32 = arith.constant 0 : i32
    %c0_i32_0 = arith.constant 0 : i32
    %c0_i32_1 = arith.constant 0 : i32
    return %arg0, %c0_i32, %c0_i32_0 : i32, i32, i32
  }
}

</mosaic_0001>

<llo_original>
// kernel: deberta_for_regression.1
$region0: #{deberta_for_regression.1}
  #allocation0 [shape = 'u32[]', space=smem, size = 0x4, offset = 0x4, fixed_abs, tag = 'smem constant byte address 0x4 - core index']
  #allocation1 [shape = 'u32[144,128]{1,0:T(1,128)}', space=vmem, size = 0x12000, scoped, tag = 'internal scratch']
  %s0 = inlined_call_operand.vmem [shape: f32[2,8,32], index: 0, kind: input, shape index: {}]
  %s1 = inlined_call_operand.vmem [shape: f32[2,1,128], index: 1, kind: input, shape index: {}]
  %s2 = inlined_call_operand.vmem [shape: f32[2,8,1], index: 2, kind: input, shape index: {}]
  %s3 = inlined_call_operand.vmem [shape: f32[1,32], index: 3, kind: input, shape index: {}]
  %s4 = inlined_call_operand.vmem [shape: f32[1,32], index: 4, kind: input, shape index: {}]
  %s5 = inlined_call_operand.vmem [shape: bf16[2,32,768], index: 5, kind: input, shape index: {}]
  %s6 = inlined_call_operand.vmem [shape: f32[2,1,768], index: 6, kind: input, shape index: {}]
  %s7 = inlined_call_operand.vmem [shape: bf16[2,256,32], index: 7, kind: input, shape index: {}]
  %s8 = inlined_call_operand.vmem [shape: f32[2,1,32], index: 8, kind: input, shape index: {}]
  %s9 = inlined_call_operand.vmem [shape: f32[2,1,32], index: 9, kind: input, shape index: {}]
  %s10 = inlined_call_operand.vmem [shape: f32[2,1,32], index: 10, kind: input, shape index: {}]
  %s11 = inlined_call_operand.vmem [shape: bf16[2,32,64], index: 11, kind: input, shape index: {}]
  %s12 = inlined_call_operand.vmem [shape: f32[2,1,64], index: 12, kind: input, shape index: {}]
  %s13 = inlined_call_operand.vmem [shape: bf16[2,64,32], index: 13, kind: input, shape index: {}]
  %s14 = inlined_call_operand.vmem [shape: f32[2,1,32], index: 14, kind: input, shape index: {}]
  %s15 = inlined_call_operand.vmem [shape: f32[2,1,32], index: 15, kind: input, shape index: {}]
  %s16 = inlined_call_operand.vmem [shape: f32[2,1,32], index: 16, kind: input, shape index: {}]
  %s17 = inlined_call_operand.vmem [shape: bf16[32,128], index: 17, kind: input, shape index: {}]
  %s18 = inlined_call_operand.vmem [shape: f32[1,128], index: 18, kind: input, shape index: {}]
  %s19 = inlined_call_operand.vmem [shape: f32[2,1,128], index: 19, kind: output, shape index: {}]
  %s20 = sld [smem:[#allocation0]]
  $region109: #{deberta_for_regression.1} parent=0
    _
  %s22 = ssub.s32 1, %s20
  %s23 = scalar_select 0, %s22, %s20
  loop: start=0, step=1, limit=4
  $region2: #{deberta_for_regression.1} parent=0 // loop_pre_header
    _
  $region3: #{deberta_for_regression.1} parent=0 // loop_header
    %s25 = sphi 0, %s29
    %p26 = scmp.ge.s32.totalorder %s25, 4
    %s35 = sphi 0, %s37
    %s38 = sphi 0, %s35
    %s39 = sphi 0, %s38
    %s55 = sphi 0, %s39
    %s61 = sphi 0, %s63
    %s64 = sphi 0, %s61
    %s65 = sphi 0, %s64
    %s81 = sphi 0, %s65
    %s87 = sphi 0, %s89
    %s90 = sphi 0, %s87
    %s91 = sphi 0, %s90
    %s107 = sphi 0, %s91
    %s111 = sphi 0, %s111
    %s113 = sphi 0, %s111
    %s114 = sphi 0, %s113
    %s128 = sphi 0, %s114
    %s132 = sphi 0, %s132
    %s134 = sphi 0, %s132
    %s135 = sphi 0, %s134
    %s149 = sphi 0, %s135
    %s153 = sphi 0, %s153
    %s155 = sphi 0, %s153
    %s156 = sphi 0, %s155
    %s170 = sphi 0, %s156
    %s174 = sphi 0, %s174
    %s176 = sphi 0, %s174
    %s177 = sphi 0, %s176
    %s191 = sphi 0, %s177
    %s195 = sphi 0, %s195
    %s197 = sphi 0, %s195
    %s198 = sphi 0, %s197
    %s212 = sphi 0, %s198
    %s216 = sphi 0, %s216
    %s218 = sphi 0, %s216
    %s219 = sphi 0, %s218
    %s233 = sphi 0, %s219
    %s237 = sphi 0, %s237
    %s239 = sphi 0, %s237
    %s240 = sphi 0, %s239
    %s254 = sphi 0, %s240
    %s258 = sphi 0, %s258
    %s260 = sphi 0, %s258
    %s261 = sphi 0, %s260
    %s275 = sphi 0, %s261
    %s279 = sphi 0, %s279
    %s281 = sphi 0, %s279
    %s282 = sphi 0, %s281
    %s296 = sphi 0, %s282
    %s300 = sphi 0, %s300
    %s302 = sphi 0, %s300
    %s303 = sphi 0, %s302
    %s317 = sphi 0, %s303
    %s321 = sphi 0, %s321
    %s323 = sphi 0, %s321
    %s324 = sphi 0, %s323
    %s338 = sphi 0, %s324
    %s342 = sphi 0, %s342
    %s344 = sphi 0, %s342
    %s345 = sphi 0, %s344
    %s359 = sphi 0, %s345
    %s363 = sphi 0, %s363
    %s365 = sphi 0, %s363
    %s366 = sphi 0, %s365
    %s380 = sphi 0, %s366
    %s384 = sphi 0, %s384
    %s386 = sphi 0, %s384
    %s387 = sphi 0, %s386
    %s401 = sphi 0, %s387
    %s405 = sphi 0, %s405
    %s407 = sphi 0, %s405
    %s408 = sphi 0, %s407
    %s422 = sphi 0, %s408
    %s426 = sphi 0, %s426
    %s428 = sphi 0, %s426
    %s429 = sphi 0, %s428
    %s443 = sphi 0, %s429
    %s449 = sphi 0, %s451
    %s452 = sphi 0, %s449
    %s453 = sphi 0, %s452
    %s469 = sphi 0, %s453
  $region4: #{deberta_for_regression.1} parent=0 // loop_header_branch
    %28 = sbr.rel (%p26) target = $region8
  $region5: #{deberta_for_regression.1} parent=0 // loop_body
    %s30 = ssub.s32 %s25, 1
    %s31 = ssub.s32 %s25, 2
    %s32 = sadd.s32 %s25, 1
    %s33 = ssub.s32 %s25, %s32
    %p34 = scmp.eq.s32.totalorder %s33, 0
    %s36 = sadd.s32 %s35, 1
    %s37 = scalar_select %p34, %s35, %s36
    %p40 = pneg %p34
    %p41 = scmp.eq.s32.totalorder %s25, 1
    %p42 = por %p40, %p41
    %p43 = scmp.ne.s32.totalorder %s35, %s38
    %p44 = scmp.eq.s32.totalorder %s25, 0
    %p45 = por %p43, %p44
    %p46 = scmp.ne.s32.totalorder %s35, %s38
    %p47 = scmp.eq.s32.totalorder %s30, 1
    %p48 = por %p46, %p47
    %p49 = scmp.ne.s32.totalorder %s38, %s39
    %p50 = scmp.eq.s32.totalorder %s30, 0
    %p51 = por %p49, %p50
    %p52 = scmp.ne.s32.totalorder %s38, %s39
    %p53 = scmp.eq.s32.totalorder %s31, 1
    %p54 = por %p52, %p53
    %p56 = scmp.ne.s32.totalorder %s39, %s55
    %p57 = scmp.eq.s32.totalorder %s31, 0
    %p58 = por %p56, %p57
    %s59 = ssub.s32 %s25, %s32
    %p60 = scmp.eq.s32.totalorder %s59, 0
    %s62 = sadd.s32 %s61, 1
    %s63 = scalar_select %p60, %s61, %s62
    %p66 = pneg %p60
    %p67 = scmp.eq.s32.totalorder %s25, 1
    %p68 = por %p66, %p67
    %p69 = scmp.ne.s32.totalorder %s61, %s64
    %p70 = scmp.eq.s32.totalorder %s25, 0
    %p71 = por %p69, %p70
    %p72 = scmp.ne.s32.totalorder %s61, %s64
    %p73 = scmp.eq.s32.totalorder %s30, 1
    %p74 = por %p72, %p73
    %p75 = scmp.ne.s32.totalorder %s64, %s65
    %p76 = scmp.eq.s32.totalorder %s30, 0
    %p77 = por %p75, %p76
    %p78 = scmp.ne.s32.totalorder %s64, %s65
    %p79 = scmp.eq.s32.totalorder %s31, 1
    %p80 = por %p78, %p79
    %p82 = scmp.ne.s32.totalorder %s65, %s81
    %p83 = scmp.eq.s32.totalorder %s31, 0
    %p84 = por %p82, %p83
    %s85 = ssub.s32 %s25, %s32
    %p86 = scmp.eq.s32.totalorder %s85, 0
    %s88 = sadd.s32 %s87, 1
    %s89 = scalar_select %p86, %s87, %s88
    %p92 = pneg %p86
    %p93 = scmp.eq.s32.totalorder %s25, 1
    %p94 = por %p92, %p93
    %p95 = scmp.ne.s32.totalorder %s87, %s90
    %p96 = scmp.eq.s32.totalorder %s25, 0
    %p97 = por %p95, %p96
    %p98 = scmp.ne.s32.totalorder %s87, %s90
    %p99 = scmp.eq.s32.totalorder %s30, 1
    %p100 = por %p98, %p99
    %p101 = scmp.ne.s32.totalorder %s90, %s91
    %p102 = scmp.eq.s32.totalorder %s30, 0
    %p103 = por %p101, %p102
    %p104 = scmp.ne.s32.totalorder %s90, %s91
    %p105 = scmp.eq.s32.totalorder %s31, 1
    %p106 = por %p104, %p105
    %p108 = scmp.ne.s32.totalorder %s91, %s107
    %p109 = scmp.eq.s32.totalorder %s31, 0
    %p110 = por %p108, %p109
    %s112 = sadd.s32 %s111, 1
    %p115 = scmp.eq.s32.totalorder %s25, 1
    %p116 = scmp.ne.s32.totalorder %s111, %s113
    %p117 = scmp.eq.s32.totalorder %s25, 0
    %p118 = por %p116, %p117
    %p119 = scmp.ne.s32.totalorder %s111, %s113
    %p120 = scmp.eq.s32.totalorder %s30, 1
    %p121 = por %p119, %p120
    %p122 = scmp.ne.s32.totalorder %s113, %s114
    %p123 = scmp.eq.s32.totalorder %s30, 0
    %p124 = por %p122, %p123
    %p125 = scmp.ne.s32.totalorder %s113, %s114
    %p126 = scmp.eq.s32.totalorder %s31, 1
    %p127 = por %p125, %p126
    %p129 = scmp.ne.s32.totalorder %s114, %s128
    %p130 = scmp.eq.s32.totalorder %s31, 0
    %p131 = por %p129, %p130
    %s133 = sadd.s32 %s132, 1
    %p136 = scmp.eq.s32.totalorder %s25, 1
    %p137 = scmp.ne.s32.totalorder %s132, %s134
    %p138 = scmp.eq.s32.totalorder %s25, 0
    %p139 = por %p137, %p138
    %p140 = scmp.ne.s32.totalorder %s132, %s134
    %p141 = scmp.eq.s32.totalorder %s30, 1
    %p142 = por %p140, %p141
    %p143 = scmp.ne.s32.totalorder %s134, %s135
    %p144 = scmp.eq.s32.totalorder %s30, 0
    %p145 = por %p143, %p144
    %p146 = scmp.ne.s32.totalorder %s134, %s135
    %p147 = scmp.eq.s32.totalorder %s31, 1
    %p148 = por %p146, %p147
    %p150 = scmp.ne.s32.totalorder %s135, %s149
    %p151 = scmp.eq.s32.totalorder %s31, 0
    %p152 = por %p150, %p151
    %s154 = sadd.s32 %s153, 1
    %p157 = scmp.eq.s32.totalorder %s25, 1
    %p158 = scmp.ne.s32.totalorder %s153, %s155
    %p159 = scmp.eq.s32.totalorder %s25, 0
    %p160 = por %p158, %p159
    %p161 = scmp.ne.s32.totalorder %s153, %s155
    %p162 = scmp.eq.s32.totalorder %s30, 1
    %p163 = por %p161, %p162
    %p164 = scmp.ne.s32.totalorder %s155, %s156
    %p165 = scmp.eq.s32.totalorder %s30, 0
    %p166 = por %p164, %p165
    %p167 = scmp.ne.s32.totalorder %s155, %s156
    %p168 = scmp.eq.s32.totalorder %s31, 1
    %p169 = por %p167, %p168
    %p171 = scmp.ne.s32.totalorder %s156, %s170
    %p172 = scmp.eq.s32.totalorder %s31, 0
    %p173 = por %p171, %p172
    %s175 = sadd.s32 %s174, 1
    %p178 = scmp.eq.s32.totalorder %s25, 1
    %p179 = scmp.ne.s32.totalorder %s174, %s176
    %p180 = scmp.eq.s32.totalorder %s25, 0
    %p181 = por %p179, %p180
    %p182 = scmp.ne.s32.totalorder %s174, %s176
    %p183 = scmp.eq.s32.totalorder %s30, 1
    %p184 = por %p182, %p183
    %p185 = scmp.ne.s32.totalorder %s176, %s177
    %p186 = scmp.eq.s32.totalorder %s30, 0
    %p187 = por %p185, %p186
    %p188 = scmp.ne.s32.totalorder %s176, %s177
    %p189 = scmp.eq.s32.totalorder %s31, 1
    %p190 = por %p188, %p189
    %p192 = scmp.ne.s32.totalorder %s177, %s191
    %p193 = scmp.eq.s32.totalorder %s31, 0
    %p194 = por %p192, %p193
    %s196 = sadd.s32 %s195, 1
    %p199 = scmp.eq.s32.totalorder %s25, 1
    %p200 = scmp.ne.s32.totalorder %s195, %s197
    %p201 = scmp.eq.s32.totalorder %s25, 0
    %p202 = por %p200, %p201
    %p203 = scmp.ne.s32.totalorder %s195, %s197
    %p204 = scmp.eq.s32.totalorder %s30, 1
    %p205 = por %p203, %p204
    %p206 = scmp.ne.s32.totalorder %s197, %s198
    %p207 = scmp.eq.s32.totalorder %s30, 0
    %p208 = por %p206, %p207
    %p209 = scmp.ne.s32.totalorder %s197, %s198
    %p210 = scmp.eq.s32.totalorder %s31, 1
    %p211 = por %p209, %p210
    %p213 = scmp.ne.s32.totalorder %s198, %s212
    %p214 = scmp.eq.s32.totalorder %s31, 0
    %p215 = por %p213, %p214
    %s217 = sadd.s32 %s216, 1
    %p220 = scmp.eq.s32.totalorder %s25, 1
    %p221 = scmp.ne.s32.totalorder %s216, %s218
    %p222 = scmp.eq.s32.totalorder %s25, 0
    %p223 = por %p221, %p222
    %p224 = scmp.ne.s32.totalorder %s216, %s218
    %p225 = scmp.eq.s32.totalorder %s30, 1
    %p226 = por %p224, %p225
    %p227 = scmp.ne.s32.totalorder %s218, %s219
    %p228 = scmp.eq.s32.totalorder %s30, 0
    %p229 = por %p227, %p228
    %p230 = scmp.ne.s32.totalorder %s218, %s219
    %p231 = scmp.eq.s32.totalorder %s31, 1
    %p232 = por %p230, %p231
    %p234 = scmp.ne.s32.totalorder %s219, %s233
    %p235 = scmp.eq.s32.totalorder %s31, 0
    %p236 = por %p234, %p235
    %s238 = sadd.s32 %s237, 1
    %p241 = scmp.eq.s32.totalorder %s25, 1
    %p242 = scmp.ne.s32.totalorder %s237, %s239
    %p243 = scmp.eq.s32.totalorder %s25, 0
    %p244 = por %p242, %p243
    %p245 = scmp.ne.s32.totalorder %s237, %s239
    %p246 = scmp.eq.s32.totalorder %s30, 1
    %p247 = por %p245, %p246
    %p248 = scmp.ne.s32.totalorder %s239, %s240
    %p249 = scmp.eq.s32.totalorder %s30, 0
    %p250 = por %p248, %p249
    %p251 = scmp.ne.s32.totalorder %s239, %s240
    %p252 = scmp.eq.s32.totalorder %s31, 1
    %p253 = por %p251, %p252
    %p255 = scmp.ne.s32.totalorder %s240, %s254
    %p256 = scmp.eq.s32.totalorder %s31, 0
    %p257 = por %p255, %p256
    %s259 = sadd.s32 %s258, 1
    %p262 = scmp.eq.s32.totalorder %s25, 1
    %p263 = scmp.ne.s32.totalorder %s258, %s260
    %p264 = scmp.eq.s32.totalorder %s25, 0
    %p265 = por %p263, %p264
    %p266 = scmp.ne.s32.totalorder %s258, %s260
    %p267 = scmp.eq.s32.totalorder %s30, 1
    %p268 = por %p266, %p267
    %p269 = scmp.ne.s32.totalorder %s260, %s261
    %p270 = scmp.eq.s32.totalorder %s30, 0
    %p271 = por %p269, %p270
    %p272 = scmp.ne.s32.totalorder %s260, %s261
    %p273 = scmp.eq.s32.totalorder %s31, 1
    %p274 = por %p272, %p273
    %p276 = scmp.ne.s32.totalorder %s261, %s275
    %p277 = scmp.eq.s32.totalorder %s31, 0
    %p278 = por %p276, %p277
    %s280 = sadd.s32 %s279, 1
    %p283 = scmp.eq.s32.totalorder %s25, 1
    %p284 = scmp.ne.s32.totalorder %s279, %s281
    %p285 = scmp.eq.s32.totalorder %s25, 0
    %p286 = por %p284, %p285
    %p287 = scmp.ne.s32.totalorder %s279, %s281
    %p288 = scmp.eq.s32.totalorder %s30, 1
    %p289 = por %p287, %p288
    %p290 = scmp.ne.s32.totalorder %s281, %s282
    %p291 = scmp.eq.s32.totalorder %s30, 0
    %p292 = por %p290, %p291
    %p293 = scmp.ne.s32.totalorder %s281, %s282
    %p294 = scmp.eq.s32.totalorder %s31, 1
    %p295 = por %p293, %p294
    %p297 = scmp.ne.s32.totalorder %s282, %s296
    %p298 = scmp.eq.s32.totalorder %s31, 0
    %p299 = por %p297, %p298
    %s301 = sadd.s32 %s300, 1
    %p304 = scmp.eq.s32.totalorder %s25, 1
    %p305 = scmp.ne.s32.totalorder %s300, %s302
    %p306 = scmp.eq.s32.totalorder %s25, 0
    %p307 = por %p305, %p306
    %p308 = scmp.ne.s32.totalorder %s300, %s302
    %p309 = scmp.eq.s32.totalorder %s30, 1
    %p310 = por %p308, %p309
    %p311 = scmp.ne.s32.totalorder %s302, %s303
    %p312 = scmp.eq.s32.totalorder %s30, 0
    %p313 = por %p311, %p312
    %p314 = scmp.ne.s32.totalorder %s302, %s303
    %p315 = scmp.eq.s32.totalorder %s31, 1
    %p316 = por %p314, %p315
    %p318 = scmp.ne.s32.totalorder %s303, %s317
    %p319 = scmp.eq.s32.totalorder %s31, 0
    %p320 = por %p318, %p319
    %s322 = sadd.s32 %s321, 1
    %p325 = scmp.eq.s32.totalorder %s25, 1
    %p326 = scmp.ne.s32.totalorder %s321, %s323
    %p327 = scmp.eq.s32.totalorder %s25, 0
    %p328 = por %p326, %p327
    %p329 = scmp.ne.s32.totalorder %s321, %s323
    %p330 = scmp.eq.s32.totalorder %s30, 1
    %p331 = por %p329, %p330
    %p332 = scmp.ne.s32.totalorder %s323, %s324
    %p333 = scmp.eq.s32.totalorder %s30, 0
    %p334 = por %p332, %p333
    %p335 = scmp.ne.s32.totalorder %s323, %s324
    %p336 = scmp.eq.s32.totalorder %s31, 1
    %p337 = por %p335, %p336
    %p339 = scmp.ne.s32.totalorder %s324, %s338
    %p340 = scmp.eq.s32.totalorder %s31, 0
    %p341 = por %p339, %p340
    %s343 = sadd.s32 %s342, 1
    %p346 = scmp.eq.s32.totalorder %s25, 1
    %p347 = scmp.ne.s32.totalorder %s342, %s344
    %p348 = scmp.eq.s32.totalorder %s25, 0
    %p349 = por %p347, %p348
    %p350 = scmp.ne.s32.totalorder %s342, %s344
    %p351 = scmp.eq.s32.totalorder %s30, 1
    %p352 = por %p350, %p351
    %p353 = scmp.ne.s32.totalorder %s344, %s345
    %p354 = scmp.eq.s32.totalorder %s30, 0
    %p355 = por %p353, %p354
    %p356 = scmp.ne.s32.totalorder %s344, %s345
    %p357 = scmp.eq.s32.totalorder %s31, 1
    %p358 = por %p356, %p357
    %p360 = scmp.ne.s32.totalorder %s345, %s359
    %p361 = scmp.eq.s32.totalorder %s31, 0
    %p362 = por %p360, %p361
    %s364 = sadd.s32 %s363, 1
    %p367 = scmp.eq.s32.totalorder %s25, 1
    %p368 = scmp.ne.s32.totalorder %s363, %s365
    %p369 = scmp.eq.s32.totalorder %s25, 0
    %p370 = por %p368, %p369
    %p371 = scmp.ne.s32.totalorder %s363, %s365
    %p372 = scmp.eq.s32.totalorder %s30, 1
    %p373 = por %p371, %p372
    %p374 = scmp.ne.s32.totalorder %s365, %s366
    %p375 = scmp.eq.s32.totalorder %s30, 0
    %p376 = por %p374, %p375
    %p377 = scmp.ne.s32.totalorder %s365, %s366
    %p378 = scmp.eq.s32.totalorder %s31, 1
    %p379 = por %p377, %p378
    %p381 = scmp.ne.s32.totalorder %s366, %s380
    %p382 = scmp.eq.s32.totalorder %s31, 0
    %p383 = por %p381, %p382
    %s385 = sadd.s32 %s384, 1
    %p388 = scmp.eq.s32.totalorder %s25, 1
    %p389 = scmp.ne.s32.totalorder %s384, %s386
    %p390 = scmp.eq.s32.totalorder %s25, 0
    %p391 = por %p389, %p390
    %p392 = scmp.ne.s32.totalorder %s384, %s386
    %p393 = scmp.eq.s32.totalorder %s30, 1
    %p394 = por %p392, %p393
    %p395 = scmp.ne.s32.totalorder %s386, %s387
    %p396 = scmp.eq.s32.totalorder %s30, 0
    %p397 = por %p395, %p396
    %p398 = scmp.ne.s32.totalorder %s386, %s387
    %p399 = scmp.eq.s32.totalorder %s31, 1
    %p400 = por %p398, %p399
    %p402 = scmp.ne.s32.totalorder %s387, %s401
    %p403 = scmp.eq.s32.totalorder %s31, 0
    %p404 = por %p402, %p403
    %s406 = sadd.s32 %s405, 1
    %p409 = scmp.eq.s32.totalorder %s25, 1
    %p410 = scmp.ne.s32.totalorder %s405, %s407
    %p411 = scmp.eq.s32.totalorder %s25, 0
    %p412 = por %p410, %p411
    %p413 = scmp.ne.s32.totalorder %s405, %s407
    %p414 = scmp.eq.s32.totalorder %s30, 1
    %p415 = por %p413, %p414
    %p416 = scmp.ne.s32.totalorder %s407, %s408
    %p417 = scmp.eq.s32.totalorder %s30, 0
    %p418 = por %p416, %p417
    %p419 = scmp.ne.s32.totalorder %s407, %s408
    %p420 = scmp.eq.s32.totalorder %s31, 1
    %p421 = por %p419, %p420
    %p423 = scmp.ne.s32.totalorder %s408, %s422
    %p424 = scmp.eq.s32.totalorder %s31, 0
    %p425 = por %p423, %p424
    %s427 = sadd.s32 %s426, 1
    %p430 = scmp.eq.s32.totalorder %s25, 1
    %p431 = scmp.ne.s32.totalorder %s426, %s428
    %p432 = scmp.eq.s32.totalorder %s25, 0
    %p433 = por %p431, %p432
    %p434 = scmp.ne.s32.totalorder %s426, %s428
    %p435 = scmp.eq.s32.totalorder %s30, 1
    %p436 = por %p434, %p435
    %p437 = scmp.ne.s32.totalorder %s428, %s429
    %p438 = scmp.eq.s32.totalorder %s30, 0
    %p439 = por %p437, %p438
    %p440 = scmp.ne.s32.totalorder %s428, %s429
    %p441 = scmp.eq.s32.totalorder %s31, 1
    %p442 = por %p440, %p441
    %p444 = scmp.ne.s32.totalorder %s429, %s443
    %p445 = scmp.eq.s32.totalorder %s31, 0
    %p446 = por %p444, %p445
    %s447 = ssub.s32 %s25, %s32
    %p448 = scmp.eq.s32.totalorder %s447, 0
    %s450 = sadd.s32 %s449, 1
    %s451 = scalar_select %p448, %s449, %s450
    %p454 = pneg %p448
    %p455 = scmp.eq.s32.totalorder %s25, 1
    %p456 = por %p454, %p455
    %p457 = scmp.ne.s32.totalorder %s449, %s452
    %p458 = scmp.eq.s32.totalorder %s25, 0
    %p459 = por %p457, %p458
    %p460 = scmp.ne.s32.totalorder %s449, %s452
    %p461 = scmp.eq.s32.totalorder %s30, 1
    %p462 = por %p460, %p461
    %p463 = scmp.ne.s32.totalorder %s452, %s453
    %p464 = scmp.eq.s32.totalorder %s30, 0
    %p465 = por %p463, %p464
    %p466 = scmp.ne.s32.totalorder %s452, %s453
    %p467 = scmp.eq.s32.totalorder %s31, 1
    %p468 = por %p466, %p467
    %p470 = scmp.ne.s32.totalorder %s453, %s469
    %p471 = scmp.eq.s32.totalorder %s31, 0
    %p472 = por %p470, %p471
    %p473 = scmp.le.s32.totalorder 1, %s25
    %p474 = scmp.lt.s32.totalorder %s25, 3
    %p475 = pnand %p473, %p474
    %p476 = pneg %p475
    // Predicated region
    $region9: #{deberta_for_regression.1} parent=5 // pred_check
      _
    $region10: #{deberta_for_regression.1} parent=5 // pred_check_branch
      %478 = sbr.rel (%p475) target = $region12
    $region11: #{deberta_for_regression.1} parent=5 // pred_region
      %s479 = ssub.s32 %s25, 1
      // Predicated region
      $region13: #{deberta_for_regression.1} parent=11 // pred_check
        %p480 = pneg %p124
      $region14: #{deberta_for_regression.1} parent=11 // pred_check_branch
        %482 = sbr.rel (%p480) target = $region16
      $region15: #{deberta_for_regression.1} parent=11 // pred_region
        _
      $region16: #{deberta_for_regression.1} parent=11 // pred_fallthru
        _
      // Predicated region
      $region17: #{deberta_for_regression.1} parent=11 // pred_check
        %p483 = pneg %p145
      $region18: #{deberta_for_regression.1} parent=11 // pred_check_branch
        %485 = sbr.rel (%p483) target = $region20
      $region19: #{deberta_for_regression.1} parent=11 // pred_region
        _
      $region20: #{deberta_for_regression.1} parent=11 // pred_fallthru
        _
      // Predicated region
      $region21: #{deberta_for_regression.1} parent=11 // pred_check
        %p486 = pneg %p166
      $region22: #{deberta_for_regression.1} parent=11 // pred_check_branch
        %488 = sbr.rel (%p486) target = $region24
      $region23: #{deberta_for_regression.1} parent=11 // pred_region
        _
      $region24: #{deberta_for_regression.1} parent=11 // pred_fallthru
        _
      // Predicated region
      $region25: #{deberta_for_regression.1} parent=11 // pred_check
        %p489 = pneg %p187
      $region26: #{deberta_for_regression.1} parent=11 // pred_check_branch
        %491 = sbr.rel (%p489) target = $region28
      $region27: #{deberta_for_regression.1} parent=11 // pred_region
        _
      $region28: #{deberta_for_regression.1} parent=11 // pred_fallthru
        _
      // Predicated region
      $region29: #{deberta_for_regression.1} parent=11 // pred_check
        %p492 = pneg %p208
      $region30: #{deberta_for_regression.1} parent=11 // pred_check_branch
        %494 = sbr.rel (%p492) target = $region32
      $region31: #{deberta_for_regression.1} parent=11 // pred_region
        _
      $region32: #{deberta_for_regression.1} parent=11 // pred_fallthru
        _
      // Predicated region
      $region33: #{deberta_for_regression.1} parent=11 // pred_check
        %p495 = pneg %p229
      $region34: #{deberta_for_regression.1} parent=11 // pred_check_branch
        %497 = sbr.rel (%p495) target = $region36
      $region35: #{deberta_for_regression.1} parent=11 // pred_region
        _
      $region36: #{deberta_for_regression.1} parent=11 // pred_fallthru
        _
      // Predicated region
      $region37: #{deberta_for_regression.1} parent=11 // pred_check
        %p498 = pneg %p250
      $region38: #{deberta_for_regression.1} parent=11 // pred_check_branch
        %500 = sbr.rel (%p498) target = $region40
      $region39: #{deberta_for_regression.1} parent=11 // pred_region
        _
      $region40: #{deberta_for_regression.1} parent=11 // pred_fallthru
        _
      // Predicated region
      $region41: #{deberta_for_regression.1} parent=11 // pred_check
        %p501 = pneg %p271
      $region42: #{deberta_for_regression.1} parent=11 // pred_check_branch
        %503 = sbr.rel (%p501) target = $region44
      $region43: #{deberta_for_regression.1} parent=11 // pred_region
        _
      $region44: #{deberta_for_regression.1} parent=11 // pred_fallthru
        _
      // Predicated region
      $region45: #{deberta_for_regression.1} parent=11 // pred_check
        %p504 = pneg %p292
      $region46: #{deberta_for_regression.1} parent=11 // pred_check_branch
        %506 = sbr.rel (%p504) target = $region48
      $region47: #{deberta_for_regression.1} parent=11 // pred_region
        _
      $region48: #{deberta_for_regression.1} parent=11 // pred_fallthru
        _
      // Predicated region
      $region49: #{deberta_for_regression.1} parent=11 // pred_check
        %p507 = pneg %p313
      $region50: #{deberta_for_regression.1} parent=11 // pred_check_branch
        %509 = sbr.rel (%p507) target = $region52
      $region51: #{deberta_for_regression.1} parent=11 // pred_region
        _
      $region52: #{deberta_for_regression.1} parent=11 // pred_fallthru
        _
      // Predicated region
      $region53: #{deberta_for_regression.1} parent=11 // pred_check
        %p510 = pneg %p334
      $region54: #{deberta_for_regression.1} parent=11 // pred_check_branch
        %512 = sbr.rel (%p510) target = $region56
      $region55: #{deberta_for_regression.1} parent=11 // pred_region
        _
      $region56: #{deberta_for_regression.1} parent=11 // pred_fallthru
        _
      // Predicated region
      $region57: #{deberta_for_regression.1} parent=11 // pred_check
        %p513 = pneg %p355
      $region58: #{deberta_for_regression.1} parent=11 // pred_check_branch
        %515 = sbr.rel (%p513) target = $region60
      $region59: #{deberta_for_regression.1} parent=11 // pred_region
        _
      $region60: #{deberta_for_regression.1} parent=11 // pred_fallthru
        _
      // Predicated region
      $region61: #{deberta_for_regression.1} parent=11 // pred_check
        %p516 = pneg %p376
      $region62: #{deberta_for_regression.1} parent=11 // pred_check_branch
        %518 = sbr.rel (%p516) target = $region64
      $region63: #{deberta_for_regression.1} parent=11 // pred_region
        _
      $region64: #{deberta_for_regression.1} parent=11 // pred_fallthru
        _
      // Predicated region
      $region65: #{deberta_for_regression.1} parent=11 // pred_check
        %p519 = pneg %p397
      $region66: #{deberta_for_regression.1} parent=11 // pred_check_branch
        %521 = sbr.rel (%p519) target = $region68
      $region67: #{deberta_for_regression.1} parent=11 // pred_region
        _
      $region68: #{deberta_for_regression.1} parent=11 // pred_fallthru
        _
      // Predicated region
      $region69: #{deberta_for_regression.1} parent=11 // pred_check
        %p522 = pneg %p418
      $region70: #{deberta_for_regression.1} parent=11 // pred_check_branch
        %524 = sbr.rel (%p522) target = $region72
      $region71: #{deberta_for_regression.1} parent=11 // pred_region
        _
      $region72: #{deberta_for_regression.1} parent=11 // pred_fallthru
        _
      // Predicated region
      $region73: #{deberta_for_regression.1} parent=11 // pred_check
        %p525 = pneg %p439
      $region74: #{deberta_for_regression.1} parent=11 // pred_check_branch
        %527 = sbr.rel (%p525) target = $region76
      $region75: #{deberta_for_regression.1} parent=11 // pred_region
        _
      $region76: #{deberta_for_regression.1} parent=11 // pred_fallthru
        _
    $region12: #{deberta_for_regression.1} parent=5 // pred_fallthru
      _
    %p528 = scmp.lt.s32.totalorder %s25, 2
    // Predicated region
    $region77: #{deberta_for_regression.1} parent=5 // pred_check
      %p529 = pneg %p528
    $region78: #{deberta_for_regression.1} parent=5 // pred_check_branch
      %531 = sbr.rel (%p529) target = $region80
    $region79: #{deberta_for_regression.1} parent=5 // pred_region
      // Predicated region
      $region81: #{deberta_for_regression.1} parent=79 // pred_check
        %p532 = pneg %p45
      $region82: #{deberta_for_regression.1} parent=79 // pred_check_branch
        %534 = sbr.rel (%p532) target = $region84
      $region83: #{deberta_for_regression.1} parent=79 // pred_region
        %p535 = scmp.lt.s32.totalorder %s25, 1
        %s536 = scalar_select %p535, %s25, 1
        %s537 = smul.addr %s536, 8
        %s538 = scalar_lea.vmem %s0, %s537
      $region84: #{deberta_for_regression.1} parent=79 // pred_fallthru
        _
      // Predicated region
      $region85: #{deberta_for_regression.1} parent=79 // pred_check
        %p539 = pneg %p71
      $region86: #{deberta_for_regression.1} parent=79 // pred_check_branch
        %541 = sbr.rel (%p539) target = $region88
      $region87: #{deberta_for_regression.1} parent=79 // pred_region
        %p542 = scmp.lt.s32.totalorder %s25, 1
        %s543 = scalar_select %p542, %s25, 1
        %s544 = scalar_lea.vmem %s1, %s543
      $region88: #{deberta_for_regression.1} parent=79 // pred_fallthru
        _
      // Predicated region
      $region89: #{deberta_for_regression.1} parent=79 // pred_check
        %p545 = pneg %p97
      $region90: #{deberta_for_regression.1} parent=79 // pred_check_branch
        %547 = sbr.rel (%p545) target = $region92
      $region91: #{deberta_for_regression.1} parent=79 // pred_region
        %p548 = scmp.lt.s32.totalorder %s25, 1
        %s549 = scalar_select %p548, %s25, 1
        %s550 = smul.addr %s549, 8
        %s551 = scalar_lea.vmem %s2, %s550
      $region92: #{deberta_for_regression.1} parent=79 // pred_fallthru
        _
    $region80: #{deberta_for_regression.1} parent=5 // pred_fallthru
      _
    %p552 = scmp.le.s32.totalorder 1, %s25
    %p553 = scmp.lt.s32.totalorder %s25, 3
    %p554 = pnand %p552, %p553
    %p555 = pneg %p554
    // Predicated region
    $region93: #{deberta_for_regression.1} parent=5 // pred_check
      _
    $region94: #{deberta_for_regression.1} parent=5 // pred_check_branch
      %557 = sbr.rel (%p554) target = $region96
    $region95: #{deberta_for_regression.1} parent=5 // pred_region
      %s558 = ssub.s32 %s25, 1
      %p559 = scmp.lt.s32.totalorder %s30, 1
      %s560 = scalar_select %p559, %s30, 1
      %s561 = smul.addr %s560, 8
      %s562 = scalar_lea.vmem %s0, %s561
      %p563 = pneg %p51
      %p564 = pneg %p48
      %p565 = scmp.lt.s32.totalorder %s30, 1
      %s566 = scalar_select %p565, %s30, 1
      %s567 = scalar_lea.vmem %s1, %s566
      %p568 = pneg %p77
      %p569 = pneg %p74
      %p570 = scmp.lt.s32.totalorder %s30, 1
      %s571 = scalar_select %p570, %s30, 1
      %s572 = smul.addr %s571, 8
      %s573 = scalar_lea.vmem %s2, %s572
      %p574 = pneg %p103
      %p575 = pneg %p100
      %p576 = pneg %p124
      %p577 = pneg %p121
      %p578 = pneg %p145
      %p579 = pneg %p142
      %p580 = pneg %p166
      %p581 = pneg %p163
      %p582 = pneg %p187
      %p583 = pneg %p184
      %p584 = pneg %p208
      %p585 = pneg %p205
      %p586 = pneg %p229
      %p587 = pneg %p226
      %p588 = pneg %p250
      %p589 = pneg %p247
      %p590 = pneg %p271
      %p591 = pneg %p268
      %p592 = pneg %p292
      %p593 = pneg %p289
      %p594 = pneg %p313
      %p595 = pneg %p310
      %p596 = pneg %p334
      %p597 = pneg %p331
      %p598 = pneg %p355
      %p599 = pneg %p352
      %p600 = pneg %p376
      %p601 = pneg %p373
      %p602 = pneg %p397
      %p603 = pneg %p394
      %p604 = pneg %p418
      %p605 = pneg %p415
      %p606 = pneg %p439
      %p607 = pneg %p436
      %p608 = pneg %p465
      %p609 = pneg %p462
      %p610 = scmp.lt.s32.totalorder %s30, 1
      %s611 = scalar_select %p610, %s30, 1
      %s612 = scalar_lea.vmem %s19, %s611
      %p613 = scmp.lt.s32.totalorder %s30, 1
      %s614 = scalar_select %p613, %s30, 1
      %s615 = smul.addr %s614, 8
      %s616 = scalar_lea.vmem %s0, %s615
      %p617 = scmp.lt.s32.totalorder %s30, 1
      %s618 = scalar_select %p617, %s30, 1
      %s619 = scalar_lea.vmem %s1, %s618
      %p620 = scmp.lt.s32.totalorder %s30, 1
      %s621 = scalar_select %p620, %s30, 1
      %s622 = smul.addr %s621, 8
      %s623 = scalar_lea.vmem %s2, %s622
      %p624 = scmp.lt.s32.totalorder %s30, 1
      %s625 = scalar_select %p624, %s30, 1
      %s626 = scalar_lea.vmem %s19, %s625
      %v628 = vld [vmem:[%s616] sm:$0xff]
      %v629 = vld [vmem:[%s3] sm:$0x1]
      %v630 = vld [vmem:[%s4] sm:$0x1]
      %vm631 = vcmask 261120
      %v632 = vsel %vm631, %v628, 0.0
      %633 = vadd.xlane.f32.xlu0 %v632
      %v634 = vpop.xlane.xlu0 %633
      %v635 = vrcp.pop 32.0
      %v636 = vmul.f32 %v634, %v635
      %v637 = vsub.f32 %v628, %v636
      %v638 = vmul.f32 %v637, %v637
      %v639 = vsel %vm631, %v638, 0.0
      %640 = vadd.xlane.f32.xlu0 %v639
      %v641 = vpop.xlane.xlu0 %640
      %v642 = vmul.f32 %v641, %v635
      %v643 = vadd.f32 %v642, 1e-07
      %v644 = vrsqrt.pop %v643
      %v645 = vmul.f32 %v637, %v644
      %v647 = vlaneseq
      %v648 = vshrl.u32 %v647, 7
      %v649 = vsub.s32 0, %v648
      %v650 = vrot.slane %v629, %v649
      %v652 = vmul.f32 %v645, %v650
      %v654 = vlaneseq
      %v655 = vshrl.u32 %v654, 7
      %v656 = vsub.s32 0, %v655
      %v657 = vrot.slane %v630, %v656
      %v659 = vadd.f32 %v652, %v657
      %v660 = vld [vmem:[%s619] sm:$0x1]
      %v661 = vpack.c.bf16 %v659, %v659
      %v662 = vld [vmem:[%s5] sm:$0xff]
      %v663 = vld [vmem:[%s5 + $0x8] sm:$0xff]
      %v664 = vld [vmem:[%s5 + $0x10] sm:$0xff]
      %v665 = vld [vmem:[%s5 + $0x18] sm:$0xff]
      %v666 = vld [vmem:[%s5 + $0x20] sm:$0xff]
      %v667 = vld [vmem:[%s5 + $0x28] sm:$0xff]
      %v668 = vld [vmem:[%s5 + $0x30] sm:$0xff]
      %v669 = vld [vmem:[%s5 + $0x38] sm:$0xff]
      %v670 = vld [vmem:[%s5 + $0x40] sm:$0xff]
      %v671 = vld [vmem:[%s5 + $0x48] sm:$0xff]
      %v672 = vld [vmem:[%s5 + $0x50] sm:$0xff]
      %v673 = vld [vmem:[%s5 + $0x58] sm:$0xff]
      %v674 = vld [vmem:[%s6] sm:$0x3f]
      %v676 = vlaneseq
      %v677 = vshrl.u32 %v676, 7
      %v678 = vsub.s32 0, %v677
      %v679 = vrot.slane %v674, %v678
      %v680 = vlaneseq
      %v681 = vshrl.u32 %v680, 7
      %v682 = vsub.s32 1, %v681
      %v683 = vrot.slane %v674, %v682
      %v684 = vlaneseq
      %v685 = vshrl.u32 %v684, 7
      %v686 = vsub.s32 2, %v685
      %v687 = vrot.slane %v674, %v686
      %v688 = vlaneseq
      %v689 = vshrl.u32 %v688, 7
      %v690 = vsub.s32 3, %v689
      %v691 = vrot.slane %v674, %v690
      %v692 = vlaneseq
      %v693 = vshrl.u32 %v692, 7
      %v694 = vsub.s32 4, %v693
      %v695 = vrot.slane %v674, %v694
      %v696 = vlaneseq
      %v697 = vshrl.u32 %v696, 7
      %v698 = vsub.s32 5, %v697
      %v699 = vrot.slane %v674, %v698
      %v718 = vunpack.c.l.b16 %v662
      %v719 = vunpack.c.h.b16 %v662
      %v720 = vunpack.c.l.b16 %v663
      %v721 = vunpack.c.h.b16 %v663
      %v722 = vunpack.c.l.b16 %v664
      %v723 = vunpack.c.h.b16 %v664
      %v724 = vunpack.c.l.b16 %v665
      %v725 = vunpack.c.h.b16 %v665
      %v726 = vunpack.c.l.b16 %v666
      %v727 = vunpack.c.h.b16 %v666
      %v728 = vunpack.c.l.b16 %v667
      %v729 = vunpack.c.h.b16 %v667
      %v730 = vunpack.c.l.b16 %v668
      %v731 = vunpack.c.h.b16 %v668
      %v732 = vunpack.c.l.b16 %v669
      %v733 = vunpack.c.h.b16 %v669
      %v734 = vunpack.c.l.b16 %v670
      %v735 = vunpack.c.h.b16 %v670
      %v736 = vunpack.c.l.b16 %v671
      %v737 = vunpack.c.h.b16 %v671
      %v738 = vunpack.c.l.b16 %v672
      %v739 = vunpack.c.h.b16 %v672
      %v740 = vunpack.c.l.b16 %v673
      %v741 = vunpack.c.h.b16 %v673
      %v742 = vpack.c.b16 %v724, %v718
      %v743 = vpack.c.b16 %v725, %v719
      %v744 = vpack.c.b16 %v726, %v720
      %v745 = vpack.c.b16 %v727, %v721
      %v746 = vpack.c.b16 %v728, %v722
      %v747 = vpack.c.b16 %v729, %v723
      %v748 = vpack.c.b16 %v736, %v730
      %v749 = vpack.c.b16 %v737, %v731
      %v750 = vpack.c.b16 %v738, %v732
      %v751 = vpack.c.b16 %v739, %v733
      %v752 = vpack.c.b16 %v740, %v734
      %v753 = vpack.c.b16 %v741, %v735
      %v767 = vsel %vm631, %v661, 0
      %769 = vmatprep.subr.bf16.mxu0 %v743
      %770 = vmatpush1.bf16.msra.mxu0 %v742
      %771 = vmatprep.subr.bf16.mxu0 %v749
      %772 = vmatpush1.bf16.msra.mxu0 %v748
      %773 = vmatprep.subr.bf16.mxu0 0
      %774 = vmatpush1.bf16.msra.mxu0 0
      %775 = vmatprep.subr.bf16.mxu0 0
      %776 = vmatpush1.bf16.msra.mxu0 0
      %777 = vmatprep.subr.bf16.mxu0 0
      %778 = vmatpush1.bf16.msra.mxu0 0
      %779 = vmatprep.subr.bf16.mxu0 0
      %780 = vmatpush1.bf16.msra.mxu0 0
      %781 = vmatprep.subr.bf16.mxu0 0
      %782 = vmatpush1.bf16.msra.mxu0 0
      %783 = vmatprep.subr.bf16.mxu0 0
      %784 = vmatpush1.bf16.msra.mxu0 0
      %785 = vmatprep.subr.bf16.mxu0 0
      %786 = vmatpush1.bf16.msra.mxu0 0
      %787 = vmatprep.subr.bf16.mxu0 0
      %788 = vmatpush1.bf16.msra.mxu0 0
      %789 = vmatprep.subr.bf16.mxu0 0
      %790 = vmatpush1.bf16.msra.mxu0 0
      %791 = vmatprep.subr.bf16.mxu0 0
      %792 = vmatpush1.bf16.msra.mxu0 0
      %793 = vmatprep.subr.bf16.mxu0 0
      %794 = vmatpush1.bf16.msra.mxu0 0
      %795 = vmatprep.subr.bf16.mxu0 0
      %796 = vmatpush1.bf16.msra.mxu0 0
      %797 = vmatprep.subr.bf16.mxu0 0
      %798 = vmatpush1.bf16.msra.mxu0 0
      %799 = vmatprep.subr.bf16.mxu0 0
      %800 = vmatpush1.bf16.msra.mxu0 0
      %801 = vmatprep.mubr.bf16.mxu0 0
      %802 = vmatmul.mubr.bf16.gmra.mrb[0].mxu0 %v767
      %v803 = vpop.f32.mrb[0].mxu0
      %v804 = vadd.f32 %v679, %v803
      %v805 = vpop.f32.mrb[0].mxu0
      %v806 = vadd.f32 %v683, %v805
      %v807 = vpop.f32.mrb[0].mxu0
      %v808 = vpop.f32.mrb[0].mxu0
      %809 = vdwg.mxu0
      %810 = vmatprep.subr.bf16.mxu0 %v745
      %811 = vmatpush1.bf16.msra.mxu0 %v744
      %812 = vmatprep.subr.bf16.mxu0 %v751
      %813 = vmatpush1.bf16.msra.mxu0 %v750
      %814 = vmatprep.subr.bf16.mxu0 0
      %815 = vmatpush1.bf16.msra.mxu0 0
      %816 = vmatprep.subr.bf16.mxu0 0
      %817 = vmatpush1.bf16.msra.mxu0 0
      %818 = vmatprep.subr.bf16.mxu0 0
      %819 = vmatpush1.bf16.msra.mxu0 0
      %820 = vmatprep.subr.bf16.mxu0 0
      %821 = vmatpush1.bf16.msra.mxu0 0
      %822 = vmatprep.subr.bf16.mxu0 0
      %823 = vmatpush1.bf16.msra.mxu0 0
      %824 = vmatprep.subr.bf16.mxu0 0
      %825 = vmatpush1.bf16.msra.mxu0 0
      %826 = vmatprep.subr.bf16.mxu0 0
      %827 = vmatpush1.bf16.msra.mxu0 0
      %828 = vmatprep.subr.bf16.mxu0 0
      %829 = vmatpush1.bf16.msra.mxu0 0
      %830 = vmatprep.subr.bf16.mxu0 0
      %831 = vmatpush1.bf16.msra.mxu0 0
      %832 = vmatprep.subr.bf16.mxu0 0
      %833 = vmatpush1.bf16.msra.mxu0 0
      %834 = vmatprep.subr.bf16.mxu0 0
      %835 = vmatpush1.bf16.msra.mxu0 0
      %836 = vmatprep.subr.bf16.mxu0 0
      %837 = vmatpush1.bf16.msra.mxu0 0
      %838 = vmatprep.subr.bf16.mxu0 0
      %839 = vmatpush1.bf16.msra.mxu0 0
      %840 = vmatprep.subr.bf16.mxu0 0
      %841 = vmatpush1.bf16.msra.mxu0 0
      %842 = vmatprep.mubr.bf16.mxu0 0
      %843 = vmatmul.mubr.bf16.gmra.mrb[0].mxu0 %v767
      %v844 = vpop.f32.mrb[0].mxu0
      %v845 = vadd.f32 %v687, %v844
      %v846 = vpop.f32.mrb[0].mxu0
      %v847 = vadd.f32 %v691, %v846
      %v848 = vpop.f32.mrb[0].mxu0
      %v849 = vpop.f32.mrb[0].mxu0
      %850 = vdwg.mxu0
      %851 = vmatprep.subr.bf16.mxu0 %v747
      %852 = vmatpush1.bf16.msra.mxu0 %v746
      %853 = vmatprep.subr.bf16.mxu0 %v753
      %854 = vmatpush1.bf16.msra.mxu0 %v752
      %855 = vmatprep.subr.bf16.mxu0 0
      %856 = vmatpush1.bf16.msra.mxu0 0
      %857 = vmatprep.subr.bf16.mxu0 0
      %858 = vmatpush1.bf16.msra.mxu0 0
      %859 = vmatprep.subr.bf16.mxu0 0
      %860 = vmatpush1.bf16.msra.mxu0 0
      %861 = vmatprep.subr.bf16.mxu0 0
      %862 = vmatpush1.bf16.msra.mxu0 0
      %863 = vmatprep.subr.bf16.mxu0 0
      %864 = vmatpush1.bf16.msra.mxu0 0
      %865 = vmatprep.subr.bf16.mxu0 0
      %866 = vmatpush1.bf16.msra.mxu0 0
      %867 = vmatprep.subr.bf16.mxu0 0
      %868 = vmatpush1.bf16.msra.mxu0 0
      %869 = vmatprep.subr.bf16.mxu0 0
      %870 = vmatpush1.bf16.msra.mxu0 0
      %871 = vmatprep.subr.bf16.mxu0 0
      %872 = vmatpush1.bf16.msra.mxu0 0
      %873 = vmatprep.subr.bf16.mxu0 0
      %874 = vmatpush1.bf16.msra.mxu0 0
      %875 = vmatprep.subr.bf16.mxu0 0
      %876 = vmatpush1.bf16.msra.mxu0 0
      %877 = vmatprep.subr.bf16.mxu0 0
      %878 = vmatpush1.bf16.msra.mxu0 0
      %879 = vmatprep.subr.bf16.mxu0 0
      %880 = vmatpush1.bf16.msra.mxu0 0
      %881 = vmatprep.subr.bf16.mxu0 0
      %882 = vmatpush1.bf16.msra.mxu0 0
      %883 = vmatprep.mubr.bf16.mxu0 0
      %884 = vmatmul.mubr.bf16.gmra.mrb[0].mxu0 %v767
      %v885 = vpop.f32.mrb[0].mxu0
      %v886 = vadd.f32 %v695, %v885
      %v887 = vpop.f32.mrb[0].mxu0
      %v888 = vadd.f32 %v699, %v887
      %v889 = vpop.f32.mrb[0].mxu0
      %v890 = vpop.f32.mrb[0].mxu0
      %891 = vdwg.mxu0
      %v892 = vpack.c.bf16 %v804, %v804
      %v893 = vpack.c.bf16 %v845, %v845
      %v895 = vlaneseq
      %v896 = vshrl.u32 %v895, 7
      %v897 = vsub.s32 0, %v896
      %v898 = vrot.slane %v660, %v897
      %900 = vmatprep.subr.bf16.mxu0 0
      %901 = vmatpush1.bf16.xpose.msra.mxu0 %v893
      %902 = vmatprep.subr.bf16.mxu0 0
      %903 = vmatpush1.bf16.xpose.msra.mxu0 0
      %904 = vmatprep.subr.bf16.mxu0 0
      %905 = vmatpush1.bf16.xpose.msra.mxu0 0
      %906 = vmatprep.subr.bf16.mxu0 0
      %907 = vmatpush1.bf16.xpose.msra.mxu0 0
      %908 = vmatprep.subr.bf16.mxu0 0
      %909 = vmatpush1.bf16.xpose.msra.mxu0 0
      %910 = vmatprep.subr.bf16.mxu0 0
      %911 = vmatpush1.bf16.xpose.msra.mxu0 0
      %912 = vmatprep.subr.bf16.mxu0 0
      %913 = vmatpush1.bf16.xpose.msra.mxu0 0
      %914 = vmatprep.subr.bf16.mxu0 0
      %915 = vmatpush1.bf16.xpose.msra.mxu0 0
      %916 = vmatprep.subr.bf16.mxu0 0
      %917 = vmatpush1.bf16.xpose.msra.mxu0 0
      %918 = vmatprep.subr.bf16.mxu0 0
      %919 = vmatpush1.bf16.xpose.msra.mxu0 0
      %920 = vmatprep.subr.bf16.mxu0 0
      %921 = vmatpush1.bf16.xpose.msra.mxu0 0
      %922 = vmatprep.subr.bf16.mxu0 0
      %923 = vmatpush1.bf16.xpose.msra.mxu0 0
      %924 = vmatprep.subr.bf16.mxu0 0
      %925 = vmatpush1.bf16.xpose.msra.mxu0 0
      %926 = vmatprep.subr.bf16.mxu0 0
      %927 = vmatpush1.bf16.xpose.msra.mxu0 0
      %928 = vmatprep.subr.bf16.mxu0 0
      %929 = vmatpush1.bf16.xpose.msra.mxu0 0
      %930 = vmatprep.subr.bf16.mxu0 0
      %931 = vmatpush1.bf16.xpose.msra.mxu0 0
      %932 = vmatprep.mubr.bf16.mxu0 0
      %933 = vmatmul.mubr.bf16.gmra.mrb[0].mxu0 %v892
      %v934 = vpop.f32.mrb[0].mxu0
      %v935 = vadd.f32 %v898, %v934
      %v936 = vpop.f32.mrb[0].mxu0
      %v937 = vpop.f32.mrb[0].mxu0
      %v938 = vpop.f32.mrb[0].mxu0
      %939 = vdwg.mxu0
      %vm940 = vcmask 64512
      %v941 = vsel %vm940, %v935, -inf
      %942 = vmax.xlane.f32.xlu0 %v941
      %v943 = vpop.xlane.xlu0 %942
      %v944 = vsub.f32 %v935, %v943
      %v945 = vmul.f32 %v944, 1.442695
      %v946 = vpow.pop %v945
      %v947 = vpack.c.bf16 %v946, %v946
      %v948 = vpack.c.bf16 %v886, %v886
      %v950 = vsel %vm940, %v947, 0
      %vm952 = vcmask 1043456
      %v954 = vsel %vm952, %v948, 0
      %956 = vmatprep.subr.bf16.mxu0 0
      %957 = vmatpush1.bf16.msra.mxu0 %v954
      %958 = vmatprep.subr.bf16.mxu0 0
      %959 = vmatpush1.bf16.msra.mxu0 0
      %960 = vmatprep.subr.bf16.mxu0 0
      %961 = vmatpush1.bf16.msra.mxu0 0
      %962 = vmatprep.subr.bf16.mxu0 0
      %963 = vmatpush1.bf16.msra.mxu0 0
      %964 = vmatprep.subr.bf16.mxu0 0
      %965 = vmatpush1.bf16.msra.mxu0 0
      %966 = vmatprep.subr.bf16.mxu0 0
      %967 = vmatpush1.bf16.msra.mxu0 0
      %968 = vmatprep.subr.bf16.mxu0 0
      %969 = vmatpush1.bf16.msra.mxu0 0
      %970 = vmatprep.subr.bf16.mxu0 0
      %971 = vmatpush1.bf16.msra.mxu0 0
      %972 = vmatprep.subr.bf16.mxu0 0
      %973 = vmatpush1.bf16.msra.mxu0 0
      %974 = vmatprep.subr.bf16.mxu0 0
      %975 = vmatpush1.bf16.msra.mxu0 0
      %976 = vmatprep.subr.bf16.mxu0 0
      %977 = vmatpush1.bf16.msra.mxu0 0
      %978 = vmatprep.subr.bf16.mxu0 0
      %979 = vmatpush1.bf16.msra.mxu0 0
      %980 = vmatprep.subr.bf16.mxu0 0
      %981 = vmatpush1.bf16.msra.mxu0 0
      %982 = vmatprep.subr.bf16.mxu0 0
      %983 = vmatpush1.bf16.msra.mxu0 0
      %984 = vmatprep.subr.bf16.mxu0 0
      %985 = vmatpush1.bf16.msra.mxu0 0
      %986 = vmatprep.subr.bf16.mxu0 0
      %987 = vmatpush1.bf16.msra.mxu0 0
      %988 = vmatprep.mubr.bf16.mxu0 0
      %989 = vmatmul.mubr.bf16.gmra.mrb[0].mxu0 %v950
      %v990 = vpop.f32.mrb[0].mxu0
      %v991 = vadd.f32 0.0, %v990
      %v992 = vpop.f32.mrb[0].mxu0
      %v993 = vpop.f32.mrb[0].mxu0
      %v994 = vpop.f32.mrb[0].mxu0
      %995 = vdwg.mxu0
      %v996 = vsel %vm940, %v946, 0.0
      %997 = vadd.xlane.f32.xlu0 %v996
      %v998 = vpop.xlane.xlu0 %997
      %v999 = vrcp.pop %v998
      %v1000 = vmul.f32 %v991, %v999
      %v1001 = vpack.c.bf16 %v806, %v806
      %v1002 = vpack.c.bf16 %v847, %v847
      %1003 = vmatprep.subr.bf16.mxu0 0
      %1004 = vmatpush1.bf16.xpose.msra.mxu0 %v1002
      %1005 = vmatprep.subr.bf16.mxu0 0
      %1006 = vmatpush1.bf16.xpose.msra.mxu0 0
      %1007 = vmatprep.subr.bf16.mxu0 0
      %1008 = vmatpush1.bf16.xpose.msra.mxu0 0
      %1009 = vmatprep.subr.bf16.mxu0 0
      %1010 = vmatpush1.bf16.xpose.msra.mxu0 0
      %1011 = vmatprep.subr.bf16.mxu0 0
      %1012 = vmatpush1.bf16.xpose.msra.mxu0 0
      %1013 = vmatprep.subr.bf16.mxu0 0
      %1014 = vmatpush1.bf16.xpose.msra.mxu0 0
      %1015 = vmatprep.subr.bf16.mxu0 0
      %1016 = vmatpush1.bf16.xpose.msra.mxu0 0
      %1017 = vmatprep.subr.bf16.mxu0 0
      %1018 = vmatpush1.bf16.xpose.msra.mxu0 0
      %1019 = vmatprep.subr.bf16.mxu0 0
      %1020 = vmatpush1.bf16.xpose.msra.mxu0 0
      %1021 = vmatprep.subr.bf16.mxu0 0
      %1022 = vmatpush1.bf16.xpose.msra.mxu0 0
      %1023 = vmatprep.subr.bf16.mxu0 0
      %1024 = vmatpush1.bf16.xpose.msra.mxu0 0
      %1025 = vmatprep.subr.bf16.mxu0 0
      %1026 = vmatpush1.bf16.xpose.msra.mxu0 0
      %1027 = vmatprep.subr.bf16.mxu0 0
      %1028 = vmatpush1.bf16.xpose.msra.mxu0 0
      %1029 = vmatprep.subr.bf16.mxu0 0
      %1030 = vmatpush1.bf16.xpose.msra.mxu0 0
      %1031 = vmatprep.subr.bf16.mxu0 0
      %1032 = vmatpush1.bf16.xpose.msra.mxu0 0
      %1033 = vmatprep.subr.bf16.mxu0 0
      %1034 = vmatpush1.bf16.xpose.msra.mxu0 0
      %1035 = vmatprep.mubr.bf16.mxu0 0
      %1036 = vmatmul.mubr.bf16.gmra.mrb[0].mxu0 %v1001
      %v1037 = vpop.f32.mrb[0].mxu0
      %v1038 = vadd.f32 %v898, %v1037
      %v1039 = vpop.f32.mrb[0].mxu0
      %v1040 = vpop.f32.mrb[0].mxu0
      %v1041 = vpop.f32.mrb[0].mxu0
      %1042 = vdwg.mxu0
      %v1043 = vsel %vm940, %v1038, -inf
      %1044 = vmax.xlane.f32.xlu0 %v1043
      %v1045 = vpop.xlane.xlu0 %1044
      %v1046 = vsub.f32 %v1038, %v1045
      %v1047 = vmul.f32 %v1046, 1.442695
      %v1048 = vpow.pop %v1047
      %v1049 = vpack.c.bf16 %v1048, %v1048
      %v1050 = vpack.c.bf16 %v888, %v888
      %v1052 = vsel %vm940, %v1049, 0
      %v1055 = vsel %vm952, %v1050, 0
      %1057 = vmatprep.subr.bf16.mxu0 0
      %1058 = vmatpush1.bf16.msra.mxu0 %v1055
      %1059 = vmatprep.subr.bf16.mxu0 0
      %1060 = vmatpush1.bf16.msra.mxu0 0
      %1061 = vmatprep.subr.bf16.mxu0 0
      %1062 = vmatpush1.bf16.msra.mxu0 0
      %1063 = vmatprep.subr.bf16.mxu0 0
      %1064 = vmatpush1.bf16.msra.mxu0 0
      %1065 = vmatprep.subr.bf16.mxu0 0
      %1066 = vmatpush1.bf16.msra.mxu0 0
      %1067 = vmatprep.subr.bf16.mxu0 0
      %1068 = vmatpush1.bf16.msra.mxu0 0
      %1069 = vmatprep.subr.bf16.mxu0 0
      %1070 = vmatpush1.bf16.msra.mxu0 0
      %1071 = vmatprep.subr.bf16.mxu0 0
      %1072 = vmatpush1.bf16.msra.mxu0 0
      %1073 = vmatprep.subr.bf16.mxu0 0
      %1074 = vmatpush1.bf16.msra.mxu0 0
      %1075 = vmatprep.subr.bf16.mxu0 0
      %1076 = vmatpush1.bf16.msra.mxu0 0
      %1077 = vmatprep.subr.bf16.mxu0 0
      %1078 = vmatpush1.bf16.msra.mxu0 0
      %1079 = vmatprep.subr.bf16.mxu0 0
      %1080 = vmatpush1.bf16.msra.mxu0 0
      %1081 = vmatprep.subr.bf16.mxu0 0
      %1082 = vmatpush1.bf16.msra.mxu0 0
      %1083 = vmatprep.subr.bf16.mxu0 0
      %1084 = vmatpush1.bf16.msra.mxu0 0
      %1085 = vmatprep.subr.bf16.mxu0 0
      %1086 = vmatpush1.bf16.msra.mxu0 0
      %1087 = vmatprep.subr.bf16.mxu0 0
      %1088 = vmatpush1.bf16.msra.mxu0 0
      %1089 = vmatprep.mubr.bf16.mxu0 0
      %1090 = vmatmul.mubr.bf16.gmra.mrb[0].mxu0 %v1052
      %v1091 = vpop.f32.mrb[0].mxu0
      %v1092 = vadd.f32 0.0, %v1091
      %v1093 = vpop.f32.mrb[0].mxu0
      %v1094 = vpop.f32.mrb[0].mxu0
      %v1095 = vpop.f32.mrb[0].mxu0
      %1096 = vdwg.mxu0
      %v1097 = vsel %vm940, %v1048, 0.0
      %1098 = vadd.xlane.f32.xlu0 %v1097
      %v1099 = vpop.xlane.xlu0 %1098
      %v1100 = vrcp.pop %v1099
      %v1101 = vmul.f32 %v1092, %v1100
      %v1102 = vpack.c.bf16 %v1000, %v1000
      %v1103 = vpack.c.bf16 %v1101, %v1101
      %v1104 = vld [vmem:[%s7] sm:$0xf]
      %v1105 = vld [vmem:[%s7 + $0x4] sm:$0xf]
      %v1106 = vld [vmem:[%s7 + $0x8] sm:$0xf]
      %v1107 = vld [vmem:[%s7 + $0xc] sm:$0xf]
      %v1108 = vld [vmem:[%s7 + $0x10] sm:$0xf]
      %v1109 = vld [vmem:[%s7 + $0x14] sm:$0xf]
      %v1110 = vld [vmem:[%s7 + $0x18] sm:$0xf]
      %v1111 = vld [vmem:[%s7 + $0x1c] sm:$0xf]
      %v1112 = vld [vmem:[%s7 + $0x20] sm:$0xf]
      %v1113 = vld [vmem:[%s7 + $0x24] sm:$0xf]
      %v1114 = vld [vmem:[%s7 + $0x28] sm:$0xf]
      %v1115 = vld [vmem:[%s7 + $0x2c] sm:$0xf]
      %v1116 = vld [vmem:[%s7 + $0x30] sm:$0xf]
      %v1117 = vld [vmem:[%s7 + $0x34] sm:$0xf]
      %v1118 = vld [vmem:[%s7 + $0x38] sm:$0xf]
      %v1119 = vld [vmem:[%s7 + $0x3c] sm:$0xf]
      %v1120 = vld [vmem:[%s7 + $0x40] sm:$0xf]
      %v1121 = vld [vmem:[%s7 + $0x44] sm:$0xf]
      %v1122 = vld [vmem:[%s7 + $0x48] sm:$0xf]
      %v1123 = vld [vmem:[%s7 + $0x4c] sm:$0xf]
      %v1124 = vld [vmem:[%s7 + $0x50] sm:$0xf]
      %v1125 = vld [vmem:[%s7 + $0x54] sm:$0xf]
      %v1126 = vld [vmem:[%s7 + $0x58] sm:$0xf]
      %v1127 = vld [vmem:[%s7 + $0x5c] sm:$0xf]
      %v1128 = vld [vmem:[%s7 + $0x60] sm:$0xf]
      %v1129 = vld [vmem:[%s7 + $0x64] sm:$0xf]
      %v1130 = vld [vmem:[%s7 + $0x68] sm:$0xf]
      %v1131 = vld [vmem:[%s7 + $0x6c] sm:$0xf]
      %v1132 = vld [vmem:[%s7 + $0x70] sm:$0xf]
      %v1133 = vld [vmem:[%s7 + $0x74] sm:$0xf]
      %v1134 = vld [vmem:[%s7 + $0x78] sm:$0xf]
      %v1135 = vld [vmem:[%s7 + $0x7c] sm:$0xf]
      %v1136 = vld [vmem:[%s8] sm:$0x1]
      %v1138 = vlaneseq
      %v1139 = vshrl.u32 %v1138, 7
      %v1140 = vsub.s32 0, %v1139
      %v1141 = vrot.slane %v1136, %v1140
      %v1175 = vunpack.c.l.b16 %v1104
      %v1176 = vunpack.c.l.b16 %v1105
      %v1177 = vunpack.c.l.b16 %v1106
      %v1178 = vunpack.c.l.b16 %v1107
      %v1179 = vunpack.c.l.b16 %v1108
      %v1180 = vunpack.c.l.b16 %v1109
      %v1181 = vunpack.c.l.b16 %v1110
      %v1182 = vunpack.c.l.b16 %v1111
      %v1183 = vunpack.c.l.b16 %v1112
      %v1184 = vunpack.c.l.b16 %v1113
      %v1185 = vunpack.c.l.b16 %v1114
      %v1186 = vunpack.c.l.b16 %v1115
      %v1187 = vunpack.c.l.b16 %v1116
      %v1188 = vunpack.c.l.b16 %v1117
      %v1189 = vunpack.c.l.b16 %v1118
      %v1190 = vunpack.c.l.b16 %v1119
      %v1191 = vunpack.c.l.b16 %v1120
      %v1192 = vunpack.c.l.b16 %v1121
      %v1193 = vunpack.c.l.b16 %v1122
      %v1194 = vunpack.c.l.b16 %v1123
      %v1195 = vunpack.c.l.b16 %v1124
      %v1196 = vunpack.c.l.b16 %v1125
      %v1197 = vunpack.c.l.b16 %v1126
      %v1198 = vunpack.c.l.b16 %v1127
      %v1199 = vunpack.c.l.b16 %v1128
      %v1200 = vunpack.c.l.b16 %v1129
      %v1201 = vunpack.c.l.b16 %v1130
      %v1202 = vunpack.c.l.b16 %v1131
      %v1203 = vunpack.c.l.b16 %v1132
      %v1204 = vunpack.c.l.b16 %v1133
      %v1205 = vunpack.c.l.b16 %v1134
      %v1206 = vunpack.c.l.b16 %v1135
      %v1207 = vpack.c.b16 %v1176, %v1175
      %v1208 = vpack.c.b16 %v1178, %v1177
      %v1209 = vpack.c.b16 %v1180, %v1179
      %v1210 = vpack.c.b16 %v1182, %v1181
      %v1211 = vpack.c.b16 %v1184, %v1183
      %v1212 = vpack.c.b16 %v1186, %v1185
      %v1213 = vpack.c.b16 %v1188, %v1187
      %v1214 = vpack.c.b16 %v1190, %v1189
      %v1215 = vpack.c.b16 %v1192, %v1191
      %v1216 = vpack.c.b16 %v1194, %v1193
      %v1217 = vpack.c.b16 %v1196, %v1195
      %v1218 = vpack.c.b16 %v1198, %v1197
      %v1219 = vpack.c.b16 %v1200, %v1199
      %v1220 = vpack.c.b16 %v1202, %v1201
      %v1221 = vpack.c.b16 %v1204, %v1203
      %v1222 = vpack.c.b16 %v1206, %v1205
      %1239 = vmatprep.subr.bf16.mxu0 0
      %1240 = vmatpush1.bf16.msra.mxu0 %v1207
      %1241 = vmatprep.subr.bf16.mxu0 0
      %1242 = vmatpush1.bf16.msra.mxu0 %v1208
      %1243 = vmatprep.subr.bf16.mxu0 0
      %1244 = vmatpush1.bf16.msra.mxu0 %v1209
      %1245 = vmatprep.subr.bf16.mxu0 0
      %1246 = vmatpush1.bf16.msra.mxu0 %v1210
      %1247 = vmatprep.subr.bf16.mxu0 0
      %1248 = vmatpush1.bf16.msra.mxu0 %v1211
      %1249 = vmatprep.subr.bf16.mxu0 0
      %1250 = vmatpush1.bf16.msra.mxu0 %v1212
      %1251 = vmatprep.subr.bf16.mxu0 0
      %1252 = vmatpush1.bf16.msra.mxu0 %v1213
      %1253 = vmatprep.subr.bf16.mxu0 0
      %1254 = vmatpush1.bf16.msra.mxu0 %v1214
      %1255 = vmatprep.subr.bf16.mxu0 0
      %1256 = vmatpush1.bf16.msra.mxu0 %v1215
      %1257 = vmatprep.subr.bf16.mxu0 0
      %1258 = vmatpush1.bf16.msra.mxu0 %v1216
      %1259 = vmatprep.subr.bf16.mxu0 0
      %1260 = vmatpush1.bf16.msra.mxu0 %v1217
      %1261 = vmatprep.subr.bf16.mxu0 0
      %1262 = vmatpush1.bf16.msra.mxu0 %v1218
      %1263 = vmatprep.subr.bf16.mxu0 0
      %1264 = vmatpush1.bf16.msra.mxu0 %v1219
      %1265 = vmatprep.subr.bf16.mxu0 0
      %1266 = vmatpush1.bf16.msra.mxu0 %v1220
      %1267 = vmatprep.subr.bf16.mxu0 0
      %1268 = vmatpush1.bf16.msra.mxu0 %v1221
      %1269 = vmatprep.subr.bf16.mxu0 0
      %1270 = vmatpush1.bf16.msra.mxu0 %v1222
      %1271 = vmatprep.mubr.bf16.mxu0 %v1103
      %1272 = vmatmul.mubr.bf16.gmra.mrb[0].mxu0 %v1102
      %v1273 = vpop.f32.mrb[0].mxu0
      %v1274 = vadd.f32 %v1141, %v1273
      %v1275 = vpop.f32.mrb[0].mxu0
      %v1276 = vpop.f32.mrb[0].mxu0
      %v1277 = vpop.f32.mrb[0].mxu0
      %1278 = vdwg.mxu0
      %v1279 = vadd.f32 %v1274, %v659
      %v1280 = vld [vmem:[%s9] sm:$0x1]
      %v1281 = vld [vmem:[%s10] sm:$0x1]
      %v1282 = vsel %vm631, %v1279, 0.0
      %1283 = vadd.xlane.f32.xlu0 %v1282
      %v1284 = vpop.xlane.xlu0 %1283
      %v1285 = vmul.f32 %v1284, %v635
      %v1286 = vsub.f32 %v1279, %v1285
      %v1287 = vmul.f32 %v1286, %v1286
      %v1288 = vsel %vm631, %v1287, 0.0
      %1289 = vadd.xlane.f32.xlu0 %v1288
      %v1290 = vpop.xlane.xlu0 %1289
      %v1291 = vmul.f32 %v1290, %v635
      %v1292 = vadd.f32 %v1291, 1e-07
      %v1293 = vrsqrt.pop %v1292
      %v1294 = vmul.f32 %v1286, %v1293
      %v1296 = vlaneseq
      %v1297 = vshrl.u32 %v1296, 7
      %v1298 = vsub.s32 0, %v1297
      %v1299 = vrot.slane %v1280, %v1298
      %v1301 = vmul.f32 %v1294, %v1299
      %v1303 = vlaneseq
      %v1304 = vshrl.u32 %v1303, 7
      %v1305 = vsub.s32 0, %v1304
      %v1306 = vrot.slane %v1281, %v1305
      %v1308 = vadd.f32 %v1301, %v1306
      %v1309 = vpack.c.bf16 %v1308, %v1308
      %v1310 = vld [vmem:[%s11] sm:$0xf]
      %v1311 = vld [vmem:[%s11 + $0x4] sm:$0xf]
      %v1312 = vld [vmem:[%s11 + $0x8] sm:$0xf]
      %v1313 = vld [vmem:[%s11 + $0xc] sm:$0xf]
      %v1314 = vld [vmem:[%s12] sm:$0x1]
      %v1316 = vlaneseq
      %v1317 = vshrl.u32 %v1316, 7
      %v1318 = vsub.s32 0, %v1317
      %v1319 = vrot.slane %v1314, %v1318
      %v1325 = vunpack.c.l.b16 %v1310
      %v1326 = vunpack.c.l.b16 %v1311
      %v1327 = vunpack.c.l.b16 %v1312
      %v1328 = vunpack.c.l.b16 %v1313
      %v1329 = vpack.c.b16 %v1326, %v1325
      %v1330 = vpack.c.b16 %v1328, %v1327
      %v1334 = vsel %vm631, %v1309, 0
      %1336 = vmatprep.subr.bf16.mxu0 0
      %1337 = vmatpush1.bf16.msra.mxu0 %v1329
      %1338 = vmatprep.subr.bf16.mxu0 0
      %1339 = vmatpush1.bf16.msra.mxu0 %v1330
      %1340 = vmatprep.subr.bf16.mxu0 0
      %1341 = vmatpush1.bf16.msra.mxu0 0
      %1342 = vmatprep.subr.bf16.mxu0 0
      %1343 = vmatpush1.bf16.msra.mxu0 0
      %1344 = vmatprep.subr.bf16.mxu0 0
      %1345 = vmatpush1.bf16.msra.mxu0 0
      %1346 = vmatprep.subr.bf16.mxu0 0
      %1347 = vmatpush1.bf16.msra.mxu0 0
      %1348 = vmatprep.subr.bf16.mxu0 0
      %1349 = vmatpush1.bf16.msra.mxu0 0
      %1350 = vmatprep.subr.bf16.mxu0 0
      %1351 = vmatpush1.bf16.msra.mxu0 0
      %1352 = vmatprep.subr.bf16.mxu0 0
      %1353 = vmatpush1.bf16.msra.mxu0 0
      %1354 = vmatprep.subr.bf16.mxu0 0
      %1355 = vmatpush1.bf16.msra.mxu0 0
      %1356 = vmatprep.subr.bf16.mxu0 0
      %1357 = vmatpush1.bf16.msra.mxu0 0
      %1358 = vmatprep.subr.bf16.mxu0 0
      %1359 = vmatpush1.bf16.msra.mxu0 0
      %1360 = vmatprep.subr.bf16.mxu0 0
      %1361 = vmatpush1.bf16.msra.mxu0 0
      %1362 = vmatprep.subr.bf16.mxu0 0
      %1363 = vmatpush1.bf16.msra.mxu0 0
      %1364 = vmatprep.subr.bf16.mxu0 0
      %1365 = vmatpush1.bf16.msra.mxu0 0
      %1366 = vmatprep.subr.bf16.mxu0 0
      %1367 = vmatpush1.bf16.msra.mxu0 0
      %1368 = vmatprep.mubr.bf16.mxu0 0
      %1369 = vmatmul.mubr.bf16.gmra.mrb[0].mxu0 %v1334
      %v1370 = vpop.f32.mrb[0].mxu0
      %v1371 = vadd.f32 %v1319, %v1370
      %v1372 = vpop.f32.mrb[0].mxu0
      %v1373 = vpop.f32.mrb[0].mxu0
      %v1374 = vpop.f32.mrb[0].mxu0
      %1375 = vdwg.mxu0
      %v1376 = vmul.f32 %v1371, %v1371
      %v1377 = vmul.f32 %v1371, %v1376
      %v1378 = vmul.f32 %v1377, 0.044715
      %v1379 = vadd.f32 %v1371, %v1378
      %v1380 = vmul.f32 %v1379, 0.7978846
      %v1381 = vtanh.pop %v1380
      %v1382 = vadd.f32 %v1381, 1.0
      %v1383 = vmul.f32 %v1382, 0.5
      %v1384 = vmul.f32 %v1371, %v1383
      %v1385 = vpack.c.bf16 %v1384, %v1384
      %v1386 = vld [vmem:[%s13] sm:$0xf]
      %v1387 = vld [vmem:[%s13 + $0x4] sm:$0xf]
      %v1388 = vld [vmem:[%s13 + $0x8] sm:$0xf]
      %v1389 = vld [vmem:[%s13 + $0xc] sm:$0xf]
      %v1390 = vld [vmem:[%s13 + $0x10] sm:$0xf]
      %v1391 = vld [vmem:[%s13 + $0x14] sm:$0xf]
      %v1392 = vld [vmem:[%s13 + $0x18] sm:$0xf]
      %v1393 = vld [vmem:[%s13 + $0x1c] sm:$0xf]
      %v1394 = vld [vmem:[%s14] sm:$0x1]
      %v1396 = vlaneseq
      %v1397 = vshrl.u32 %v1396, 7
      %v1398 = vsub.s32 0, %v1397
      %v1399 = vrot.slane %v1394, %v1398
      %v1409 = vunpack.c.l.b16 %v1386
      %v1410 = vunpack.c.l.b16 %v1387
      %v1411 = vunpack.c.l.b16 %v1388
      %v1412 = vunpack.c.l.b16 %v1389
      %v1413 = vunpack.c.l.b16 %v1390
      %v1414 = vunpack.c.l.b16 %v1391
      %v1415 = vunpack.c.l.b16 %v1392
      %v1416 = vunpack.c.l.b16 %v1393
      %v1417 = vpack.c.b16 %v1410, %v1409
      %v1418 = vpack.c.b16 %v1412, %v1411
      %v1419 = vpack.c.b16 %v1414, %v1413
      %v1420 = vpack.c.b16 %v1416, %v1415
      %vm1425 = vcmask 523264
      %v1427 = vsel %vm1425, %v1385, 0
      %1429 = vmatprep.subr.bf16.mxu0 0
      %1430 = vmatpush1.bf16.msra.mxu0 %v1417
      %1431 = vmatprep.subr.bf16.mxu0 0
      %1432 = vmatpush1.bf16.msra.mxu0 %v1418
      %1433 = vmatprep.subr.bf16.mxu0 0
      %1434 = vmatpush1.bf16.msra.mxu0 %v1419
      %1435 = vmatprep.subr.bf16.mxu0 0
      %1436 = vmatpush1.bf16.msra.mxu0 %v1420
      %1437 = vmatprep.subr.bf16.mxu0 0
      %1438 = vmatpush1.bf16.msra.mxu0 0
      %1439 = vmatprep.subr.bf16.mxu0 0
      %1440 = vmatpush1.bf16.msra.mxu0 0
      %1441 = vmatprep.subr.bf16.mxu0 0
      %1442 = vmatpush1.bf16.msra.mxu0 0
      %1443 = vmatprep.subr.bf16.mxu0 0
      %1444 = vmatpush1.bf16.msra.mxu0 0
      %1445 = vmatprep.subr.bf16.mxu0 0
      %1446 = vmatpush1.bf16.msra.mxu0 0
      %1447 = vmatprep.subr.bf16.mxu0 0
      %1448 = vmatpush1.bf16.msra.mxu0 0
      %1449 = vmatprep.subr.bf16.mxu0 0
      %1450 = vmatpush1.bf16.msra.mxu0 0
      %1451 = vmatprep.subr.bf16.mxu0 0
      %1452 = vmatpush1.bf16.msra.mxu0 0
      %1453 = vmatprep.subr.bf16.mxu0 0
      %1454 = vmatpush1.bf16.msra.mxu0 0
      %1455 = vmatprep.subr.bf16.mxu0 0
      %1456 = vmatpush1.bf16.msra.mxu0 0
      %1457 = vmatprep.subr.bf16.mxu0 0
      %1458 = vmatpush1.bf16.msra.mxu0 0
      %1459 = vmatprep.subr.bf16.mxu0 0
      %1460 = vmatpush1.bf16.msra.mxu0 0
      %1461 = vmatprep.mubr.bf16.mxu0 0
      %1462 = vmatmul.mubr.bf16.gmra.mrb[0].mxu0 %v1427
      %v1463 = vpop.f32.mrb[0].mxu0
      %v1464 = vadd.f32 %v1399, %v1463
      %v1465 = vpop.f32.mrb[0].mxu0
      %v1466 = vpop.f32.mrb[0].mxu0
      %v1467 = vpop.f32.mrb[0].mxu0
      %1468 = vdwg.mxu0
      %v1469 = vadd.f32 %v1464, %v1308
      %v1470 = vld [vmem:[%s15] sm:$0x1]
      %v1471 = vld [vmem:[%s16] sm:$0x1]
      %v1472 = vsel %vm631, %v1469, 0.0
      %1473 = vadd.xlane.f32.xlu0 %v1472
      %v1474 = vpop.xlane.xlu0 %1473
      %v1475 = vmul.f32 %v1474, %v635
      %v1476 = vsub.f32 %v1469, %v1475
      %v1477 = vmul.f32 %v1476, %v1476
      %v1478 = vsel %vm631, %v1477, 0.0
      %1479 = vadd.xlane.f32.xlu0 %v1478
      %v1480 = vpop.xlane.xlu0 %1479
      %v1481 = vmul.f32 %v1480, %v635
      %v1482 = vadd.f32 %v1481, 1e-07
      %v1483 = vrsqrt.pop %v1482
      %v1484 = vmul.f32 %v1476, %v1483
      %v1486 = vlaneseq
      %v1487 = vshrl.u32 %v1486, 7
      %v1488 = vsub.s32 0, %v1487
      %v1489 = vrot.slane %v1470, %v1488
      %v1491 = vmul.f32 %v1484, %v1489
      %v1493 = vlaneseq
      %v1494 = vshrl.u32 %v1493, 7
      %v1495 = vsub.s32 0, %v1494
      %v1496 = vrot.slane %v1471, %v1495
      %v1498 = vadd.f32 %v1491, %v1496
      %v1499 = vpack.c.bf16 %v1498, %v1498
      %s1500 = scalar_lea.vmem %s5, 96
      %v1501 = vld [vmem:[%s1500] sm:$0xff]
      %v1502 = vld [vmem:[%s1500 + $0x8] sm:$0xff]
      %v1503 = vld [vmem:[%s1500 + $0x10] sm:$0xff]
      %v1504 = vld [vmem:[%s1500 + $0x18] sm:$0xff]
      %v1505 = vld [vmem:[%s1500 + $0x20] sm:$0xff]
      %v1506 = vld [vmem:[%s1500 + $0x28] sm:$0xff]
      %v1507 = vld [vmem:[%s1500 + $0x30] sm:$0xff]
      %v1508 = vld [vmem:[%s1500 + $0x38] sm:$0xff]
      %v1509 = vld [vmem:[%s1500 + $0x40] sm:$0xff]
      %v1510 = vld [vmem:[%s1500 + $0x48] sm:$0xff]
      %v1511 = vld [vmem:[%s1500 + $0x50] sm:$0xff]
      %v1512 = vld [vmem:[%s1500 + $0x58] sm:$0xff]
      %s1513 = scalar_lea.vmem %s6, 6
      %v1514 = vld [vmem:[%s1513] sm:$0x3f]
      %v1516 = vlaneseq
      %v1517 = vshrl.u32 %v1516, 7
      %v1518 = vsub.s32 0, %v1517
      %v1519 = vrot.slane %v1514, %v1518
      %v1520 = vlaneseq
      %v1521 = vshrl.u32 %v1520, 7
      %v1522 = vsub.s32 1, %v1521
      %v1523 = vrot.slane %v1514, %v1522
      %v1524 = vlaneseq
      %v1525 = vshrl.u32 %v1524, 7
      %v1526 = vsub.s32 2, %v1525
      %v1527 = vrot.slane %v1514, %v1526
      %v1528 = vlaneseq
      %v1529 = vshrl.u32 %v1528, 7
      %v1530 = vsub.s32 3, %v1529
      %v1531 = vrot.slane %v1514, %v1530
      %v1532 = vlaneseq
      %v1533 = vshrl.u32 %v1532, 7
      %v1534 = vsub.s32 4, %v1533
      %v1535 = vrot.slane %v1514, %v1534
      %v1536 = vlaneseq
      %v1537 = vshrl.u32 %v1536, 7
      %v1538 = vsub.s32 5, %v1537
      %v1539 = vrot.slane %v1514, %v1538
      %v1558 = vunpack.c.l.b16 %v1501
      %v1559 = vunpack.c.h.b16 %v1501
      %v1560 = vunpack.c.l.b16 %v1502
      %v1561 = vunpack.c.h.b16 %v1502
      %v1562 = vunpack.c.l.b16 %v1503
      %v1563 = vunpack.c.h.b16 %v1503
      %v1564 = vunpack.c.l.b16 %v1504
      %v1565 = vunpack.c.h.b16 %v1504
      %v1566 = vunpack.c.l.b16 %v1505
      %v1567 = vunpack.c.h.b16 %v1505
      %v1568 = vunpack.c.l.b16 %v1506
      %v1569 = vunpack.c.h.b16 %v1506
      %v1570 = vunpack.c.l.b16 %v1507
      %v1571 = vunpack.c.h.b16 %v1507
      %v1572 = vunpack.c.l.b16 %v1508
      %v1573 = vunpack.c.h.b16 %v1508
      %v1574 = vunpack.c.l.b16 %v1509
      %v1575 = vunpack.c.h.b16 %v1509
      %v1576 = vunpack.c.l.b16 %v1510
      %v1577 = vunpack.c.h.b16 %v1510
      %v1578 = vunpack.c.l.b16 %v1511
      %v1579 = vunpack.c.h.b16 %v1511
      %v1580 = vunpack.c.l.b16 %v1512
      %v1581 = vunpack.c.h.b16 %v1512
      %v1582 = vpack.c.b16 %v1564, %v1558
      %v1583 = vpack.c.b16 %v1565, %v1559
      %v1584 = vpack.c.b16 %v1566, %v1560
      %v1585 = vpack.c.b16 %v1567, %v1561
      %v1586 = vpack.c.b16 %v1568, %v1562
      %v1587 = vpack.c.b16 %v1569, %v1563
      %v1588 = vpack.c.b16 %v1576, %v1570
      %v1589 = vpack.c.b16 %v1577, %v1571
      %v1590 = vpack.c.b16 %v1578, %v1572
      %v1591 = vpack.c.b16 %v1579, %v1573
      %v1592 = vpack.c.b16 %v1580, %v1574
      %v1593 = vpack.c.b16 %v1581, %v1575
      %v1607 = vsel %vm631, %v1499, 0
      %1609 = vmatprep.subr.bf16.mxu0 %v1583
      %1610 = vmatpush1.bf16.msra.mxu0 %v1582
      %1611 = vmatprep.subr.bf16.mxu0 %v1589
      %1612 = vmatpush1.bf16.msra.mxu0 %v1588
      %1613 = vmatprep.subr.bf16.mxu0 0
      %1614 = vmatpush1.bf16.msra.mxu0 0
      %1615 = vmatprep.subr.bf16.mxu0 0
      %1616 = vmatpush1.bf16.msra.mxu0 0
      %1617 = vmatprep.subr.bf16.mxu0 0
      %1618 = vmatpush1.bf16.msra.mxu0 0
      %1619 = vmatprep.subr.bf16.mxu0 0
      %1620 = vmatpush1.bf16.msra.mxu0 0
      %1621 = vmatprep.subr.bf16.mxu0 0
      %1622 = vmatpush1.bf16.msra.mxu0 0
      %1623 = vmatprep.subr.bf16.mxu0 0
      %1624 = vmatpush1.bf16.msra.mxu0 0
      %1625 = vmatprep.subr.bf16.mxu0 0
      %1626 = vmatpush1.bf16.msra.mxu0 0
      %1627 = vmatprep.subr.bf16.mxu0 0
      %1628 = vmatpush1.bf16.msra.mxu0 0
      %1629 = vmatprep.subr.bf16.mxu0 0
      %1630 = vmatpush1.bf16.msra.mxu0 0
      %1631 = vmatprep.subr.bf16.mxu0 0
      %1632 = vmatpush1.bf16.msra.mxu0 0
      %1633 = vmatprep.subr.bf16.mxu0 0
      %1634 = vmatpush1.bf16.msra.mxu0 0
      %1635 = vmatprep.subr.bf16.mxu0 0
      %1636 = vmatpush1.bf16.msra.mxu0 0
      %1637 = vmatprep.subr.bf16.mxu0 0
      %1638 = vmatpush1.bf16.msra.mxu0 0
      %1639 = vmatprep.subr.bf16.mxu0 0
      %1640 = vmatpush1.bf16.msra.mxu0 0
      %1641 = vmatprep.mubr.bf16.mxu0 0
      %1642 = vmatmul.mubr.bf16.gmra.mrb[0].mxu0 %v1607
      %v1643 = vpop.f32.mrb[0].mxu0
      %v1644 = vadd.f32 %v1519, %v1643
      %v1645 = vpop.f32.mrb[0].mxu0
      %v1646 = vadd.f32 %v1523, %v1645
      %v1647 = vpop.f32.mrb[0].mxu0
      %v1648 = vpop.f32.mrb[0].mxu0
      %1649 = vdwg.mxu0
      %1650 = vmatprep.subr.bf16.mxu0 %v1585
      %1651 = vmatpush1.bf16.msra.mxu0 %v1584
      %1652 = vmatprep.subr.bf16.mxu0 %v1591
      %1653 = vmatpush1.bf16.msra.mxu0 %v1590
      %1654 = vmatprep.subr.bf16.mxu0 0
      %1655 = vmatpush1.bf16.msra.mxu0 0
      %1656 = vmatprep.subr.bf16.mxu0 0
      %1657 = vmatpush1.bf16.msra.mxu0 0
      %1658 = vmatprep.subr.bf16.mxu0 0
      %1659 = vmatpush1.bf16.msra.mxu0 0
      %1660 = vmatprep.subr.bf16.mxu0 0
      %1661 = vmatpush1.bf16.msra.mxu0 0
      %1662 = vmatprep.subr.bf16.mxu0 0
      %1663 = vmatpush1.bf16.msra.mxu0 0
      %1664 = vmatprep.subr.bf16.mxu0 0
      %1665 = vmatpush1.bf16.msra.mxu0 0
      %1666 = vmatprep.subr.bf16.mxu0 0
      %1667 = vmatpush1.bf16.msra.mxu0 0
      %1668 = vmatprep.subr.bf16.mxu0 0
      %1669 = vmatpush1.bf16.msra.mxu0 0
      %1670 = vmatprep.subr.bf16.mxu0 0
      %1671 = vmatpush1.bf16.msra.mxu0 0
      %1672 = vmatprep.subr.bf16.mxu0 0
      %1673 = vmatpush1.bf16.msra.mxu0 0
      %1674 = vmatprep.subr.bf16.mxu0 0
      %1675 = vmatpush1.bf16.msra.mxu0 0
      %1676 = vmatprep.subr.bf16.mxu0 0
      %1677 = vmatpush1.bf16.msra.mxu0 0
      %1678 = vmatprep.subr.bf16.mxu0 0
      %1679 = vmatpush1.bf16.msra.mxu0 0
      %1680 = vmatprep.subr.bf16.mxu0 0
      %1681 = vmatpush1.bf16.msra.mxu0 0
      %1682 = vmatprep.mubr.bf16.mxu0 0
      %1683 = vmatmul.mubr.bf16.gmra.mrb[0].mxu0 %v1607
      %v1684 = vpop.f32.mrb[0].mxu0
      %v1685 = vadd.f32 %v1527, %v1684
      %v1686 = vpop.f32.mrb[0].mxu0
      %v1687 = vadd.f32 %v1531, %v1686
      %v1688 = vpop.f32.mrb[0].mxu0
      %v1689 = vpop.f32.mrb[0].mxu0
      %1690 = vdwg.mxu0
      %1691 = vmatprep.subr.bf16.mxu0 %v1587
      %1692 = vmatpush1.bf16.msra.mxu0 %v1586
      %1693 = vmatprep.subr.bf16.mxu0 %v1593
      %1694 = vmatpush1.bf16.msra.mxu0 %v1592
      %1695 = vmatprep.subr.bf16.mxu0 0
      %1696 = vmatpush1.bf16.msra.mxu0 0
      %1697 = vmatprep.subr.bf16.mxu0 0
      %1698 = vmatpush1.bf16.msra.mxu0 0
      %1699 = vmatprep.subr.bf16.mxu0 0
      %1700 = vmatpush1.bf16.msra.mxu0 0
      %1701 = vmatprep.subr.bf16.mxu0 0
      %1702 = vmatpush1.bf16.msra.mxu0 0
      %1703 = vmatprep.subr.bf16.mxu0 0
      %1704 = vmatpush1.bf16.msra.mxu0 0
      %1705 = vmatprep.subr.bf16.mxu0 0
      %1706 = vmatpush1.bf16.msra.mxu0 0
      %1707 = vmatprep.subr.bf16.mxu0 0
      %1708 = vmatpush1.bf16.msra.mxu0 0
      %1709 = vmatprep.subr.bf16.mxu0 0
      %1710 = vmatpush1.bf16.msra.mxu0 0
      %1711 = vmatprep.subr.bf16.mxu0 0
      %1712 = vmatpush1.bf16.msra.mxu0 0
      %1713 = vmatprep.subr.bf16.mxu0 0
      %1714 = vmatpush1.bf16.msra.mxu0 0
      %1715 = vmatprep.subr.bf16.mxu0 0
      %1716 = vmatpush1.bf16.msra.mxu0 0
      %1717 = vmatprep.subr.bf16.mxu0 0
      %1718 = vmatpush1.bf16.msra.mxu0 0
      %1719 = vmatprep.subr.bf16.mxu0 0
      %1720 = vmatpush1.bf16.msra.mxu0 0
      %1721 = vmatprep.subr.bf16.mxu0 0
      %1722 = vmatpush1.bf16.msra.mxu0 0
      %1723 = vmatprep.mubr.bf16.mxu0 0
      %1724 = vmatmul.mubr.bf16.gmra.mrb[0].mxu0 %v1607
      %v1725 = vpop.f32.mrb[0].mxu0
      %v1726 = vadd.f32 %v1535, %v1725
      %v1727 = vpop.f32.mrb[0].mxu0
      %v1728 = vadd.f32 %v1539, %v1727
      %v1729 = vpop.f32.mrb[0].mxu0
      %v1730 = vpop.f32.mrb[0].mxu0
      %1731 = vdwg.mxu0
      %v1732 = vpack.c.bf16 %v1644, %v1644
      %v1733 = vpack.c.bf16 %v1685, %v1685
      %1734 = vmatprep.subr.bf16.mxu0 0
      %1735 = vmatpush1.bf16.xpose.msra.mxu0 %v1733
      %1736 = vmatprep.subr.bf16.mxu0 0
      %1737 = vmatpush1.bf16.xpose.msra.mxu0 0
      %1738 = vmatprep.subr.bf16.mxu0 0
      %1739 = vmatpush1.bf16.xpose.msra.mxu0 0
      %1740 = vmatprep.subr.bf16.mxu0 0
      %1741 = vmatpush1.bf16.xpose.msra.mxu0 0
      %1742 = vmatprep.subr.bf16.mxu0 0
      %1743 = vmatpush1.bf16.xpose.msra.mxu0 0
      %1744 = vmatprep.subr.bf16.mxu0 0
      %1745 = vmatpush1.bf16.xpose.msra.mxu0 0
      %1746 = vmatprep.subr.bf16.mxu0 0
      %1747 = vmatpush1.bf16.xpose.msra.mxu0 0
      %1748 = vmatprep.subr.bf16.mxu0 0
      %1749 = vmatpush1.bf16.xpose.msra.mxu0 0
      %1750 = vmatprep.subr.bf16.mxu0 0
      %1751 = vmatpush1.bf16.xpose.msra.mxu0 0
      %1752 = vmatprep.subr.bf16.mxu0 0
      %1753 = vmatpush1.bf16.xpose.msra.mxu0 0
      %1754 = vmatprep.subr.bf16.mxu0 0
      %1755 = vmatpush1.bf16.xpose.msra.mxu0 0
      %1756 = vmatprep.subr.bf16.mxu0 0
      %1757 = vmatpush1.bf16.xpose.msra.mxu0 0
      %1758 = vmatprep.subr.bf16.mxu0 0
      %1759 = vmatpush1.bf16.xpose.msra.mxu0 0
      %1760 = vmatprep.subr.bf16.mxu0 0
      %1761 = vmatpush1.bf16.xpose.msra.mxu0 0
      %1762 = vmatprep.subr.bf16.mxu0 0
      %1763 = vmatpush1.bf16.xpose.msra.mxu0 0
      %1764 = vmatprep.subr.bf16.mxu0 0
      %1765 = vmatpush1.bf16.xpose.msra.mxu0 0
      %1766 = vmatprep.mubr.bf16.mxu0 0
      %1767 = vmatmul.mubr.bf16.gmra.mrb[0].mxu0 %v1732
      %v1768 = vpop.f32.mrb[0].mxu0
      %v1769 = vadd.f32 %v898, %v1768
      %v1770 = vpop.f32.mrb[0].mxu0
      %v1771 = vpop.f32.mrb[0].mxu0
      %v1772 = vpop.f32.mrb[0].mxu0
      %1773 = vdwg.mxu0
      %v1774 = vsel %vm940, %v1769, -inf
      %1775 = vmax.xlane.f32.xlu0 %v1774
      %v1776 = vpop.xlane.xlu0 %1775
      %v1777 = vsub.f32 %v1769, %v1776
      %v1778 = vmul.f32 %v1777, 1.442695
      %v1779 = vpow.pop %v1778
      %v1780 = vpack.c.bf16 %v1779, %v1779
      %v1781 = vpack.c.bf16 %v1726, %v1726
      %v1783 = vsel %vm940, %v1780, 0
      %v1786 = vsel %vm952, %v1781, 0
      %1788 = vmatprep.subr.bf16.mxu0 0
      %1789 = vmatpush1.bf16.msra.mxu0 %v1786
      %1790 = vmatprep.subr.bf16.mxu0 0
      %1791 = vmatpush1.bf16.msra.mxu0 0
      %1792 = vmatprep.subr.bf16.mxu0 0
      %1793 = vmatpush1.bf16.msra.mxu0 0
      %1794 = vmatprep.subr.bf16.mxu0 0
      %1795 = vmatpush1.bf16.msra.mxu0 0
      %1796 = vmatprep.subr.bf16.mxu0 0
      %1797 = vmatpush1.bf16.msra.mxu0 0
      %1798 = vmatprep.subr.bf16.mxu0 0
      %1799 = vmatpush1.bf16.msra.mxu0 0
      %1800 = vmatprep.subr.bf16.mxu0 0
      %1801 = vmatpush1.bf16.msra.mxu0 0
      %1802 = vmatprep.subr.bf16.mxu0 0
      %1803 = vmatpush1.bf16.msra.mxu0 0
      %1804 = vmatprep.subr.bf16.mxu0 0
      %1805 = vmatpush1.bf16.msra.mxu0 0
      %1806 = vmatprep.subr.bf16.mxu0 0
      %1807 = vmatpush1.bf16.msra.mxu0 0
      %1808 = vmatprep.subr.bf16.mxu0 0
      %1809 = vmatpush1.bf16.msra.mxu0 0
      %1810 = vmatprep.subr.bf16.mxu0 0
      %1811 = vmatpush1.bf16.msra.mxu0 0
      %1812 = vmatprep.subr.bf16.mxu0 0
      %1813 = vmatpush1.bf16.msra.mxu0 0
      %1814 = vmatprep.subr.bf16.mxu0 0
      %1815 = vmatpush1.bf16.msra.mxu0 0
      %1816 = vmatprep.subr.bf16.mxu0 0
      %1817 = vmatpush1.bf16.msra.mxu0 0
      %1818 = vmatprep.subr.bf16.mxu0 0
      %1819 = vmatpush1.bf16.msra.mxu0 0
      %1820 = vmatprep.mubr.bf16.mxu0 0
      %1821 = vmatmul.mubr.bf16.gmra.mrb[0].mxu0 %v1783
      %v1822 = vpop.f32.mrb[0].mxu0
      %v1823 = vadd.f32 0.0, %v1822
      %v1824 = vpop.f32.mrb[0].mxu0
      %v1825 = vpop.f32.mrb[0].mxu0
      %v1826 = vpop.f32.mrb[0].mxu0
      %1827 = vdwg.mxu0
      %v1828 = vsel %vm940, %v1779, 0.0
      %1829 = vadd.xlane.f32.xlu0 %v1828
      %v1830 = vpop.xlane.xlu0 %1829
      %v1831 = vrcp.pop %v1830
      %v1832 = vmul.f32 %v1823, %v1831
      %v1833 = vpack.c.bf16 %v1646, %v1646
      %v1834 = vpack.c.bf16 %v1687, %v1687
      %1835 = vmatprep.subr.bf16.mxu0 0
      %1836 = vmatpush1.bf16.xpose.msra.mxu0 %v1834
      %1837 = vmatprep.subr.bf16.mxu0 0
      %1838 = vmatpush1.bf16.xpose.msra.mxu0 0
      %1839 = vmatprep.subr.bf16.mxu0 0
      %1840 = vmatpush1.bf16.xpose.msra.mxu0 0
      %1841 = vmatprep.subr.bf16.mxu0 0
      %1842 = vmatpush1.bf16.xpose.msra.mxu0 0
      %1843 = vmatprep.subr.bf16.mxu0 0
      %1844 = vmatpush1.bf16.xpose.msra.mxu0 0
      %1845 = vmatprep.subr.bf16.mxu0 0
      %1846 = vmatpush1.bf16.xpose.msra.mxu0 0
      %1847 = vmatprep.subr.bf16.mxu0 0
      %1848 = vmatpush1.bf16.xpose.msra.mxu0 0
      %1849 = vmatprep.subr.bf16.mxu0 0
      %1850 = vmatpush1.bf16.xpose.msra.mxu0 0
      %1851 = vmatprep.subr.bf16.mxu0 0
      %1852 = vmatpush1.bf16.xpose.msra.mxu0 0
      %1853 = vmatprep.subr.bf16.mxu0 0
      %1854 = vmatpush1.bf16.xpose.msra.mxu0 0
      %1855 = vmatprep.subr.bf16.mxu0 0
      %1856 = vmatpush1.bf16.xpose.msra.mxu0 0
      %1857 = vmatprep.subr.bf16.mxu0 0
      %1858 = vmatpush1.bf16.xpose.msra.mxu0 0
      %1859 = vmatprep.subr.bf16.mxu0 0
      %1860 = vmatpush1.bf16.xpose.msra.mxu0 0
      %1861 = vmatprep.subr.bf16.mxu0 0
      %1862 = vmatpush1.bf16.xpose.msra.mxu0 0
      %1863 = vmatprep.subr.bf16.mxu0 0
      %1864 = vmatpush1.bf16.xpose.msra.mxu0 0
      %1865 = vmatprep.subr.bf16.mxu0 0
      %1866 = vmatpush1.bf16.xpose.msra.mxu0 0
      %1867 = vmatprep.mubr.bf16.mxu0 0
      %1868 = vmatmul.mubr.bf16.gmra.mrb[0].mxu0 %v1833
      %v1869 = vpop.f32.mrb[0].mxu0
      %v1870 = vadd.f32 %v898, %v1869
      %v1871 = vpop.f32.mrb[0].mxu0
      %v1872 = vpop.f32.mrb[0].mxu0
      %v1873 = vpop.f32.mrb[0].mxu0
      %1874 = vdwg.mxu0
      %v1875 = vsel %vm940, %v1870, -inf
      %1876 = vmax.xlane.f32.xlu0 %v1875
      %v1877 = vpop.xlane.xlu0 %1876
      %v1878 = vsub.f32 %v1870, %v1877
      %v1879 = vmul.f32 %v1878, 1.442695
      %v1880 = vpow.pop %v1879
      %v1881 = vpack.c.bf16 %v1880, %v1880
      %v1882 = vpack.c.bf16 %v1728, %v1728
      %v1884 = vsel %vm940, %v1881, 0
      %v1887 = vsel %vm952, %v1882, 0
      %1889 = vmatprep.subr.bf16.mxu0 0
      %1890 = vmatpush1.bf16.msra.mxu0 %v1887
      %1891 = vmatprep.subr.bf16.mxu0 0
      %1892 = vmatpush1.bf16.msra.mxu0 0
      %1893 = vmatprep.subr.bf16.mxu0 0
      %1894 = vmatpush1.bf16.msra.mxu0 0
      %1895 = vmatprep.subr.bf16.mxu0 0
      %1896 = vmatpush1.bf16.msra.mxu0 0
      %1897 = vmatprep.subr.bf16.mxu0 0
      %1898 = vmatpush1.bf16.msra.mxu0 0
      %1899 = vmatprep.subr.bf16.mxu0 0
      %1900 = vmatpush1.bf16.msra.mxu0 0
      %1901 = vmatprep.subr.bf16.mxu0 0
      %1902 = vmatpush1.bf16.msra.mxu0 0
      %1903 = vmatprep.subr.bf16.mxu0 0
      %1904 = vmatpush1.bf16.msra.mxu0 0
      %1905 = vmatprep.subr.bf16.mxu0 0
      %1906 = vmatpush1.bf16.msra.mxu0 0
      %1907 = vmatprep.subr.bf16.mxu0 0
      %1908 = vmatpush1.bf16.msra.mxu0 0
      %1909 = vmatprep.subr.bf16.mxu0 0
      %1910 = vmatpush1.bf16.msra.mxu0 0
      %1911 = vmatprep.subr.bf16.mxu0 0
      %1912 = vmatpush1.bf16.msra.mxu0 0
      %1913 = vmatprep.subr.bf16.mxu0 0
      %1914 = vmatpush1.bf16.msra.mxu0 0
      %1915 = vmatprep.subr.bf16.mxu0 0
      %1916 = vmatpush1.bf16.msra.mxu0 0
      %1917 = vmatprep.subr.bf16.mxu0 0
      %1918 = vmatpush1.bf16.msra.mxu0 0
      %1919 = vmatprep.subr.bf16.mxu0 0
      %1920 = vmatpush1.bf16.msra.mxu0 0
      %1921 = vmatprep.mubr.bf16.mxu0 0
      %1922 = vmatmul.mubr.bf16.gmra.mrb[0].mxu0 %v1884
      %v1923 = vpop.f32.mrb[0].mxu0
      %v1924 = vadd.f32 0.0, %v1923
      %v1925 = vpop.f32.mrb[0].mxu0
      %v1926 = vpop.f32.mrb[0].mxu0
      %v1927 = vpop.f32.mrb[0].mxu0
      %1928 = vdwg.mxu0
      %v1929 = vsel %vm940, %v1880, 0.0
      %1930 = vadd.xlane.f32.xlu0 %v1929
      %v1931 = vpop.xlane.xlu0 %1930
      %v1932 = vrcp.pop %v1931
      %v1933 = vmul.f32 %v1924, %v1932
      %v1934 = vpack.c.bf16 %v1832, %v1832
      %v1935 = vpack.c.bf16 %v1933, %v1933
      %s1936 = scalar_lea.vmem %s7, 128
      %v1937 = vld [vmem:[%s1936] sm:$0xf]
      %v1938 = vld [vmem:[%s1936 + $0x4] sm:$0xf]
      %v1939 = vld [vmem:[%s1936 + $0x8] sm:$0xf]
      %v1940 = vld [vmem:[%s1936 + $0xc] sm:$0xf]
      %v1941 = vld [vmem:[%s1936 + $0x10] sm:$0xf]
      %v1942 = vld [vmem:[%s1936 + $0x14] sm:$0xf]
      %v1943 = vld [vmem:[%s1936 + $0x18] sm:$0xf]
      %v1944 = vld [vmem:[%s1936 + $0x1c] sm:$0xf]
      %v1945 = vld [vmem:[%s1936 + $0x20] sm:$0xf]
      %v1946 = vld [vmem:[%s1936 + $0x24] sm:$0xf]
      %v1947 = vld [vmem:[%s1936 + $0x28] sm:$0xf]
      %v1948 = vld [vmem:[%s1936 + $0x2c] sm:$0xf]
      %v1949 = vld [vmem:[%s1936 + $0x30] sm:$0xf]
      %v1950 = vld [vmem:[%s1936 + $0x34] sm:$0xf]
      %v1951 = vld [vmem:[%s1936 + $0x38] sm:$0xf]
      %v1952 = vld [vmem:[%s1936 + $0x3c] sm:$0xf]
      %v1953 = vld [vmem:[%s1936 + $0x40] sm:$0xf]
      %v1954 = vld [vmem:[%s1936 + $0x44] sm:$0xf]
      %v1955 = vld [vmem:[%s1936 + $0x48] sm:$0xf]
      %v1956 = vld [vmem:[%s1936 + $0x4c] sm:$0xf]
      %v1957 = vld [vmem:[%s1936 + $0x50] sm:$0xf]
      %v1958 = vld [vmem:[%s1936 + $0x54] sm:$0xf]
      %v1959 = vld [vmem:[%s1936 + $0x58] sm:$0xf]
      %v1960 = vld [vmem:[%s1936 + $0x5c] sm:$0xf]
      %v1961 = vld [vmem:[%s1936 + $0x60] sm:$0xf]
      %v1962 = vld [vmem:[%s1936 + $0x64] sm:$0xf]
      %v1963 = vld [vmem:[%s1936 + $0x68] sm:$0xf]
      %v1964 = vld [vmem:[%s1936 + $0x6c] sm:$0xf]
      %v1965 = vld [vmem:[%s1936 + $0x70] sm:$0xf]
      %v1966 = vld [vmem:[%s1936 + $0x74] sm:$0xf]
      %v1967 = vld [vmem:[%s1936 + $0x78] sm:$0xf]
      %v1968 = vld [vmem:[%s1936 + $0x7c] sm:$0xf]
      %s1969 = scalar_lea.vmem %s8, 1
      %v1970 = vld [vmem:[%s1969] sm:$0x1]
      %v1972 = vlaneseq
      %v1973 = vshrl.u32 %v1972, 7
      %v1974 = vsub.s32 0, %v1973
      %v1975 = vrot.slane %v1970, %v1974
      %v2009 = vunpack.c.l.b16 %v1937
      %v2010 = vunpack.c.l.b16 %v1938
      %v2011 = vunpack.c.l.b16 %v1939
      %v2012 = vunpack.c.l.b16 %v1940
      %v2013 = vunpack.c.l.b16 %v1941
      %v2014 = vunpack.c.l.b16 %v1942
      %v2015 = vunpack.c.l.b16 %v1943
      %v2016 = vunpack.c.l.b16 %v1944
      %v2017 = vunpack.c.l.b16 %v1945
      %v2018 = vunpack.c.l.b16 %v1946
      %v2019 = vunpack.c.l.b16 %v1947
      %v2020 = vunpack.c.l.b16 %v1948
      %v2021 = vunpack.c.l.b16 %v1949
      %v2022 = vunpack.c.l.b16 %v1950
      %v2023 = vunpack.c.l.b16 %v1951
      %v2024 = vunpack.c.l.b16 %v1952
      %v2025 = vunpack.c.l.b16 %v1953
      %v2026 = vunpack.c.l.b16 %v1954
      %v2027 = vunpack.c.l.b16 %v1955
      %v2028 = vunpack.c.l.b16 %v1956
      %v2029 = vunpack.c.l.b16 %v1957
      %v2030 = vunpack.c.l.b16 %v1958
      %v2031 = vunpack.c.l.b16 %v1959
      %v2032 = vunpack.c.l.b16 %v1960
      %v2033 = vunpack.c.l.b16 %v1961
      %v2034 = vunpack.c.l.b16 %v1962
      %v2035 = vunpack.c.l.b16 %v1963
      %v2036 = vunpack.c.l.b16 %v1964
      %v2037 = vunpack.c.l.b16 %v1965
      %v2038 = vunpack.c.l.b16 %v1966
      %v2039 = vunpack.c.l.b16 %v1967
      %v2040 = vunpack.c.l.b16 %v1968
      %v2041 = vpack.c.b16 %v2010, %v2009
      %v2042 = vpack.c.b16 %v2012, %v2011
      %v2043 = vpack.c.b16 %v2014, %v2013
      %v2044 = vpack.c.b16 %v2016, %v2015
      %v2045 = vpack.c.b16 %v2018, %v2017
      %v2046 = vpack.c.b16 %v2020, %v2019
      %v2047 = vpack.c.b16 %v2022, %v2021
      %v2048 = vpack.c.b16 %v2024, %v2023
      %v2049 = vpack.c.b16 %v2026, %v2025
      %v2050 = vpack.c.b16 %v2028, %v2027
      %v2051 = vpack.c.b16 %v2030, %v2029
      %v2052 = vpack.c.b16 %v2032, %v2031
      %v2053 = vpack.c.b16 %v2034, %v2033
      %v2054 = vpack.c.b16 %v2036, %v2035
      %v2055 = vpack.c.b16 %v2038, %v2037
      %v2056 = vpack.c.b16 %v2040, %v2039
      %2073 = vmatprep.subr.bf16.mxu0 0
      %2074 = vmatpush1.bf16.msra.mxu0 %v2041
      %2075 = vmatprep.subr.bf16.mxu0 0
      %2076 = vmatpush1.bf16.msra.mxu0 %v2042
      %2077 = vmatprep.subr.bf16.mxu0 0
      %2078 = vmatpush1.bf16.msra.mxu0 %v2043
      %2079 = vmatprep.subr.bf16.mxu0 0
      %2080 = vmatpush1.bf16.msra.mxu0 %v2044
      %2081 = vmatprep.subr.bf16.mxu0 0
      %2082 = vmatpush1.bf16.msra.mxu0 %v2045
      %2083 = vmatprep.subr.bf16.mxu0 0
      %2084 = vmatpush1.bf16.msra.mxu0 %v2046
      %2085 = vmatprep.subr.bf16.mxu0 0
      %2086 = vmatpush1.bf16.msra.mxu0 %v2047
      %2087 = vmatprep.subr.bf16.mxu0 0
      %2088 = vmatpush1.bf16.msra.mxu0 %v2048
      %2089 = vmatprep.subr.bf16.mxu0 0
      %2090 = vmatpush1.bf16.msra.mxu0 %v2049
      %2091 = vmatprep.subr.bf16.mxu0 0
      %2092 = vmatpush1.bf16.msra.mxu0 %v2050
      %2093 = vmatprep.subr.bf16.mxu0 0
      %2094 = vmatpush1.bf16.msra.mxu0 %v2051
      %2095 = vmatprep.subr.bf16.mxu0 0
      %2096 = vmatpush1.bf16.msra.mxu0 %v2052
      %2097 = vmatprep.subr.bf16.mxu0 0
      %2098 = vmatpush1.bf16.msra.mxu0 %v2053
      %2099 = vmatprep.subr.bf16.mxu0 0
      %2100 = vmatpush1.bf16.msra.mxu0 %v2054
      %2101 = vmatprep.subr.bf16.mxu0 0
      %2102 = vmatpush1.bf16.msra.mxu0 %v2055
      %2103 = vmatprep.subr.bf16.mxu0 0
      %2104 = vmatpush1.bf16.msra.mxu0 %v2056
      %2105 = vmatprep.mubr.bf16.mxu0 %v1935
      %2106 = vmatmul.mubr.bf16.gmra.mrb[0].mxu0 %v1934
      %v2107 = vpop.f32.mrb[0].mxu0
      %v2108 = vadd.f32 %v1975, %v2107
      %v2109 = vpop.f32.mrb[0].mxu0
      %v2110 = vpop.f32.mrb[0].mxu0
      %v2111 = vpop.f32.mrb[0].mxu0
      %2112 = vdwg.mxu0
      %v2113 = vadd.f32 %v2108, %v1498
      %s2114 = scalar_lea.vmem %s9, 1
      %v2115 = vld [vmem:[%s2114] sm:$0x1]
      %s2116 = scalar_lea.vmem %s10, 1
      %v2117 = vld [vmem:[%s2116] sm:$0x1]
      %v2118 = vsel %vm631, %v2113, 0.0
      %2119 = vadd.xlane.f32.xlu0 %v2118
      %v2120 = vpop.xlane.xlu0 %2119
      %v2121 = vmul.f32 %v2120, %v635
      %v2122 = vsub.f32 %v2113, %v2121
      %v2123 = vmul.f32 %v2122, %v2122
      %v2124 = vsel %vm631, %v2123, 0.0
      %2125 = vadd.xlane.f32.xlu0 %v2124
      %v2126 = vpop.xlane.xlu0 %2125
      %v2127 = vmul.f32 %v2126, %v635
      %v2128 = vadd.f32 %v2127, 1e-07
      %v2129 = vrsqrt.pop %v2128
      %v2130 = vmul.f32 %v2122, %v2129
      %v2132 = vlaneseq
      %v2133 = vshrl.u32 %v2132, 7
      %v2134 = vsub.s32 0, %v2133
      %v2135 = vrot.slane %v2115, %v2134
      %v2137 = vmul.f32 %v2130, %v2135
      %v2139 = vlaneseq
      %v2140 = vshrl.u32 %v2139, 7
      %v2141 = vsub.s32 0, %v2140
      %v2142 = vrot.slane %v2117, %v2141
      %v2144 = vadd.f32 %v2137, %v2142
      %v2145 = vpack.c.bf16 %v2144, %v2144
      %s2146 = scalar_lea.vmem %s11, 16
      %v2147 = vld [vmem:[%s2146] sm:$0xf]
      %v2148 = vld [vmem:[%s2146 + $0x4] sm:$0xf]
      %v2149 = vld [vmem:[%s2146 + $0x8] sm:$0xf]
      %v2150 = vld [vmem:[%s2146 + $0xc] sm:$0xf]
      %s2151 = scalar_lea.vmem %s12, 1
      %v2152 = vld [vmem:[%s2151] sm:$0x1]
      %v2154 = vlaneseq
      %v2155 = vshrl.u32 %v2154, 7
      %v2156 = vsub.s32 0, %v2155
      %v2157 = vrot.slane %v2152, %v2156
      %v2163 = vunpack.c.l.b16 %v2147
      %v2164 = vunpack.c.l.b16 %v2148
      %v2165 = vunpack.c.l.b16 %v2149
      %v2166 = vunpack.c.l.b16 %v2150
      %v2167 = vpack.c.b16 %v2164, %v2163
      %v2168 = vpack.c.b16 %v2166, %v2165
      %v2172 = vsel %vm631, %v2145, 0
      %2174 = vmatprep.subr.bf16.mxu0 0
      %2175 = vmatpush1.bf16.msra.mxu0 %v2167
      %2176 = vmatprep.subr.bf16.mxu0 0
      %2177 = vmatpush1.bf16.msra.mxu0 %v2168
      %2178 = vmatprep.subr.bf16.mxu0 0
      %2179 = vmatpush1.bf16.msra.mxu0 0
      %2180 = vmatprep.subr.bf16.mxu0 0
      %2181 = vmatpush1.bf16.msra.mxu0 0
      %2182 = vmatprep.subr.bf16.mxu0 0
      %2183 = vmatpush1.bf16.msra.mxu0 0
      %2184 = vmatprep.subr.bf16.mxu0 0
      %2185 = vmatpush1.bf16.msra.mxu0 0
      %2186 = vmatprep.subr.bf16.mxu0 0
      %2187 = vmatpush1.bf16.msra.mxu0 0
      %2188 = vmatprep.subr.bf16.mxu0 0
      %2189 = vmatpush1.bf16.msra.mxu0 0
      %2190 = vmatprep.subr.bf16.mxu0 0
      %2191 = vmatpush1.bf16.msra.mxu0 0
      %2192 = vmatprep.subr.bf16.mxu0 0
      %2193 = vmatpush1.bf16.msra.mxu0 0
      %2194 = vmatprep.subr.bf16.mxu0 0
      %2195 = vmatpush1.bf16.msra.mxu0 0
      %2196 = vmatprep.subr.bf16.mxu0 0
      %2197 = vmatpush1.bf16.msra.mxu0 0
      %2198 = vmatprep.subr.bf16.mxu0 0
      %2199 = vmatpush1.bf16.msra.mxu0 0
      %2200 = vmatprep.subr.bf16.mxu0 0
      %2201 = vmatpush1.bf16.msra.mxu0 0
      %2202 = vmatprep.subr.bf16.mxu0 0
      %2203 = vmatpush1.bf16.msra.mxu0 0
      %2204 = vmatprep.subr.bf16.mxu0 0
      %2205 = vmatpush1.bf16.msra.mxu0 0
      %2206 = vmatprep.mubr.bf16.mxu0 0
      %2207 = vmatmul.mubr.bf16.gmra.mrb[0].mxu0 %v2172
      %v2208 = vpop.f32.mrb[0].mxu0
      %v2209 = vadd.f32 %v2157, %v2208
      %v2210 = vpop.f32.mrb[0].mxu0
      %v2211 = vpop.f32.mrb[0].mxu0
      %v2212 = vpop.f32.mrb[0].mxu0
      %2213 = vdwg.mxu0
      %v2214 = vmul.f32 %v2209, %v2209
      %v2215 = vmul.f32 %v2209, %v2214
      %v2216 = vmul.f32 %v2215, 0.044715
      %v2217 = vadd.f32 %v2209, %v2216
      %v2218 = vmul.f32 %v2217, 0.7978846
      %v2219 = vtanh.pop %v2218
      %v2220 = vadd.f32 %v2219, 1.0
      %v2221 = vmul.f32 %v2220, 0.5
      %v2222 = vmul.f32 %v2209, %v2221
      %v2223 = vpack.c.bf16 %v2222, %v2222
      %s2224 = scalar_lea.vmem %s13, 32
      %v2225 = vld [vmem:[%s2224] sm:$0xf]
      %v2226 = vld [vmem:[%s2224 + $0x4] sm:$0xf]
      %v2227 = vld [vmem:[%s2224 + $0x8] sm:$0xf]
      %v2228 = vld [vmem:[%s2224 + $0xc] sm:$0xf]
      %v2229 = vld [vmem:[%s2224 + $0x10] sm:$0xf]
      %v2230 = vld [vmem:[%s2224 + $0x14] sm:$0xf]
      %v2231 = vld [vmem:[%s2224 + $0x18] sm:$0xf]
      %v2232 = vld [vmem:[%s2224 + $0x1c] sm:$0xf]
      %s2233 = scalar_lea.vmem %s14, 1
      %v2234 = vld [vmem:[%s2233] sm:$0x1]
      %v2236 = vlaneseq
      %v2237 = vshrl.u32 %v2236, 7
      %v2238 = vsub.s32 0, %v2237
      %v2239 = vrot.slane %v2234, %v2238
      %v2249 = vunpack.c.l.b16 %v2225
      %v2250 = vunpack.c.l.b16 %v2226
      %v2251 = vunpack.c.l.b16 %v2227
      %v2252 = vunpack.c.l.b16 %v2228
      %v2253 = vunpack.c.l.b16 %v2229
      %v2254 = vunpack.c.l.b16 %v2230
      %v2255 = vunpack.c.l.b16 %v2231
      %v2256 = vunpack.c.l.b16 %v2232
      %v2257 = vpack.c.b16 %v2250, %v2249
      %v2258 = vpack.c.b16 %v2252, %v2251
      %v2259 = vpack.c.b16 %v2254, %v2253
      %v2260 = vpack.c.b16 %v2256, %v2255
      %v2266 = vsel %vm1425, %v2223, 0
      %2268 = vmatprep.subr.bf16.mxu0 0
      %2269 = vmatpush1.bf16.msra.mxu0 %v2257
      %2270 = vmatprep.subr.bf16.mxu0 0
      %2271 = vmatpush1.bf16.msra.mxu0 %v2258
      %2272 = vmatprep.subr.bf16.mxu0 0
      %2273 = vmatpush1.bf16.msra.mxu0 %v2259
      %2274 = vmatprep.subr.bf16.mxu0 0
      %2275 = vmatpush1.bf16.msra.mxu0 %v2260
      %2276 = vmatprep.subr.bf16.mxu0 0
      %2277 = vmatpush1.bf16.msra.mxu0 0
      %2278 = vmatprep.subr.bf16.mxu0 0
      %2279 = vmatpush1.bf16.msra.mxu0 0
      %2280 = vmatprep.subr.bf16.mxu0 0
      %2281 = vmatpush1.bf16.msra.mxu0 0
      %2282 = vmatprep.subr.bf16.mxu0 0
      %2283 = vmatpush1.bf16.msra.mxu0 0
      %2284 = vmatprep.subr.bf16.mxu0 0
      %2285 = vmatpush1.bf16.msra.mxu0 0
      %2286 = vmatprep.subr.bf16.mxu0 0
      %2287 = vmatpush1.bf16.msra.mxu0 0
      %2288 = vmatprep.subr.bf16.mxu0 0
      %2289 = vmatpush1.bf16.msra.mxu0 0
      %2290 = vmatprep.subr.bf16.mxu0 0
      %2291 = vmatpush1.bf16.msra.mxu0 0
      %2292 = vmatprep.subr.bf16.mxu0 0
      %2293 = vmatpush1.bf16.msra.mxu0 0
      %2294 = vmatprep.subr.bf16.mxu0 0
      %2295 = vmatpush1.bf16.msra.mxu0 0
      %2296 = vmatprep.subr.bf16.mxu0 0
      %2297 = vmatpush1.bf16.msra.mxu0 0
      %2298 = vmatprep.subr.bf16.mxu0 0
      %2299 = vmatpush1.bf16.msra.mxu0 0
      %2300 = vmatprep.mubr.bf16.mxu0 0
      %2301 = vmatmul.mubr.bf16.gmra.mrb[0].mxu0 %v2266
      %v2302 = vpop.f32.mrb[0].mxu0
      %v2303 = vadd.f32 %v2239, %v2302
      %v2304 = vpop.f32.mrb[0].mxu0
      %v2305 = vpop.f32.mrb[0].mxu0
      %v2306 = vpop.f32.mrb[0].mxu0
      %2307 = vdwg.mxu0
      %v2308 = vadd.f32 %v2303, %v2144
      %s2309 = scalar_lea.vmem %s15, 1
      %v2310 = vld [vmem:[%s2309] sm:$0x1]
      %s2311 = scalar_lea.vmem %s16, 1
      %v2312 = vld [vmem:[%s2311] sm:$0x1]
      %v2313 = vsel %vm631, %v2308, 0.0
      %2314 = vadd.xlane.f32.xlu0 %v2313
      %v2315 = vpop.xlane.xlu0 %2314
      %v2316 = vmul.f32 %v2315, %v635
      %v2317 = vsub.f32 %v2308, %v2316
      %v2318 = vmul.f32 %v2317, %v2317
      %v2319 = vsel %vm631, %v2318, 0.0
      %2320 = vadd.xlane.f32.xlu0 %v2319
      %v2321 = vpop.xlane.xlu0 %2320
      %v2322 = vmul.f32 %v2321, %v635
      %v2323 = vadd.f32 %v2322, 1e-07
      %v2324 = vrsqrt.pop %v2323
      %v2325 = vmul.f32 %v2317, %v2324
      %v2327 = vlaneseq
      %v2328 = vshrl.u32 %v2327, 7
      %v2329 = vsub.s32 0, %v2328
      %v2330 = vrot.slane %v2310, %v2329
      %v2332 = vmul.f32 %v2325, %v2330
      %v2334 = vlaneseq
      %v2335 = vshrl.u32 %v2334, 7
      %v2336 = vsub.s32 0, %v2335
      %v2337 = vrot.slane %v2312, %v2336
      %v2339 = vadd.f32 %v2332, %v2337
      %v2340 = vld [vmem:[%s623] sm:$0xff]
      %2342 = vset.pattern.permute.xlu0 0
      %2343 = vperm.xlu0 %2342, %v2340
      %v2344 = vpop.permute.xlu0 %2343
      %v2346 = vmul.f32 %v2339, %v2344
      %v2347 = vsel %vm631, %v2346, 0.0
      %v2348 = vrot.slane %v2347, 4
      %v2349 = vadd.f32 %v2347, %v2348
      %v2350 = vrot.slane %v2349, 2
      %v2351 = vadd.f32 %v2349, %v2350
      %v2352 = vrot.slane %v2351, 1
      %v2353 = vadd.f32 %v2351, %v2352
      %vm2354 = vcmask 7168
      %v2355 = vsel %vm2354, %v2340, 0.0
      %v2356 = vrot.slane %v2355, 4
      %v2357 = vadd.f32 %v2355, %v2356
      %v2358 = vrot.slane %v2357, 2
      %v2359 = vadd.f32 %v2357, %v2358
      %v2360 = vrot.slane %v2359, 1
      %v2361 = vadd.f32 %v2359, %v2360
      %v2362 = vmax.f32 %v2361, 1e-09
      %2364 = vset.pattern.permute.xlu0 0
      %2365 = vperm.xlu0 %2364, %v2362
      %v2366 = vpop.permute.xlu0 %2365
      %v2368 = vrcp.pop %v2366
      %v2369 = vmul.f32 %v2353, %v2368
      %v2370 = vpack.c.bf16 %v2369, %v2369
      %v2371 = vld [vmem:[%s17] sm:$0xf]
      %v2372 = vld [vmem:[%s17 + $0x4] sm:$0xf]
      %v2373 = vld [vmem:[%s17 + $0x8] sm:$0xf]
      %v2374 = vld [vmem:[%s17 + $0xc] sm:$0xf]
      %v2375 = vld [vmem:[%s18] sm:$0x1]
      %v2380 = vunpack.c.l.b16 %v2371
      %v2381 = vunpack.c.l.b16 %v2372
      %v2382 = vunpack.c.l.b16 %v2373
      %v2383 = vunpack.c.l.b16 %v2374
      %v2384 = vpack.c.b16 %v2381, %v2380
      %v2385 = vpack.c.b16 %v2383, %v2382
      %v2389 = vsel %vm631, %v2370, 0
      %2391 = vmatprep.subr.bf16.mxu0 0
      %2392 = vmatpush1.bf16.msra.mxu0 %v2384
      %2393 = vmatprep.subr.bf16.mxu0 0
      %2394 = vmatpush1.bf16.msra.mxu0 %v2385
      %2395 = vmatprep.subr.bf16.mxu0 0
      %2396 = vmatpush1.bf16.msra.mxu0 0
      %2397 = vmatprep.subr.bf16.mxu0 0
      %2398 = vmatpush1.bf16.msra.mxu0 0
      %2399 = vmatprep.subr.bf16.mxu0 0
      %2400 = vmatpush1.bf16.msra.mxu0 0
      %2401 = vmatprep.subr.bf16.mxu0 0
      %2402 = vmatpush1.bf16.msra.mxu0 0
      %2403 = vmatprep.subr.bf16.mxu0 0
      %2404 = vmatpush1.bf16.msra.mxu0 0
      %2405 = vmatprep.subr.bf16.mxu0 0
      %2406 = vmatpush1.bf16.msra.mxu0 0
      %2407 = vmatprep.subr.bf16.mxu0 0
      %2408 = vmatpush1.bf16.msra.mxu0 0
      %2409 = vmatprep.subr.bf16.mxu0 0
      %2410 = vmatpush1.bf16.msra.mxu0 0
      %2411 = vmatprep.subr.bf16.mxu0 0
      %2412 = vmatpush1.bf16.msra.mxu0 0
      %2413 = vmatprep.subr.bf16.mxu0 0
      %2414 = vmatpush1.bf16.msra.mxu0 0
      %2415 = vmatprep.subr.bf16.mxu0 0
      %2416 = vmatpush1.bf16.msra.mxu0 0
      %2417 = vmatprep.subr.bf16.mxu0 0
      %2418 = vmatpush1.bf16.msra.mxu0 0
      %2419 = vmatprep.subr.bf16.mxu0 0
      %2420 = vmatpush1.bf16.msra.mxu0 0
      %2421 = vmatprep.subr.bf16.mxu0 0
      %2422 = vmatpush1.bf16.msra.mxu0 0
      %2423 = vmatprep.mubr.bf16.mxu0 0
      %2424 = vmatmul.mubr.bf16.gmra.mrb[0].mxu0 %v2389
      %v2425 = vpop.f32.mrb[0].mxu0
      %v2426 = vadd.f32 %v2375, %v2425
      %v2427 = vpop.f32.mrb[0].mxu0
      %v2428 = vpop.f32.mrb[0].mxu0
      %v2429 = vpop.f32.mrb[0].mxu0
      %2430 = vdwg.mxu0
      %2431 = vst [vmem:[%s626] sm:$0x1] %v2426
      %p2432 = scmp.lt.s32.totalorder %s30, 1
      %s2433 = scalar_select %p2432, %s30, 1
      %s2434 = scalar_lea.vmem %s19, %s2433
      // Predicated region
      $region97: #{deberta_for_regression.1} parent=95 // pred_check
        %p2435 = pneg %p462
      $region98: #{deberta_for_regression.1} parent=95 // pred_check_branch
        %2437 = sbr.rel (%p2435) target = $region100
      $region99: #{deberta_for_regression.1} parent=95 // pred_region
        _
      $region100: #{deberta_for_regression.1} parent=95 // pred_fallthru
        _
    $region96: #{deberta_for_regression.1} parent=5 // pred_fallthru
      _
    %p2438 = scmp.le.s32.totalorder 2, %s25
    // Predicated region
    $region101: #{deberta_for_regression.1} parent=5 // pred_check
      %p2439 = pneg %p2438
    $region102: #{deberta_for_regression.1} parent=5 // pred_check_branch
      %2441 = sbr.rel (%p2439) target = $region104
    $region103: #{deberta_for_regression.1} parent=5 // pred_region
      %s2442 = ssub.s32 %s25, 2
      // Predicated region
      $region105: #{deberta_for_regression.1} parent=103 // pred_check
        %p2443 = pneg %p468
      $region106: #{deberta_for_regression.1} parent=103 // pred_check_branch
        %2445 = sbr.rel (%p2443) target = $region108
      $region107: #{deberta_for_regression.1} parent=103 // pred_region
        %p2446 = scmp.lt.s32.totalorder %s31, 1
        %s2447 = scalar_select %p2446, %s31, 1
        %s2448 = scalar_lea.vmem %s19, %s2447
      $region108: #{deberta_for_regression.1} parent=103 // pred_fallthru
        _
    $region104: #{deberta_for_regression.1} parent=5 // pred_fallthru
      _
  $region6: #{deberta_for_regression.1} parent=0 // loop_footer
    %s29 = sadd.s32 1, %s25
  $region7: #{deberta_for_regression.1} parent=0 // loop_footer_branch
    %24 = sbr.rel target = $region3
  $region8: #{deberta_for_regression.1} parent=0 // loop_exit
    _

</llo_original>
